<compile_context>
chip_gen: v6e
topology: v6e:2x2x1
jax: 0.10.0
libtpu: 0.0.40
codegen_flags: <defaults>
</compile_context>

<pallas_src>
import numpy as np
import jax
import jax.numpy as jnp
from jax import lax
from jax.experimental import pallas as pl
from jax.experimental.pallas import tpu as pltpu

# ----------------------------- configuration -------------------------------
N_NODES = 8
N_EDGES = 16
N_NODE_FEATS = 4
N_EDGE_FEATS = 4
N_HEADS = 2
HID = 32                        # n_hidden_feats
HD = N_HEADS * HID              # heads stacked on lanes (64)
N_TASKS = 2
NUM_LAYERS = 2
LANES = 128                     # every in-kernel array is 128 lanes wide
N_BRANCH = 2 * N_HEADS          # node_gat + edge_gat attention columns

# TODO(synk): attn_dropout / feat_dropout are 0.0 in this config and omitted.


# ----------------------- parameter init (module layout) ---------------------
def _normal(key, shape, scale=0.1):
    return scale * jax.random.normal(key, shape, dtype=jnp.float32)


def init_layer_params(key, in_node, in_edge, hid, heads):
    ks = jax.random.split(key, 18)
    return {
        "w_n2n": _normal(ks[0], (in_node, heads * hid)),
        "b_n2n": _normal(ks[1], (1, heads * hid)),
        "attn_n2n": _normal(ks[2], (heads, hid)),
        "w_e2n": _normal(ks[3], (in_edge, heads * hid)),
        "b_e2n": _normal(ks[4], (1, heads * hid)),
        "attn_e2n": _normal(ks[5], (heads, hid)),
        "w_updn": _normal(ks[6], (2 * hid, hid)),
        "b_updn": _normal(ks[7], (1, hid)),
        "w_ih": _normal(ks[8], (hid, 3 * hid)),      # GRU, gate order r|z|n
        "w_hh": _normal(ks[9], (hid, 3 * hid)),
        "b_ih": _normal(ks[10], (1, 3 * hid)),
        "b_hh": _normal(ks[11], (1, 3 * hid)),
        "w_n2e": _normal(ks[12], (in_node, hid)),
        "b_n2e": _normal(ks[13], (1, hid)),
        "w_e2e": _normal(ks[14], (in_edge, hid)),
        "b_e2e": _normal(ks[15], (1, hid)),
        "w_upde": _normal(ks[16], (2 * hid, hid)),
        "b_upde": _normal(ks[17], (1, hid)),
    }


def init_readout_params(key, hid, n_tasks):
    ks = jax.random.split(key, 6)
    return {
        "w_aw": _normal(ks[0], (hid, 1)),
        "b_aw": _normal(ks[1], (1, 1)),
        "w1": _normal(ks[2], (2 * hid, 64)),
        "b1": _normal(ks[3], (1, 64)),
        "w2": _normal(ks[4], (64, n_tasks)),
        "b2": _normal(ks[5], (1, n_tasks)),
    }


# -------------------- ONE-TIME packing into a single slab -------------------
def pack_params(layer_params, ro_params):
    """Pack all weights/biases into one lane-dense (R, 128) f32 slab (ONCE)."""
    D, H, L = HID, N_HEADS, LANES
    entries = []

    def add(name, arr):
        entries.append((name, np.asarray(arr, np.float32)))

    def zeros(rows):
        return np.zeros((rows, L), np.float32)

    # shared, graph/layer-independent constants
    tl = zeros(L)                           # tiles logit column c -> lane n*2H+c
    for n in range(N_NODES):
        for c in range(N_BRANCH):
            tl[c, n * N_BRANCH + c] = 1.0
    add("tile", tl)
    add("tileT", tl.T.copy())
    exn, exe = zeros(L), zeros(L)           # attention -> per-head 32-lane blocks
    for h in range(H):
        exn[h, h * D:(h + 1) * D] = 1.0
        exe[H + h, h * D:(h + 1) * D] = 1.0
    add("expN", exn)
    add("expE", exe)

    for l, p in enumerate(layer_params):
        pre = f"l{l}_"
        g = {k: np.asarray(v, np.float32) for k, v in p.items()}

        wn = zeros(L)                       # node -> [feat_src (64) | n2e (32)]
        wn[:g["w_n2n"].shape[0], 0:HD] = g["w_n2n"]
        wn[:g["w_n2e"].shape[0], HD:HD + D] = g["w_n2e"]
        add(pre + "Wn", wn)
        we = zeros(L)                       # edge -> [feat_e (64) | e2e (32)]
        we[:g["w_e2n"].shape[0], 0:HD] = g["w_e2n"]
        we[:g["w_e2e"].shape[0], HD:HD + D] = g["w_e2e"]
        add(pre + "We", we)

        a_nd, a_ef = zeros(L), zeros(L)     # attention dot weights per branch
        for h in range(H):
            a_nd[h * D:(h + 1) * D, h] = g["attn_n2n"][h]
            a_ef[h * D:(h + 1) * D, H + h] = g["attn_e2n"][h]
        add(pre + "And", a_nd)
        add(pre + "Aef", a_ef)

        wa, wb = zeros(L), zeros(L)         # update_node split per head block
        for h in range(H):
            wa[h * D:(h + 1) * D, h * D:(h + 1) * D] = g["w_updn"][:D]
            wb[h * D:(h + 1) * D, h * D:(h + 1) * D] = g["w_updn"][D:]
        add(pre + "WA", wa)
        add(pre + "WB", wb)

        avg = zeros(L)                      # mean over heads of feat_src
        for h in range(H):
            avg[h * D:(h + 1) * D, 0:D] = np.eye(D, dtype=np.float32) / H
        add(pre + "avg", avg)

        for gate, sl in (("r", slice(0, D)), ("z", slice(D, 2 * D)),
                         ("n", slice(2 * D, 3 * D))):
            wi, wh = zeros(L), zeros(L)
            wi[0:HD, 0:D] = np.tile(g["w_ih"][:, sl] / H, (H, 1))  # head mean folded
            wh[0:D, 0:D] = g["w_hh"][:, sl]
            add(pre + "Wi" + gate, wi)
            add(pre + "Wh" + gate, wh)

        wvn, wve = zeros(L), zeros(L)       # weave update_edge split weights
        wvn[HD:HD + D, 0:D] = g["w_upde"][:D]
        wve[HD:HD + D, 0:D] = g["w_upde"][D:]
        add(pre + "WvN", wvn)
        add(pre + "WvE", wve)

        bias = zeros(8)
        bias[0, 0:HD] = g["b_n2n"][0]
        bias[0, HD:HD + D] = g["b_n2e"][0]
        bias[1, 0:HD] = g["b_e2n"][0]
        bias[1, HD:HD + D] = g["b_e2e"][0]
        bias[2, 0:HD] = np.tile(g["b_updn"][0], H)
        bias[3, 0:D] = g["b_ih"][0, 0:D] + g["b_hh"][0, 0:D]
        bias[4, 0:D] = g["b_ih"][0, D:2 * D] + g["b_hh"][0, D:2 * D]
        bias[5, 0:D] = g["b_ih"][0, 2 * D:3 * D]
        bias[6, 0:D] = g["b_hh"][0, 2 * D:3 * D]
        bias[7, 0:D] = g["b_upde"][0]
        add(pre + "bias", bias)

    # readout / predict
    r = {k: np.asarray(v, np.float32) for k, v in ro_params.items()}
    waw = zeros(L)
    waw[0:HID, :] = np.tile(r["w_aw"], (1, L))   # node score broadcast to lanes
    w1a, w1b, w2 = zeros(L), zeros(L), zeros(L)
    w1a[0:HID, 0:64] = r["w1"][0:HID]            # weighted-sum half
    w1b[0:HID, 0:64] = r["w1"][HID:2 * HID]      # max half
    w2[0:64, 0:N_TASKS] = r["w2"]
    rb = zeros(8)
    rb[0, :] = r["b_aw"][0, 0]
    rb[1, 0:64] = r["b1"][0]
    rb[2, 0:N_TASKS] = r["b2"][0]
    add("ro_waw", waw)
    add("ro_W1a", w1a)
    add("ro_W1b", w1b)
    add("ro_W2", w2)
    add("ro_bias", rb)

    offsets, rows = {}, 0
    for name, arr in entries:
        offsets[name] = rows
        rows += arr.shape[0]
    slab = np.concatenate([a for _, a in entries], axis=0)
    return jnp.asarray(slab), offsets


# --------------------------- graph densification ----------------------------
def prepare_graph(src, dst):
    """Densify one graph into gather/scatter matrices (done once per graph)."""
    e = np.arange(N_EDGES)
    sg = np.zeros((N_EDGES, N_NODES), np.float32)
    dgm = np.zeros((N_EDGES, N_NODES), np.float32)
    sg[e, src] = 1.0
    dgm[e, dst] = 1.0
    sd = np.concatenate([sg, dgm], axis=0)            # (2E, N) gather src | dst
    ds = np.ascontiguousarray(dgm.T)                  # (N, E)  scatter-sum by dst
    dgx = np.zeros((N_EDGES, LANES), np.float32)      # dst one-hot expanded to
    dgx[:, :N_NODES * N_BRANCH] = np.repeat(dgm, N_BRANCH, axis=1)  # lane n*2H+c
    return sd, ds, dgx


def pad_lanes(x, lanes=LANES):
    out = np.zeros(x.shape[:-1] + (lanes,), np.float32)
    out[..., :x.shape[-1]] = x
    return out


# ------------------------------ fused kernel --------------------------------
def make_forward(offsets, n_const_rows):
    N, E, L = N_NODES, N_EDGES, LANES
    f32 = jnp.float32

    def cw(c_ref, name, rows=L):
        o = offsets[name]
        return c_ref[o:o + rows, :]

    def mm(a, b):
        return jnp.dot(a, b, preferred_element_type=f32)

    def kernel(c_ref, node_ref, edge_ref, sd_ref, ds_ref, dgx_ref, out_ref):
        node = node_ref[...]                  # (N, 128)
        edge = edge_ref[...]                  # (E, 128)
        sd = sd_ref[...]                      # (2E, N)  gather by src | dst
        ds = ds_ref[...]                      # (N, E)   scatter-sum by dst
        dgx = dgx_ref[...]                    # (E, 128) dst one-hot x branch/head
        dg = sd[E:, :]                        # (E, N)   gather by dst

        TL, TLT = cw(c_ref, "tile"), cw(c_ref, "tileT")
        EXN, EXE = cw(c_ref, "expN"), cw(c_ref, "expE")
        keep_raw = lax.broadcasted_iota(jnp.int32, (N, L), 1) < HD   # hoisted

        for l in range(NUM_LAYERS):
            pre = f"l{l}_"
            bias = cw(c_ref, pre + "bias", 8)
            bn, be, b_upd = bias[0:1, :], bias[1:2, :], bias[2:3, :]
            b_r, b_z, b_in, b_hn, b_ve = (bias[3:4, :], bias[4:5, :],
                                          bias[5:6, :], bias[6:7, :],
                                          bias[7:8, :])

            # fused projections: lanes [0:64]=per-head feats, [64:96]=weave
            node_proj = mm(node, cw(c_ref, pre + "Wn")) + bn          # (N,128)
            edge_proj = mm(edge, cw(c_ref, pre + "We")) + be          # (E,128)

            # gather payload keeps feat_src raw, relu's the weave lanes
            payload = jnp.where(keep_raw, node_proj,
                                jnp.maximum(node_proj, 0.0))
            gathered = mm(sd, payload)                                # (2E,128)
            g_src = gathered[0:E, :]
            g_sum = g_src + gathered[E:, :]                           # src + dst

            # attention logits; node branch lanes 0:H, edge branch lanes H:2H
            logits = (mm(g_sum, cw(c_ref, pre + "And"))
                      + mm(g_src + edge_proj, cw(c_ref, pre + "Aef")))
            logits = jnp.where(logits >= 0.0, logits, 0.2 * logits)   # LeakyReLU

            # edge_softmax with exact per-destination max (robust; denom >= 1)
            lg_x = mm(logits, TL)                                     # (E,128)
            dmax = jnp.max(jnp.where(dgx > 0.5, lg_x, -1e30),
                           axis=0, keepdims=True)                     # (1,128)
            emax = mm(dgx * dmax, TLT)                                # (E,128)
            es = jnp.exp(logits - emax)
            denom = mm(ds, es)                                        # (N,128)
            rden = pl.reciprocal(jnp.maximum(denom, 1e-12), approx=True)
            attn = es * mm(dg, rden)                                  # (E,128)

            # broadcast attention to 32-lane head blocks via 0/1 matmuls (MXU)
            a_nx = mm(attn, EXN)
            a_ex = mm(attn, EXE)
            scat_n = mm(ds, a_nx * g_src)                             # (N,128)
            scat_e = mm(ds, a_ex * edge_proj)                         # (N,128)
            act_n = jnp.maximum(scat_n + node_proj, 0.0)              # residual+relu
            act_e = jnp.maximum(scat_e + node_proj, 0.0)
            upd = jnp.maximum(mm(act_n, cw(c_ref, pre + "WA"))
                              + mm(act_e, cw(c_ref, pre + "WB"))
                              + b_upd, 0.0)                           # (N,128)

            # mpnn GRU step; head means folded into avg / Wi* at pack time
            h0 = mm(node_proj, cw(c_ref, pre + "avg"))                # (N,128)
            r = jax.nn.sigmoid(mm(upd, cw(c_ref, pre + "Wir"))
                               + mm(h0, cw(c_ref, pre + "Whr")) + b_r)
            z = jax.nn.sigmoid(mm(upd, cw(c_ref, pre + "Wiz"))
                               + mm(h0, cw(c_ref, pre + "Whz")) + b_z)
            ng = jnp.tanh(mm(upd, cw(c_ref, pre + "Win")) + b_in
                          + r * (mm(h0, cw(c_ref, pre + "Whn")) + b_hn))
            new_node = (1.0 - z) * ng + z * h0                        # (N,128)

            # weave edge update; node_edge lives in lanes 64:96 of g_sum
            new_edge = jnp.maximum(mm(g_sum, cw(c_ref, pre + "WvN"))
                                   + mm(jnp.maximum(edge_proj, 0.0),
                                        cw(c_ref, pre + "WvE"))
                                   + b_ve, 0.0)                       # (E,128)
            node, edge = new_node, new_edge

        # WeightedSumAndMax readout + 2-layer predictor head
        rb = cw(c_ref, "ro_bias", 8)
        wvec = jax.nn.sigmoid(mm(node, cw(c_ref, "ro_waw")) + rb[0:1, :])
        h_sum = jnp.sum(wvec * node, axis=0, keepdims=True)           # (1,128)
        h_max = jnp.max(node, axis=0, keepdims=True)                  # (1,128)
        h1 = (mm(h_sum, cw(c_ref, "ro_W1a")) + mm(h_max, cw(c_ref, "ro_W1b"))
              + rb[1:2, :])
        out_ref[...] = mm(h1, cw(c_ref, "ro_W2")) + rb[2:3, :]        # (1,128)

    def forward(const_slab, node_b, edge_b, sd_b, ds_b, dgx_b):
        B = node_b.shape[0]
        out = pl.pallas_call(
            kernel,
            out_shape=jax.ShapeDtypeStruct((B, 1, L), jnp.float32),
            grid=(B,),
            in_specs=[
                pl.BlockSpec((n_const_rows, L), lambda b: (0, 0)),   # resident
                pl.BlockSpec((None, N, L), lambda b: (b, 0, 0)),
                pl.BlockSpec((None, E, L), lambda b: (b, 0, 0)),
                pl.BlockSpec((None, 2 * E, N), lambda b: (b, 0, 0)),
                pl.BlockSpec((None, N, E), lambda b: (b, 0, 0)),
                pl.BlockSpec((None, E, L), lambda b: (b, 0, 0)),
            ],
            out_specs=pl.BlockSpec((None, 1, L), lambda b: (b, 0, 0)),
            compiler_params=pltpu.CompilerParams(
                dimension_semantics=("parallel",)),
        )(const_slab, node_b, edge_b, sd_b, ds_b, dgx_b)
        return out[:, 0, :N_TASKS]

    return forward


# --------------------------------- driver ------------------------------------
if __name__ == "__main__":
    key = jax.random.PRNGKey(0)
    k_feat, k_l0, k_l1, k_ro = jax.random.split(key, 4)

    # parameters, packed ONCE outside the jitted forward
    layer_params = [
        init_layer_params(k_l0, N_NODE_FEATS, N_EDGE_FEATS, HID, N_HEADS),
        init_layer_params(k_l1, HID, HID, HID, N_HEADS),
    ]
    ro_params = init_readout_params(k_ro, HID, N_TASKS)
    const_slab, offsets = pack_params(layer_params, ro_params)

    # small batch of B ring graphs (same topology, different features)
    B = 4
    src = np.array([0, 1, 2, 3, 4, 5, 6, 7, 1, 2, 3, 4, 5, 6, 7, 0], np.int32)
    dst = np.array([1, 2, 3, 4, 5, 6, 7, 0, 0, 1, 2, 3, 4, 5, 6, 7], np.int32)
    assert src.shape[0] == N_EDGES and dst.shape[0] == N_EDGES
    sd, ds, dgx = prepare_graph(src, dst)
    sd_b = jnp.asarray(np.broadcast_to(sd, (B,) + sd.shape).copy())
    ds_b = jnp.asarray(np.broadcast_to(ds, (B,) + ds.shape).copy())
    dgx_b = jnp.asarray(np.broadcast_to(dgx, (B,) + dgx.shape).copy())

    kn, ke = jax.random.split(k_feat)
    node_raw = np.asarray(jax.random.normal(kn, (B, N_NODES, N_NODE_FEATS),
                                            dtype=jnp.float32))
    edge_raw = np.asarray(jax.random.normal(ke, (B, N_EDGES, N_EDGE_FEATS),
                                            dtype=jnp.float32))
    node_b = jnp.asarray(pad_lanes(node_raw))
    edge_b = jnp.asarray(pad_lanes(edge_raw))

    forward = jax.jit(make_forward(offsets, int(const_slab.shape[0])))
    out = forward(const_slab, node_b, edge_b, sd_b, ds_b, dgx_b)
    out = jax.block_until_ready(out)
    assert out.shape == (B, N_TASKS)
    assert bool(jnp.all(jnp.isfinite(out)))
    print("KERNEL_OK")
</pallas_src>

<mosaic_0001>
module attributes {stable_mosaic.version = 11 : i64} {
  func.func @kernel(%arg0: i32, %arg1: memref<4888x128xf32, #tpu.memory_space<vmem>>, %arg2: memref<1x8x128xf32, #tpu.memory_space<vmem>>, %arg3: memref<1x16x128xf32, #tpu.memory_space<vmem>>, %arg4: memref<1x32x8xf32, #tpu.memory_space<vmem>>, %arg5: memref<1x8x16xf32, #tpu.memory_space<vmem>>, %arg6: memref<1x16x128xf32, #tpu.memory_space<vmem>>, %arg7: memref<1x1x128xf32, #tpu.memory_space<vmem>>) attributes {dimension_semantics = [#tpu.dimension_semantics<parallel>], iteration_bounds = array<i64: 4>, scalar_prefetch = 0 : i64, scratch_operands = 0 : i64, tpu.core_type = #tpu.core_type<tc>, window_params = [{pipeline_mode = #tpu.pipeline_mode<synchronous>, transform_indices = @transform_0, window_bounds = array<i64: 4888, 128>}, {transform_indices = @transform_1, window_bounds = array<i64: 1, 8, 128>}, {transform_indices = @transform_2, window_bounds = array<i64: 1, 16, 128>}, {transform_indices = @transform_3, window_bounds = array<i64: 1, 32, 8>}, {transform_indices = @transform_4, window_bounds = array<i64: 1, 8, 16>}, {transform_indices = @transform_5, window_bounds = array<i64: 1, 16, 128>}, {transform_indices = @transform_6, window_bounds = array<i64: 1, 1, 128>}]} {
    %c0 = arith.constant 0 : index
    %c0_0 = arith.constant 0 : index
    %c0_1 = arith.constant 0 : index
    %0 = vector.load %arg2[%c0, %c0_0, %c0_1] : memref<1x8x128xf32, #tpu.memory_space<vmem>>, vector<1x8x128xf32>
    %1 = vector.shape_cast %0 : vector<1x8x128xf32> to vector<8x128xf32>
    %c0_2 = arith.constant 0 : index
    %c0_3 = arith.constant 0 : index
    %c0_4 = arith.constant 0 : index
    %2 = vector.load %arg3[%c0_2, %c0_3, %c0_4] : memref<1x16x128xf32, #tpu.memory_space<vmem>>, vector<1x16x128xf32>
    %3 = vector.shape_cast %2 : vector<1x16x128xf32> to vector<16x128xf32>
    %c0_5 = arith.constant 0 : index
    %c0_6 = arith.constant 0 : index
    %c0_7 = arith.constant 0 : index
    %4 = vector.load %arg4[%c0_5, %c0_6, %c0_7] : memref<1x32x8xf32, #tpu.memory_space<vmem>>, vector<1x32x8xf32>
    %5 = vector.shape_cast %4 : vector<1x32x8xf32> to vector<32x8xf32>
    %c0_8 = arith.constant 0 : index
    %c0_9 = arith.constant 0 : index
    %c0_10 = arith.constant 0 : index
    %6 = vector.load %arg5[%c0_8, %c0_9, %c0_10] : memref<1x8x16xf32, #tpu.memory_space<vmem>>, vector<1x8x16xf32>
    %7 = vector.shape_cast %6 : vector<1x8x16xf32> to vector<8x16xf32>
    %c0_11 = arith.constant 0 : index
    %c0_12 = arith.constant 0 : index
    %c0_13 = arith.constant 0 : index
    %8 = vector.load %arg6[%c0_11, %c0_12, %c0_13] : memref<1x16x128xf32, #tpu.memory_space<vmem>>, vector<1x16x128xf32>
    %9 = vector.shape_cast %8 : vector<1x16x128xf32> to vector<16x128xf32>
    %10 = vector.extract_strided_slice %5 {offsets = [16, 0], sizes = [16, 8], strides = [1, 1]} : vector<32x8xf32> to vector<16x8xf32>
    %c0_14 = arith.constant 0 : index
    %c0_15 = arith.constant 0 : index
    %11 = vector.load %arg1[%c0_14, %c0_15] : memref<4888x128xf32, #tpu.memory_space<vmem>>, vector<128x128xf32>
    %c128 = arith.constant 128 : index
    %c0_16 = arith.constant 0 : index
    %12 = vector.load %arg1[%c128, %c0_16] : memref<4888x128xf32, #tpu.memory_space<vmem>>, vector<128x128xf32>
    %c256 = arith.constant 256 : index
    %c0_17 = arith.constant 0 : index
    %13 = vector.load %arg1[%c256, %c0_17] : memref<4888x128xf32, #tpu.memory_space<vmem>>, vector<128x128xf32>
    %c384 = arith.constant 384 : index
    %c0_18 = arith.constant 0 : index
    %14 = vector.load %arg1[%c384, %c0_18] : memref<4888x128xf32, #tpu.memory_space<vmem>>, vector<128x128xf32>
    %15 = tpu.iota {dimensions = array<i32: 1>} : vector<8x128xi32>
    %c64_i32 = arith.constant 64 : i32
    %16 = vector.broadcast %c64_i32 : i32 to vector<8x128xi32>
    %17 = arith.cmpi slt, %15, %16 : vector<8x128xi32>
    %c2432 = arith.constant 2432 : index
    %c0_19 = arith.constant 0 : index
    %18 = vector.load %arg1[%c2432, %c0_19] : memref<4888x128xf32, #tpu.memory_space<vmem>>, vector<8x128xf32>
    %19 = vector.extract_strided_slice %18 {offsets = [0, 0], sizes = [1, 128], strides = [1, 1]} : vector<8x128xf32> to vector<1x128xf32>
    %20 = vector.extract_strided_slice %18 {offsets = [1, 0], sizes = [1, 128], strides = [1, 1]} : vector<8x128xf32> to vector<1x128xf32>
    %21 = vector.extract_strided_slice %18 {offsets = [2, 0], sizes = [1, 128], strides = [1, 1]} : vector<8x128xf32> to vector<1x128xf32>
    %22 = vector.extract_strided_slice %18 {offsets = [3, 0], sizes = [1, 128], strides = [1, 1]} : vector<8x128xf32> to vector<1x128xf32>
    %23 = vector.extract_strided_slice %18 {offsets = [4, 0], sizes = [1, 128], strides = [1, 1]} : vector<8x128xf32> to vector<1x128xf32>
    %24 = vector.extract_strided_slice %18 {offsets = [5, 0], sizes = [1, 128], strides = [1, 1]} : vector<8x128xf32> to vector<1x128xf32>
    %25 = vector.extract_strided_slice %18 {offsets = [6, 0], sizes = [1, 128], strides = [1, 1]} : vector<8x128xf32> to vector<1x128xf32>
    %26 = vector.extract_strided_slice %18 {offsets = [7, 0], sizes = [1, 128], strides = [1, 1]} : vector<8x128xf32> to vector<1x128xf32>
    %c512 = arith.constant 512 : index
    %c0_20 = arith.constant 0 : index
    %27 = vector.load %arg1[%c512, %c0_20] : memref<4888x128xf32, #tpu.memory_space<vmem>>, vector<128x128xf32>
    %cst = arith.constant dense<0.000000e+00> : vector<8x128xf32>
    %28 = tpu.matmul %1, %27, %cst {dimension_numbers = #tpu.dot_dimension_numbers<[1], [0], [0], [1], [0, 0, 1, 1], [], []>} : vector<8x128xf32>, vector<128x128xf32>, vector<8x128xf32> -> vector<8x128xf32>
    %29 = vector.broadcast %19 : vector<1x128xf32> to vector<8x128xf32>
    %30 = arith.addf %28, %29 : vector<8x128xf32>
    %c640 = arith.constant 640 : index
    %c0_21 = arith.constant 0 : index
    %31 = vector.load %arg1[%c640, %c0_21] : memref<4888x128xf32, #tpu.memory_space<vmem>>, vector<128x128xf32>
    %cst_22 = arith.constant dense<0.000000e+00> : vector<16x128xf32>
    %32 = tpu.matmul %3, %31, %cst_22 {dimension_numbers = #tpu.dot_dimension_numbers<[1], [0], [0], [1], [0, 0, 1, 1], [], []>} : vector<16x128xf32>, vector<128x128xf32>, vector<16x128xf32> -> vector<16x128xf32>
    %33 = vector.broadcast %20 : vector<1x128xf32> to vector<16x128xf32>
    %34 = arith.addf %32, %33 : vector<16x128xf32>
    %cst_23 = arith.constant 0.000000e+00 : f32
    %35 = vector.broadcast %cst_23 : f32 to vector<8x128xf32>
    %36 = arith.maximumf %30, %35 : vector<8x128xf32>
    %37 = arith.select %17, %30, %36 : vector<8x128xi1>, vector<8x128xf32>
    %cst_24 = arith.constant dense<0.000000e+00> : vector<32x128xf32>
    %38 = tpu.matmul %5, %37, %cst_24 {dimension_numbers = #tpu.dot_dimension_numbers<[1], [0], [0], [1], [0, 0, 1, 1], [], []>} : vector<32x8xf32>, vector<8x128xf32>, vector<32x128xf32> -> vector<32x128xf32>
    %39 = vector.extract_strided_slice %38 {offsets = [0, 0], sizes = [16, 128], strides = [1, 1]} : vector<32x128xf32> to vector<16x128xf32>
    %40 = vector.extract_strided_slice %38 {offsets = [16, 0], sizes = [16, 128], strides = [1, 1]} : vector<32x128xf32> to vector<16x128xf32>
    %41 = arith.addf %39, %40 : vector<16x128xf32>
    %c768 = arith.constant 768 : index
    %c0_25 = arith.constant 0 : index
    %42 = vector.load %arg1[%c768, %c0_25] : memref<4888x128xf32, #tpu.memory_space<vmem>>, vector<128x128xf32>
    %cst_26 = arith.constant dense<0.000000e+00> : vector<16x128xf32>
    %43 = tpu.matmul %41, %42, %cst_26 {dimension_numbers = #tpu.dot_dimension_numbers<[1], [0], [0], [1], [0, 0, 1, 1], [], []>} : vector<16x128xf32>, vector<128x128xf32>, vector<16x128xf32> -> vector<16x128xf32>
    %44 = arith.addf %39, %34 : vector<16x128xf32>
    %c896 = arith.constant 896 : index
    %c0_27 = arith.constant 0 : index
    %45 = vector.load %arg1[%c896, %c0_27] : memref<4888x128xf32, #tpu.memory_space<vmem>>, vector<128x128xf32>
    %cst_28 = arith.constant dense<0.000000e+00> : vector<16x128xf32>
    %46 = tpu.matmul %44, %45, %cst_28 {dimension_numbers = #tpu.dot_dimension_numbers<[1], [0], [0], [1], [0, 0, 1, 1], [], []>} : vector<16x128xf32>, vector<128x128xf32>, vector<16x128xf32> -> vector<16x128xf32>
    %47 = arith.addf %43, %46 : vector<16x128xf32>
    %cst_29 = arith.constant 0.000000e+00 : f32
    %48 = vector.broadcast %cst_29 : f32 to vector<16x128xf32>
    %49 = arith.cmpf oge, %47, %48 : vector<16x128xf32>
    %cst_30 = arith.constant 2.000000e-01 : f32
    %50 = vector.broadcast %cst_30 : f32 to vector<16x128xf32>
    %51 = arith.mulf %50, %47 : vector<16x128xf32>
    %52 = arith.select %49, %47, %51 : vector<16x128xi1>, vector<16x128xf32>
    %cst_31 = arith.constant dense<0.000000e+00> : vector<16x128xf32>
    %53 = tpu.matmul %52, %11, %cst_31 {dimension_numbers = #tpu.dot_dimension_numbers<[1], [0], [0], [1], [0, 0, 1, 1], [], []>} : vector<16x128xf32>, vector<128x128xf32>, vector<16x128xf32> -> vector<16x128xf32>
    %cst_32 = arith.constant 5.000000e-01 : f32
    %54 = vector.broadcast %cst_32 : f32 to vector<16x128xf32>
    %55 = arith.cmpf ogt, %9, %54 : vector<16x128xf32>
    %cst_33 = arith.constant -1.000000e+30 : f32
    %56 = vector.broadcast %cst_33 : f32 to vector<16x128xf32>
    %57 = arith.select %55, %53, %56 : vector<16x128xi1>, vector<16x128xf32>
    %cst_34 = arith.constant dense<0xFF800000> : vector<128xf32>
    %58 = vector.multi_reduction <maximumf>, %57, %cst_34 [0] : vector<16x128xf32> to vector<128xf32>
    %59 = vector.shape_cast %58 : vector<128xf32> to vector<1x128xf32>
    %60 = vector.broadcast %59 : vector<1x128xf32> to vector<16x128xf32>
    %61 = arith.mulf %9, %60 : vector<16x128xf32>
    %cst_35 = arith.constant dense<0.000000e+00> : vector<16x128xf32>
    %62 = tpu.matmul %61, %12, %cst_35 {dimension_numbers = #tpu.dot_dimension_numbers<[1], [0], [0], [1], [0, 0, 1, 1], [], []>} : vector<16x128xf32>, vector<128x128xf32>, vector<16x128xf32> -> vector<16x128xf32>
    %63 = arith.subf %52, %62 : vector<16x128xf32>
    %64 = math.exp %63 : vector<16x128xf32>
    %cst_36 = arith.constant dense<0.000000e+00> : vector<8x128xf32>
    %65 = tpu.matmul %7, %64, %cst_36 {dimension_numbers = #tpu.dot_dimension_numbers<[1], [0], [0], [1], [0, 0, 1, 1], [], []>} : vector<8x16xf32>, vector<16x128xf32>, vector<8x128xf32> -> vector<8x128xf32>
    %cst_37 = arith.constant 9.99999996E-13 : f32
    %66 = vector.broadcast %cst_37 : f32 to vector<8x128xf32>
    %67 = arith.maximumf %65, %66 : vector<8x128xf32>
    %68 = tpu.reciprocal %67 {approx = true} : vector<8x128xf32> -> vector<8x128xf32>
    %cst_38 = arith.constant dense<0.000000e+00> : vector<16x128xf32>
    %69 = tpu.matmul %10, %68, %cst_38 {dimension_numbers = #tpu.dot_dimension_numbers<[1], [0], [0], [1], [0, 0, 1, 1], [], []>} : vector<16x8xf32>, vector<8x128xf32>, vector<16x128xf32> -> vector<16x128xf32>
    %70 = arith.mulf %64, %69 : vector<16x128xf32>
    %cst_39 = arith.constant dense<0.000000e+00> : vector<16x128xf32>
    %71 = tpu.matmul %70, %13, %cst_39 {dimension_numbers = #tpu.dot_dimension_numbers<[1], [0], [0], [1], [0, 0, 1, 1], [], []>} : vector<16x128xf32>, vector<128x128xf32>, vector<16x128xf32> -> vector<16x128xf32>
    %cst_40 = arith.constant dense<0.000000e+00> : vector<16x128xf32>
    %72 = tpu.matmul %70, %14, %cst_40 {dimension_numbers = #tpu.dot_dimension_numbers<[1], [0], [0], [1], [0, 0, 1, 1], [], []>} : vector<16x128xf32>, vector<128x128xf32>, vector<16x128xf32> -> vector<16x128xf32>
    %73 = arith.mulf %71, %39 : vector<16x128xf32>
    %cst_41 = arith.constant dense<0.000000e+00> : vector<8x128xf32>
    %74 = tpu.matmul %7, %73, %cst_41 {dimension_numbers = #tpu.dot_dimension_numbers<[1], [0], [0], [1], [0, 0, 1, 1], [], []>} : vector<8x16xf32>, vector<16x128xf32>, vector<8x128xf32> -> vector<8x128xf32>
    %75 = arith.mulf %72, %34 : vector<16x128xf32>
    %cst_42 = arith.constant dense<0.000000e+00> : vector<8x128xf32>
    %76 = tpu.matmul %7, %75, %cst_42 {dimension_numbers = #tpu.dot_dimension_numbers<[1], [0], [0], [1], [0, 0, 1, 1], [], []>} : vector<8x16xf32>, vector<16x128xf32>, vector<8x128xf32> -> vector<8x128xf32>
    %77 = arith.addf %74, %30 : vector<8x128xf32>
    %cst_43 = arith.constant 0.000000e+00 : f32
    %78 = vector.broadcast %cst_43 : f32 to vector<8x128xf32>
    %79 = arith.maximumf %77, %78 : vector<8x128xf32>
    %80 = arith.addf %76, %30 : vector<8x128xf32>
    %cst_44 = arith.constant 0.000000e+00 : f32
    %81 = vector.broadcast %cst_44 : f32 to vector<8x128xf32>
    %82 = arith.maximumf %80, %81 : vector<8x128xf32>
    %c1024 = arith.constant 1024 : index
    %c0_45 = arith.constant 0 : index
    %83 = vector.load %arg1[%c1024, %c0_45] : memref<4888x128xf32, #tpu.memory_space<vmem>>, vector<128x128xf32>
    %cst_46 = arith.constant dense<0.000000e+00> : vector<8x128xf32>
    %84 = tpu.matmul %79, %83, %cst_46 {dimension_numbers = #tpu.dot_dimension_numbers<[1], [0], [0], [1], [0, 0, 1, 1], [], []>} : vector<8x128xf32>, vector<128x128xf32>, vector<8x128xf32> -> vector<8x128xf32>
    %c1152 = arith.constant 1152 : index
    %c0_47 = arith.constant 0 : index
    %85 = vector.load %arg1[%c1152, %c0_47] : memref<4888x128xf32, #tpu.memory_space<vmem>>, vector<128x128xf32>
    %cst_48 = arith.constant dense<0.000000e+00> : vector<8x128xf32>
    %86 = tpu.matmul %82, %85, %cst_48 {dimension_numbers = #tpu.dot_dimension_numbers<[1], [0], [0], [1], [0, 0, 1, 1], [], []>} : vector<8x128xf32>, vector<128x128xf32>, vector<8x128xf32> -> vector<8x128xf32>
    %87 = arith.addf %84, %86 : vector<8x128xf32>
    %88 = vector.broadcast %21 : vector<1x128xf32> to vector<8x128xf32>
    %89 = arith.addf %87, %88 : vector<8x128xf32>
    %cst_49 = arith.constant 0.000000e+00 : f32
    %90 = vector.broadcast %cst_49 : f32 to vector<8x128xf32>
    %91 = arith.maximumf %89, %90 : vector<8x128xf32>
    %c1280 = arith.constant 1280 : index
    %c0_50 = arith.constant 0 : index
    %92 = vector.load %arg1[%c1280, %c0_50] : memref<4888x128xf32, #tpu.memory_space<vmem>>, vector<128x128xf32>
    %cst_51 = arith.constant dense<0.000000e+00> : vector<8x128xf32>
    %93 = tpu.matmul %30, %92, %cst_51 {dimension_numbers = #tpu.dot_dimension_numbers<[1], [0], [0], [1], [0, 0, 1, 1], [], []>} : vector<8x128xf32>, vector<128x128xf32>, vector<8x128xf32> -> vector<8x128xf32>
    %c1408 = arith.constant 1408 : index
    %c0_52 = arith.constant 0 : index
    %94 = vector.load %arg1[%c1408, %c0_52] : memref<4888x128xf32, #tpu.memory_space<vmem>>, vector<128x128xf32>
    %cst_53 = arith.constant dense<0.000000e+00> : vector<8x128xf32>
    %95 = tpu.matmul %91, %94, %cst_53 {dimension_numbers = #tpu.dot_dimension_numbers<[1], [0], [0], [1], [0, 0, 1, 1], [], []>} : vector<8x128xf32>, vector<128x128xf32>, vector<8x128xf32> -> vector<8x128xf32>
    %c1536 = arith.constant 1536 : index
    %c0_54 = arith.constant 0 : index
    %96 = vector.load %arg1[%c1536, %c0_54] : memref<4888x128xf32, #tpu.memory_space<vmem>>, vector<128x128xf32>
    %cst_55 = arith.constant dense<0.000000e+00> : vector<8x128xf32>
    %97 = tpu.matmul %93, %96, %cst_55 {dimension_numbers = #tpu.dot_dimension_numbers<[1], [0], [0], [1], [0, 0, 1, 1], [], []>} : vector<8x128xf32>, vector<128x128xf32>, vector<8x128xf32> -> vector<8x128xf32>
    %98 = arith.addf %95, %97 : vector<8x128xf32>
    %99 = vector.broadcast %22 : vector<1x128xf32> to vector<8x128xf32>
    %100 = arith.addf %98, %99 : vector<8x128xf32>
    %101 = arith.negf %100 : vector<8x128xf32>
    %102 = math.exp %101 : vector<8x128xf32>
    %cst_56 = arith.constant 1.000000e+00 : f32
    %103 = vector.broadcast %cst_56 : f32 to vector<8x128xf32>
    %104 = arith.addf %103, %102 : vector<8x128xf32>
    %105 = arith.divf %103, %104 : vector<8x128xf32>
    %c1664 = arith.constant 1664 : index
    %c0_57 = arith.constant 0 : index
    %106 = vector.load %arg1[%c1664, %c0_57] : memref<4888x128xf32, #tpu.memory_space<vmem>>, vector<128x128xf32>
    %cst_58 = arith.constant dense<0.000000e+00> : vector<8x128xf32>
    %107 = tpu.matmul %91, %106, %cst_58 {dimension_numbers = #tpu.dot_dimension_numbers<[1], [0], [0], [1], [0, 0, 1, 1], [], []>} : vector<8x128xf32>, vector<128x128xf32>, vector<8x128xf32> -> vector<8x128xf32>
    %c1792 = arith.constant 1792 : index
    %c0_59 = arith.constant 0 : index
    %108 = vector.load %arg1[%c1792, %c0_59] : memref<4888x128xf32, #tpu.memory_space<vmem>>, vector<128x128xf32>
    %cst_60 = arith.constant dense<0.000000e+00> : vector<8x128xf32>
    %109 = tpu.matmul %93, %108, %cst_60 {dimension_numbers = #tpu.dot_dimension_numbers<[1], [0], [0], [1], [0, 0, 1, 1], [], []>} : vector<8x128xf32>, vector<128x128xf32>, vector<8x128xf32> -> vector<8x128xf32>
    %110 = arith.addf %107, %109 : vector<8x128xf32>
    %111 = vector.broadcast %23 : vector<1x128xf32> to vector<8x128xf32>
    %112 = arith.addf %110, %111 : vector<8x128xf32>
    %113 = arith.negf %112 : vector<8x128xf32>
    %114 = math.exp %113 : vector<8x128xf32>
    %cst_61 = arith.constant 1.000000e+00 : f32
    %115 = vector.broadcast %cst_61 : f32 to vector<8x128xf32>
    %116 = arith.addf %115, %114 : vector<8x128xf32>
    %117 = arith.divf %115, %116 : vector<8x128xf32>
    %c1920 = arith.constant 1920 : index
    %c0_62 = arith.constant 0 : index
    %118 = vector.load %arg1[%c1920, %c0_62] : memref<4888x128xf32, #tpu.memory_space<vmem>>, vector<128x128xf32>
    %cst_63 = arith.constant dense<0.000000e+00> : vector<8x128xf32>
    %119 = tpu.matmul %91, %118, %cst_63 {dimension_numbers = #tpu.dot_dimension_numbers<[1], [0], [0], [1], [0, 0, 1, 1], [], []>} : vector<8x128xf32>, vector<128x128xf32>, vector<8x128xf32> -> vector<8x128xf32>
    %120 = vector.broadcast %24 : vector<1x128xf32> to vector<8x128xf32>
    %121 = arith.addf %119, %120 : vector<8x128xf32>
    %c2048 = arith.constant 2048 : index
    %c0_64 = arith.constant 0 : index
    %122 = vector.load %arg1[%c2048, %c0_64] : memref<4888x128xf32, #tpu.memory_space<vmem>>, vector<128x128xf32>
    %cst_65 = arith.constant dense<0.000000e+00> : vector<8x128xf32>
    %123 = tpu.matmul %93, %122, %cst_65 {dimension_numbers = #tpu.dot_dimension_numbers<[1], [0], [0], [1], [0, 0, 1, 1], [], []>} : vector<8x128xf32>, vector<128x128xf32>, vector<8x128xf32> -> vector<8x128xf32>
    %124 = vector.broadcast %25 : vector<1x128xf32> to vector<8x128xf32>
    %125 = arith.addf %123, %124 : vector<8x128xf32>
    %126 = arith.mulf %105, %125 : vector<8x128xf32>
    %127 = arith.addf %121, %126 : vector<8x128xf32>
    %128 = math.tanh %127 : vector<8x128xf32>
    %cst_66 = arith.constant 1.000000e+00 : f32
    %129 = vector.broadcast %cst_66 : f32 to vector<8x128xf32>
    %130 = arith.subf %129, %117 : vector<8x128xf32>
    %131 = arith.mulf %130, %128 : vector<8x128xf32>
    %132 = arith.mulf %117, %93 : vector<8x128xf32>
    %133 = arith.addf %131, %132 : vector<8x128xf32>
    %c2176 = arith.constant 2176 : index
    %c0_67 = arith.constant 0 : index
    %134 = vector.load %arg1[%c2176, %c0_67] : memref<4888x128xf32, #tpu.memory_space<vmem>>, vector<128x128xf32>
    %cst_68 = arith.constant dense<0.000000e+00> : vector<16x128xf32>
    %135 = tpu.matmul %41, %134, %cst_68 {dimension_numbers = #tpu.dot_dimension_numbers<[1], [0], [0], [1], [0, 0, 1, 1], [], []>} : vector<16x128xf32>, vector<128x128xf32>, vector<16x128xf32> -> vector<16x128xf32>
    %cst_69 = arith.constant 0.000000e+00 : f32
    %136 = vector.broadcast %cst_69 : f32 to vector<16x128xf32>
    %137 = arith.maximumf %34, %136 : vector<16x128xf32>
    %c2304 = arith.constant 2304 : index
    %c0_70 = arith.constant 0 : index
    %138 = vector.load %arg1[%c2304, %c0_70] : memref<4888x128xf32, #tpu.memory_space<vmem>>, vector<128x128xf32>
    %cst_71 = arith.constant dense<0.000000e+00> : vector<16x128xf32>
    %139 = tpu.matmul %137, %138, %cst_71 {dimension_numbers = #tpu.dot_dimension_numbers<[1], [0], [0], [1], [0, 0, 1, 1], [], []>} : vector<16x128xf32>, vector<128x128xf32>, vector<16x128xf32> -> vector<16x128xf32>
    %140 = arith.addf %135, %139 : vector<16x128xf32>
    %141 = vector.broadcast %26 : vector<1x128xf32> to vector<16x128xf32>
    %142 = arith.addf %140, %141 : vector<16x128xf32>
    %cst_72 = arith.constant 0.000000e+00 : f32
    %143 = vector.broadcast %cst_72 : f32 to vector<16x128xf32>
    %144 = arith.maximumf %142, %143 : vector<16x128xf32>
    %c4360 = arith.constant 4360 : index
    %c0_73 = arith.constant 0 : index
    %145 = vector.load %arg1[%c4360, %c0_73] : memref<4888x128xf32, #tpu.memory_space<vmem>>, vector<8x128xf32>
    %146 = vector.extract_strided_slice %145 {offsets = [0, 0], sizes = [1, 128], strides = [1, 1]} : vector<8x128xf32> to vector<1x128xf32>
    %147 = vector.extract_strided_slice %145 {offsets = [1, 0], sizes = [1, 128], strides = [1, 1]} : vector<8x128xf32> to vector<1x128xf32>
    %148 = vector.extract_strided_slice %145 {offsets = [2, 0], sizes = [1, 128], strides = [1, 1]} : vector<8x128xf32> to vector<1x128xf32>
    %149 = vector.extract_strided_slice %145 {offsets = [3, 0], sizes = [1, 128], strides = [1, 1]} : vector<8x128xf32> to vector<1x128xf32>
    %150 = vector.extract_strided_slice %145 {offsets = [4, 0], sizes = [1, 128], strides = [1, 1]} : vector<8x128xf32> to vector<1x128xf32>
    %151 = vector.extract_strided_slice %145 {offsets = [5, 0], sizes = [1, 128], strides = [1, 1]} : vector<8x128xf32> to vector<1x128xf32>
    %152 = vector.extract_strided_slice %145 {offsets = [6, 0], sizes = [1, 128], strides = [1, 1]} : vector<8x128xf32> to vector<1x128xf32>
    %c2440 = arith.constant 2440 : index
    %c0_74 = arith.constant 0 : index
    %153 = vector.load %arg1[%c2440, %c0_74] : memref<4888x128xf32, #tpu.memory_space<vmem>>, vector<128x128xf32>
    %cst_75 = arith.constant dense<0.000000e+00> : vector<8x128xf32>
    %154 = tpu.matmul %133, %153, %cst_75 {dimension_numbers = #tpu.dot_dimension_numbers<[1], [0], [0], [1], [0, 0, 1, 1], [], []>} : vector<8x128xf32>, vector<128x128xf32>, vector<8x128xf32> -> vector<8x128xf32>
    %155 = vector.broadcast %146 : vector<1x128xf32> to vector<8x128xf32>
    %156 = arith.addf %154, %155 : vector<8x128xf32>
    %c2568 = arith.constant 2568 : index
    %c0_76 = arith.constant 0 : index
    %157 = vector.load %arg1[%c2568, %c0_76] : memref<4888x128xf32, #tpu.memory_space<vmem>>, vector<128x128xf32>
    %cst_77 = arith.constant dense<0.000000e+00> : vector<16x128xf32>
    %158 = tpu.matmul %144, %157, %cst_77 {dimension_numbers = #tpu.dot_dimension_numbers<[1], [0], [0], [1], [0, 0, 1, 1], [], []>} : vector<16x128xf32>, vector<128x128xf32>, vector<16x128xf32> -> vector<16x128xf32>
    %159 = vector.broadcast %147 : vector<1x128xf32> to vector<16x128xf32>
    %160 = arith.addf %158, %159 : vector<16x128xf32>
    %cst_78 = arith.constant 0.000000e+00 : f32
    %161 = vector.broadcast %cst_78 : f32 to vector<8x128xf32>
    %162 = arith.maximumf %156, %161 : vector<8x128xf32>
    %163 = arith.select %17, %156, %162 : vector<8x128xi1>, vector<8x128xf32>
    %cst_79 = arith.constant dense<0.000000e+00> : vector<32x128xf32>
    %164 = tpu.matmul %5, %163, %cst_79 {dimension_numbers = #tpu.dot_dimension_numbers<[1], [0], [0], [1], [0, 0, 1, 1], [], []>} : vector<32x8xf32>, vector<8x128xf32>, vector<32x128xf32> -> vector<32x128xf32>
    %165 = vector.extract_strided_slice %164 {offsets = [0, 0], sizes = [16, 128], strides = [1, 1]} : vector<32x128xf32> to vector<16x128xf32>
    %166 = vector.extract_strided_slice %164 {offsets = [16, 0], sizes = [16, 128], strides = [1, 1]} : vector<32x128xf32> to vector<16x128xf32>
    %167 = arith.addf %165, %166 : vector<16x128xf32>
    %c2696 = arith.constant 2696 : index
    %c0_80 = arith.constant 0 : index
    %168 = vector.load %arg1[%c2696, %c0_80] : memref<4888x128xf32, #tpu.memory_space<vmem>>, vector<128x128xf32>
    %cst_81 = arith.constant dense<0.000000e+00> : vector<16x128xf32>
    %169 = tpu.matmul %167, %168, %cst_81 {dimension_numbers = #tpu.dot_dimension_numbers<[1], [0], [0], [1], [0, 0, 1, 1], [], []>} : vector<16x128xf32>, vector<128x128xf32>, vector<16x128xf32> -> vector<16x128xf32>
    %170 = arith.addf %165, %160 : vector<16x128xf32>
    %c2824 = arith.constant 2824 : index
    %c0_82 = arith.constant 0 : index
    %171 = vector.load %arg1[%c2824, %c0_82] : memref<4888x128xf32, #tpu.memory_space<vmem>>, vector<128x128xf32>
    %cst_83 = arith.constant dense<0.000000e+00> : vector<16x128xf32>
    %172 = tpu.matmul %170, %171, %cst_83 {dimension_numbers = #tpu.dot_dimension_numbers<[1], [0], [0], [1], [0, 0, 1, 1], [], []>} : vector<16x128xf32>, vector<128x128xf32>, vector<16x128xf32> -> vector<16x128xf32>
    %173 = arith.addf %169, %172 : vector<16x128xf32>
    %cst_84 = arith.constant 0.000000e+00 : f32
    %174 = vector.broadcast %cst_84 : f32 to vector<16x128xf32>
    %175 = arith.cmpf oge, %173, %174 : vector<16x128xf32>
    %cst_85 = arith.constant 2.000000e-01 : f32
    %176 = vector.broadcast %cst_85 : f32 to vector<16x128xf32>
    %177 = arith.mulf %176, %173 : vector<16x128xf32>
    %178 = arith.select %175, %173, %177 : vector<16x128xi1>, vector<16x128xf32>
    %cst_86 = arith.constant dense<0.000000e+00> : vector<16x128xf32>
    %179 = tpu.matmul %178, %11, %cst_86 {dimension_numbers = #tpu.dot_dimension_numbers<[1], [0], [0], [1], [0, 0, 1, 1], [], []>} : vector<16x128xf32>, vector<128x128xf32>, vector<16x128xf32> -> vector<16x128xf32>
    %cst_87 = arith.constant 5.000000e-01 : f32
    %180 = vector.broadcast %cst_87 : f32 to vector<16x128xf32>
    %181 = arith.cmpf ogt, %9, %180 : vector<16x128xf32>
    %cst_88 = arith.constant -1.000000e+30 : f32
    %182 = vector.broadcast %cst_88 : f32 to vector<16x128xf32>
    %183 = arith.select %181, %179, %182 : vector<16x128xi1>, vector<16x128xf32>
    %cst_89 = arith.constant dense<0xFF800000> : vector<128xf32>
    %184 = vector.multi_reduction <maximumf>, %183, %cst_89 [0] : vector<16x128xf32> to vector<128xf32>
    %185 = vector.shape_cast %184 : vector<128xf32> to vector<1x128xf32>
    %186 = vector.broadcast %185 : vector<1x128xf32> to vector<16x128xf32>
    %187 = arith.mulf %9, %186 : vector<16x128xf32>
    %cst_90 = arith.constant dense<0.000000e+00> : vector<16x128xf32>
    %188 = tpu.matmul %187, %12, %cst_90 {dimension_numbers = #tpu.dot_dimension_numbers<[1], [0], [0], [1], [0, 0, 1, 1], [], []>} : vector<16x128xf32>, vector<128x128xf32>, vector<16x128xf32> -> vector<16x128xf32>
    %189 = arith.subf %178, %188 : vector<16x128xf32>
    %190 = math.exp %189 : vector<16x128xf32>
    %cst_91 = arith.constant dense<0.000000e+00> : vector<8x128xf32>
    %191 = tpu.matmul %7, %190, %cst_91 {dimension_numbers = #tpu.dot_dimension_numbers<[1], [0], [0], [1], [0, 0, 1, 1], [], []>} : vector<8x16xf32>, vector<16x128xf32>, vector<8x128xf32> -> vector<8x128xf32>
    %cst_92 = arith.constant 9.99999996E-13 : f32
    %192 = vector.broadcast %cst_92 : f32 to vector<8x128xf32>
    %193 = arith.maximumf %191, %192 : vector<8x128xf32>
    %194 = tpu.reciprocal %193 {approx = true} : vector<8x128xf32> -> vector<8x128xf32>
    %cst_93 = arith.constant dense<0.000000e+00> : vector<16x128xf32>
    %195 = tpu.matmul %10, %194, %cst_93 {dimension_numbers = #tpu.dot_dimension_numbers<[1], [0], [0], [1], [0, 0, 1, 1], [], []>} : vector<16x8xf32>, vector<8x128xf32>, vector<16x128xf32> -> vector<16x128xf32>
    %196 = arith.mulf %190, %195 : vector<16x128xf32>
    %cst_94 = arith.constant dense<0.000000e+00> : vector<16x128xf32>
    %197 = tpu.matmul %196, %13, %cst_94 {dimension_numbers = #tpu.dot_dimension_numbers<[1], [0], [0], [1], [0, 0, 1, 1], [], []>} : vector<16x128xf32>, vector<128x128xf32>, vector<16x128xf32> -> vector<16x128xf32>
    %cst_95 = arith.constant dense<0.000000e+00> : vector<16x128xf32>
    %198 = tpu.matmul %196, %14, %cst_95 {dimension_numbers = #tpu.dot_dimension_numbers<[1], [0], [0], [1], [0, 0, 1, 1], [], []>} : vector<16x128xf32>, vector<128x128xf32>, vector<16x128xf32> -> vector<16x128xf32>
    %199 = arith.mulf %197, %165 : vector<16x128xf32>
    %cst_96 = arith.constant dense<0.000000e+00> : vector<8x128xf32>
    %200 = tpu.matmul %7, %199, %cst_96 {dimension_numbers = #tpu.dot_dimension_numbers<[1], [0], [0], [1], [0, 0, 1, 1], [], []>} : vector<8x16xf32>, vector<16x128xf32>, vector<8x128xf32> -> vector<8x128xf32>
    %201 = arith.mulf %198, %160 : vector<16x128xf32>
    %cst_97 = arith.constant dense<0.000000e+00> : vector<8x128xf32>
    %202 = tpu.matmul %7, %201, %cst_97 {dimension_numbers = #tpu.dot_dimension_numbers<[1], [0], [0], [1], [0, 0, 1, 1], [], []>} : vector<8x16xf32>, vector<16x128xf32>, vector<8x128xf32> -> vector<8x128xf32>
    %203 = arith.addf %200, %156 : vector<8x128xf32>
    %cst_98 = arith.constant 0.000000e+00 : f32
    %204 = vector.broadcast %cst_98 : f32 to vector<8x128xf32>
    %205 = arith.maximumf %203, %204 : vector<8x128xf32>
    %206 = arith.addf %202, %156 : vector<8x128xf32>
    %cst_99 = arith.constant 0.000000e+00 : f32
    %207 = vector.broadcast %cst_99 : f32 to vector<8x128xf32>
    %208 = arith.maximumf %206, %207 : vector<8x128xf32>
    %c2952 = arith.constant 2952 : index
    %c0_100 = arith.constant 0 : index
    %209 = vector.load %arg1[%c2952, %c0_100] : memref<4888x128xf32, #tpu.memory_space<vmem>>, vector<128x128xf32>
    %cst_101 = arith.constant dense<0.000000e+00> : vector<8x128xf32>
    %210 = tpu.matmul %205, %209, %cst_101 {dimension_numbers = #tpu.dot_dimension_numbers<[1], [0], [0], [1], [0, 0, 1, 1], [], []>} : vector<8x128xf32>, vector<128x128xf32>, vector<8x128xf32> -> vector<8x128xf32>
    %c3080 = arith.constant 3080 : index
    %c0_102 = arith.constant 0 : index
    %211 = vector.load %arg1[%c3080, %c0_102] : memref<4888x128xf32, #tpu.memory_space<vmem>>, vector<128x128xf32>
    %cst_103 = arith.constant dense<0.000000e+00> : vector<8x128xf32>
    %212 = tpu.matmul %208, %211, %cst_103 {dimension_numbers = #tpu.dot_dimension_numbers<[1], [0], [0], [1], [0, 0, 1, 1], [], []>} : vector<8x128xf32>, vector<128x128xf32>, vector<8x128xf32> -> vector<8x128xf32>
    %213 = arith.addf %210, %212 : vector<8x128xf32>
    %214 = vector.broadcast %148 : vector<1x128xf32> to vector<8x128xf32>
    %215 = arith.addf %213, %214 : vector<8x128xf32>
    %cst_104 = arith.constant 0.000000e+00 : f32
    %216 = vector.broadcast %cst_104 : f32 to vector<8x128xf32>
    %217 = arith.maximumf %215, %216 : vector<8x128xf32>
    %c3208 = arith.constant 3208 : index
    %c0_105 = arith.constant 0 : index
    %218 = vector.load %arg1[%c3208, %c0_105] : memref<4888x128xf32, #tpu.memory_space<vmem>>, vector<128x128xf32>
    %cst_106 = arith.constant dense<0.000000e+00> : vector<8x128xf32>
    %219 = tpu.matmul %156, %218, %cst_106 {dimension_numbers = #tpu.dot_dimension_numbers<[1], [0], [0], [1], [0, 0, 1, 1], [], []>} : vector<8x128xf32>, vector<128x128xf32>, vector<8x128xf32> -> vector<8x128xf32>
    %c3336 = arith.constant 3336 : index
    %c0_107 = arith.constant 0 : index
    %220 = vector.load %arg1[%c3336, %c0_107] : memref<4888x128xf32, #tpu.memory_space<vmem>>, vector<128x128xf32>
    %cst_108 = arith.constant dense<0.000000e+00> : vector<8x128xf32>
    %221 = tpu.matmul %217, %220, %cst_108 {dimension_numbers = #tpu.dot_dimension_numbers<[1], [0], [0], [1], [0, 0, 1, 1], [], []>} : vector<8x128xf32>, vector<128x128xf32>, vector<8x128xf32> -> vector<8x128xf32>
    %c3464 = arith.constant 3464 : index
    %c0_109 = arith.constant 0 : index
    %222 = vector.load %arg1[%c3464, %c0_109] : memref<4888x128xf32, #tpu.memory_space<vmem>>, vector<128x128xf32>
    %cst_110 = arith.constant dense<0.000000e+00> : vector<8x128xf32>
    %223 = tpu.matmul %219, %222, %cst_110 {dimension_numbers = #tpu.dot_dimension_numbers<[1], [0], [0], [1], [0, 0, 1, 1], [], []>} : vector<8x128xf32>, vector<128x128xf32>, vector<8x128xf32> -> vector<8x128xf32>
    %224 = arith.addf %221, %223 : vector<8x128xf32>
    %225 = vector.broadcast %149 : vector<1x128xf32> to vector<8x128xf32>
    %226 = arith.addf %224, %225 : vector<8x128xf32>
    %227 = arith.negf %226 : vector<8x128xf32>
    %228 = math.exp %227 : vector<8x128xf32>
    %cst_111 = arith.constant 1.000000e+00 : f32
    %229 = vector.broadcast %cst_111 : f32 to vector<8x128xf32>
    %230 = arith.addf %229, %228 : vector<8x128xf32>
    %231 = arith.divf %229, %230 : vector<8x128xf32>
    %c3592 = arith.constant 3592 : index
    %c0_112 = arith.constant 0 : index
    %232 = vector.load %arg1[%c3592, %c0_112] : memref<4888x128xf32, #tpu.memory_space<vmem>>, vector<128x128xf32>
    %cst_113 = arith.constant dense<0.000000e+00> : vector<8x128xf32>
    %233 = tpu.matmul %217, %232, %cst_113 {dimension_numbers = #tpu.dot_dimension_numbers<[1], [0], [0], [1], [0, 0, 1, 1], [], []>} : vector<8x128xf32>, vector<128x128xf32>, vector<8x128xf32> -> vector<8x128xf32>
    %c3720 = arith.constant 3720 : index
    %c0_114 = arith.constant 0 : index
    %234 = vector.load %arg1[%c3720, %c0_114] : memref<4888x128xf32, #tpu.memory_space<vmem>>, vector<128x128xf32>
    %cst_115 = arith.constant dense<0.000000e+00> : vector<8x128xf32>
    %235 = tpu.matmul %219, %234, %cst_115 {dimension_numbers = #tpu.dot_dimension_numbers<[1], [0], [0], [1], [0, 0, 1, 1], [], []>} : vector<8x128xf32>, vector<128x128xf32>, vector<8x128xf32> -> vector<8x128xf32>
    %236 = arith.addf %233, %235 : vector<8x128xf32>
    %237 = vector.broadcast %150 : vector<1x128xf32> to vector<8x128xf32>
    %238 = arith.addf %236, %237 : vector<8x128xf32>
    %239 = arith.negf %238 : vector<8x128xf32>
    %240 = math.exp %239 : vector<8x128xf32>
    %cst_116 = arith.constant 1.000000e+00 : f32
    %241 = vector.broadcast %cst_116 : f32 to vector<8x128xf32>
    %242 = arith.addf %241, %240 : vector<8x128xf32>
    %243 = arith.divf %241, %242 : vector<8x128xf32>
    %c3848 = arith.constant 3848 : index
    %c0_117 = arith.constant 0 : index
    %244 = vector.load %arg1[%c3848, %c0_117] : memref<4888x128xf32, #tpu.memory_space<vmem>>, vector<128x128xf32>
    %cst_118 = arith.constant dense<0.000000e+00> : vector<8x128xf32>
    %245 = tpu.matmul %217, %244, %cst_118 {dimension_numbers = #tpu.dot_dimension_numbers<[1], [0], [0], [1], [0, 0, 1, 1], [], []>} : vector<8x128xf32>, vector<128x128xf32>, vector<8x128xf32> -> vector<8x128xf32>
    %246 = vector.broadcast %151 : vector<1x128xf32> to vector<8x128xf32>
    %247 = arith.addf %245, %246 : vector<8x128xf32>
    %c3976 = arith.constant 3976 : index
    %c0_119 = arith.constant 0 : index
    %248 = vector.load %arg1[%c3976, %c0_119] : memref<4888x128xf32, #tpu.memory_space<vmem>>, vector<128x128xf32>
    %cst_120 = arith.constant dense<0.000000e+00> : vector<8x128xf32>
    %249 = tpu.matmul %219, %248, %cst_120 {dimension_numbers = #tpu.dot_dimension_numbers<[1], [0], [0], [1], [0, 0, 1, 1], [], []>} : vector<8x128xf32>, vector<128x128xf32>, vector<8x128xf32> -> vector<8x128xf32>
    %250 = vector.broadcast %152 : vector<1x128xf32> to vector<8x128xf32>
    %251 = arith.addf %249, %250 : vector<8x128xf32>
    %252 = arith.mulf %231, %251 : vector<8x128xf32>
    %253 = arith.addf %247, %252 : vector<8x128xf32>
    %254 = math.tanh %253 : vector<8x128xf32>
    %cst_121 = arith.constant 1.000000e+00 : f32
    %255 = vector.broadcast %cst_121 : f32 to vector<8x128xf32>
    %256 = arith.subf %255, %243 : vector<8x128xf32>
    %257 = arith.mulf %256, %254 : vector<8x128xf32>
    %258 = arith.mulf %243, %219 : vector<8x128xf32>
    %259 = arith.addf %257, %258 : vector<8x128xf32>
    %c4880 = arith.constant 4880 : index
    %c0_122 = arith.constant 0 : index
    %260 = vector.load %arg1[%c4880, %c0_122] : memref<4888x128xf32, #tpu.memory_space<vmem>>, vector<8x128xf32>
    %c4368 = arith.constant 4368 : index
    %c0_123 = arith.constant 0 : index
    %261 = vector.load %arg1[%c4368, %c0_123] : memref<4888x128xf32, #tpu.memory_space<vmem>>, vector<128x128xf32>
    %cst_124 = arith.constant dense<0.000000e+00> : vector<8x128xf32>
    %262 = tpu.matmul %259, %261, %cst_124 {dimension_numbers = #tpu.dot_dimension_numbers<[1], [0], [0], [1], [0, 0, 1, 1], [], []>} : vector<8x128xf32>, vector<128x128xf32>, vector<8x128xf32> -> vector<8x128xf32>
    %263 = vector.extract_strided_slice %260 {offsets = [0, 0], sizes = [1, 128], strides = [1, 1]} : vector<8x128xf32> to vector<1x128xf32>
    %264 = vector.broadcast %263 : vector<1x128xf32> to vector<8x128xf32>
    %265 = arith.addf %262, %264 : vector<8x128xf32>
    %266 = arith.negf %265 : vector<8x128xf32>
    %267 = math.exp %266 : vector<8x128xf32>
    %cst_125 = arith.constant 1.000000e+00 : f32
    %268 = vector.broadcast %cst_125 : f32 to vector<8x128xf32>
    %269 = arith.addf %268, %267 : vector<8x128xf32>
    %270 = arith.divf %268, %269 : vector<8x128xf32>
    %271 = arith.mulf %270, %259 : vector<8x128xf32>
    %cst_126 = arith.constant dense<0.000000e+00> : vector<128xf32>
    %272 = vector.multi_reduction <add>, %271, %cst_126 [0] : vector<8x128xf32> to vector<128xf32>
    %273 = vector.shape_cast %272 : vector<128xf32> to vector<1x128xf32>
    %cst_127 = arith.constant dense<0xFF800000> : vector<128xf32>
    %274 = vector.multi_reduction <maximumf>, %259, %cst_127 [0] : vector<8x128xf32> to vector<128xf32>
    %275 = vector.shape_cast %274 : vector<128xf32> to vector<1x128xf32>
    %c4496 = arith.constant 4496 : index
    %c0_128 = arith.constant 0 : index
    %276 = vector.load %arg1[%c4496, %c0_128] : memref<4888x128xf32, #tpu.memory_space<vmem>>, vector<128x128xf32>
    %cst_129 = arith.constant dense<0.000000e+00> : vector<1x128xf32>
    %277 = tpu.matmul %273, %276, %cst_129 {dimension_numbers = #tpu.dot_dimension_numbers<[1], [0], [0], [1], [0, 0, 1, 1], [], []>} : vector<1x128xf32>, vector<128x128xf32>, vector<1x128xf32> -> vector<1x128xf32>
    %c4624 = arith.constant 4624 : index
    %c0_130 = arith.constant 0 : index
    %278 = vector.load %arg1[%c4624, %c0_130] : memref<4888x128xf32, #tpu.memory_space<vmem>>, vector<128x128xf32>
    %cst_131 = arith.constant dense<0.000000e+00> : vector<1x128xf32>
    %279 = tpu.matmul %275, %278, %cst_131 {dimension_numbers = #tpu.dot_dimension_numbers<[1], [0], [0], [1], [0, 0, 1, 1], [], []>} : vector<1x128xf32>, vector<128x128xf32>, vector<1x128xf32> -> vector<1x128xf32>
    %280 = arith.addf %277, %279 : vector<1x128xf32>
    %281 = vector.extract_strided_slice %260 {offsets = [1, 0], sizes = [1, 128], strides = [1, 1]} : vector<8x128xf32> to vector<1x128xf32>
    %282 = arith.addf %280, %281 : vector<1x128xf32>
    %c4752 = arith.constant 4752 : index
    %c0_132 = arith.constant 0 : index
    %283 = vector.load %arg1[%c4752, %c0_132] : memref<4888x128xf32, #tpu.memory_space<vmem>>, vector<128x128xf32>
    %cst_133 = arith.constant dense<0.000000e+00> : vector<1x128xf32>
    %284 = tpu.matmul %282, %283, %cst_133 {dimension_numbers = #tpu.dot_dimension_numbers<[1], [0], [0], [1], [0, 0, 1, 1], [], []>} : vector<1x128xf32>, vector<128x128xf32>, vector<1x128xf32> -> vector<1x128xf32>
    %285 = vector.extract_strided_slice %260 {offsets = [2, 0], sizes = [1, 128], strides = [1, 1]} : vector<8x128xf32> to vector<1x128xf32>
    %286 = arith.addf %284, %285 : vector<1x128xf32>
    %c0_134 = arith.constant 0 : index
    %c0_135 = arith.constant 0 : index
    %c0_136 = arith.constant 0 : index
    %287 = vector.load %arg7[%c0_134, %c0_135, %c0_136] : memref<1x1x128xf32, #tpu.memory_space<vmem>>, vector<1x1x128xf32>
    %288 = vector.shape_cast %287 : vector<1x1x128xf32> to vector<1x128xf32>
    %289 = vector.shape_cast %286 : vector<1x128xf32> to vector<1x1x128xf32>
    tpu.vector_store %arg7[%c0_134, %c0_135, %c0_136], %289 {strides = array<i32>} : memref<1x1x128xf32, #tpu.memory_space<vmem>>, vector<1x1x128xf32>,
    return
  }
  func.func @transform_0(%arg0: i32) -> (i32, i32) {
    %c0_i32 = arith.constant 0 : i32
    %c0_i32_0 = arith.constant 0 : i32
    %c0_i32_1 = arith.constant 0 : i32
    return %c0_i32, %c0_i32_0 : i32, i32
  }
  func.func @transform_1(%arg0: i32) -> (i32, i32, i32) {
    %c0_i32 = arith.constant 0 : i32
    %c0_i32_0 = arith.constant 0 : i32
    %c0_i32_1 = arith.constant 0 : i32
    return %arg0, %c0_i32, %c0_i32_0 : i32, i32, i32
  }
  func.func @transform_2(%arg0: i32) -> (i32, i32, i32) {
    %c0_i32 = arith.constant 0 : i32
    %c0_i32_0 = arith.constant 0 : i32
    %c0_i32_1 = arith.constant 0 : i32
    return %arg0, %c0_i32, %c0_i32_0 : i32, i32, i32
  }
  func.func @transform_3(%arg0: i32) -> (i32, i32, i32) {
    %c0_i32 = arith.constant 0 : i32
    %c0_i32_0 = arith.constant 0 : i32
    %c0_i32_1 = arith.constant 0 : i32
    return %arg0, %c0_i32, %c0_i32_0 : i32, i32, i32
  }
  func.func @transform_4(%arg0: i32) -> (i32, i32, i32) {
    %c0_i32 = arith.constant 0 : i32
    %c0_i32_0 = arith.constant 0 : i32
    %c0_i32_1 = arith.constant 0 : i32
    return %arg0, %c0_i32, %c0_i32_0 : i32, i32, i32
  }
  func.func @transform_5(%arg0: i32) -> (i32, i32, i32) {
    %c0_i32 = arith.constant 0 : i32
    %c0_i32_0 = arith.constant 0 : i32
    %c0_i32_1 = arith.constant 0 : i32
    return %arg0, %c0_i32, %c0_i32_0 : i32, i32, i32
  }
  func.func @transform_6(%arg0: i32) -> (i32, i32, i32) {
    %c0_i32 = arith.constant 0 : i32
    %c0_i32_0 = arith.constant 0 : i32
    %c0_i32_1 = arith.constant 0 : i32
    return %arg0, %c0_i32, %c0_i32_0 : i32, i32, i32
  }
}

</mosaic_0001>

<llo_original>
// kernel: forward.1
$region0: #{forward.1}
  #allocation0 [shape = 'u32[]', space=smem, size = 0x4, offset = 0x4, fixed_abs, tag = 'smem constant byte address 0x4 - core index']
  #allocation1 [shape = 'u32[144,128]{1,0:T(1,128)}', space=vmem, size = 0x12000, scoped, tag = 'internal scratch']
  %s0 = inlined_call_operand.hbm [shape: f32[4888,128], index: 0, kind: input, shape index: {}]
  %s1 = inlined_call_operand.hbm [shape: f32[4,8,128], index: 1, kind: input, shape index: {}]
  %s2 = inlined_call_operand.hbm [shape: f32[4,16,128], index: 2, kind: input, shape index: {}]
  %s3 = inlined_call_operand.vmem [shape: f32[4,32,8], index: 3, kind: input, shape index: {}]
  %s4 = inlined_call_operand.hbm [shape: f32[4,8,16], index: 4, kind: input, shape index: {}]
  %s5 = inlined_call_operand.hbm [shape: f32[4,16,128], index: 5, kind: input, shape index: {}]
  %s6 = inlined_call_operand.vmem [shape: f32[4,1,128], index: 6, kind: output, shape index: {}]
  %s7 = sld [smem:[#allocation0]]
  $region77: #{forward.1} parent=0
    _
  %s9 = ssub.s32 1, %s7
  %s10 = scalar_select 0, %s9, %s7
  $region1: #{forward.1} parent=0
    #allocation2 [shape = 'u8[2502656]{0}', space=vmem, size = 0x263000, scoped, tag = 'input window, operand 0, single buffered']
    #allocation3 [shape = 's32[2]{0}', space=sflag, size = 0x8, scoped, tag = 'scoped memory for forward.1']
    #allocation4 [shape = 'u8[8192]{0}', space=vmem, size = 0x2000, scoped, tag = 'input window, operand 1']
    #allocation5 [shape = 's32[2]{0}', space=sflag, size = 0x8, scoped, tag = 'scoped memory for forward.1']
    #allocation6 [shape = 'u8[16384]{0}', space=vmem, size = 0x4000, scoped, tag = 'input window, operand 2']
    #allocation7 [shape = 'u8[8192]{0}', space=vmem, size = 0x2000, scoped, tag = 'input window, operand 4']
    #allocation8 [shape = 's32[2]{0}', space=sflag, size = 0x8, scoped, tag = 'scoped memory for forward.1']
    #allocation9 [shape = 'u8[16384]{0}', space=vmem, size = 0x4000, scoped, tag = 'input window, operand 5']
    %11 = vsyncpa [#allocation3], 0
    %12 = vsyncpa [#allocation5], 0
    %s13 = scalar_lea.sflag [#allocation5], 1
    %14 = vsyncpa %s13, 0
    %15 = vsyncpa [#allocation8], 0
    %s16 = scalar_lea.sflag [#allocation8], 1
    %17 = vsyncpa %s16, 0
    loop: start=0, step=1, limit=6
    $region2: #{forward.1} parent=1 // loop_pre_header
      _
    $region3: #{forward.1} parent=1 // loop_header
      %s19 = sphi 0, %s23
      %p20 = scmp.ge.s32.totalorder %s19, 6
      %s27 = sphi 0, %s27
      %s29 = sphi 0, %s27
      %s30 = sphi 0, %s29
      %s44 = sphi 0, %s30
      %s50 = sphi 0, %s52
      %s53 = sphi 0, %s50
      %s54 = sphi 0, %s53
      %s70 = sphi 0, %s54
      %s76 = sphi 0, %s78
      %s79 = sphi 0, %s76
      %s80 = sphi 0, %s79
      %s96 = sphi 0, %s80
      %s102 = sphi 0, %s104
      %s105 = sphi 0, %s102
      %s106 = sphi 0, %s105
      %s122 = sphi 0, %s106
      %s128 = sphi 0, %s130
      %s131 = sphi 0, %s128
      %s132 = sphi 0, %s131
      %s148 = sphi 0, %s132
      %s154 = sphi 0, %s156
      %s157 = sphi 0, %s154
      %s158 = sphi 0, %s157
      %s174 = sphi 0, %s158
      %s180 = sphi 0, %s182
      %s183 = sphi 0, %s180
      %s184 = sphi 0, %s183
      %s200 = sphi 0, %s184
    $region4: #{forward.1} parent=1 // loop_header_branch
      %22 = sbr.rel (%p20) target = $region8
    $region5: #{forward.1} parent=1 // loop_body
      %s24 = ssub.s32 %s19, 1
      %s25 = ssub.s32 %s19, 2
      %s26 = sadd.s32 %s19, 1
      %s28 = sadd.s32 %s27, 1
      %p31 = scmp.eq.s32.totalorder %s19, 3
      %p32 = scmp.ne.s32.totalorder %s27, %s29
      %p33 = scmp.eq.s32.totalorder %s19, 0
      %p34 = por %p32, %p33
      %p35 = scmp.ne.s32.totalorder %s27, %s29
      %p36 = scmp.eq.s32.totalorder %s24, 3
      %p37 = por %p35, %p36
      %p38 = scmp.ne.s32.totalorder %s29, %s30
      %p39 = scmp.eq.s32.totalorder %s24, 0
      %p40 = por %p38, %p39
      %p41 = scmp.ne.s32.totalorder %s29, %s30
      %p42 = scmp.eq.s32.totalorder %s25, 3
      %p43 = por %p41, %p42
      %p45 = scmp.ne.s32.totalorder %s30, %s44
      %p46 = scmp.eq.s32.totalorder %s25, 0
      %p47 = por %p45, %p46
      %s48 = ssub.s32 %s19, %s26
      %p49 = scmp.eq.s32.totalorder %s48, 0
      %s51 = sadd.s32 %s50, 1
      %s52 = scalar_select %p49, %s50, %s51
      %p55 = pneg %p49
      %p56 = scmp.eq.s32.totalorder %s19, 3
      %p57 = por %p55, %p56
      %p58 = scmp.ne.s32.totalorder %s50, %s53
      %p59 = scmp.eq.s32.totalorder %s19, 0
      %p60 = por %p58, %p59
      %p61 = scmp.ne.s32.totalorder %s50, %s53
      %p62 = scmp.eq.s32.totalorder %s24, 3
      %p63 = por %p61, %p62
      %p64 = scmp.ne.s32.totalorder %s53, %s54
      %p65 = scmp.eq.s32.totalorder %s24, 0
      %p66 = por %p64, %p65
      %p67 = scmp.ne.s32.totalorder %s53, %s54
      %p68 = scmp.eq.s32.totalorder %s25, 3
      %p69 = por %p67, %p68
      %p71 = scmp.ne.s32.totalorder %s54, %s70
      %p72 = scmp.eq.s32.totalorder %s25, 0
      %p73 = por %p71, %p72
      %s74 = ssub.s32 %s19, %s26
      %p75 = scmp.eq.s32.totalorder %s74, 0
      %s77 = sadd.s32 %s76, 1
      %s78 = scalar_select %p75, %s76, %s77
      %p81 = pneg %p75
      %p82 = scmp.eq.s32.totalorder %s19, 3
      %p83 = por %p81, %p82
      %p84 = scmp.ne.s32.totalorder %s76, %s79
      %p85 = scmp.eq.s32.totalorder %s19, 0
      %p86 = por %p84, %p85
      %p87 = scmp.ne.s32.totalorder %s76, %s79
      %p88 = scmp.eq.s32.totalorder %s24, 3
      %p89 = por %p87, %p88
      %p90 = scmp.ne.s32.totalorder %s79, %s80
      %p91 = scmp.eq.s32.totalorder %s24, 0
      %p92 = por %p90, %p91
      %p93 = scmp.ne.s32.totalorder %s79, %s80
      %p94 = scmp.eq.s32.totalorder %s25, 3
      %p95 = por %p93, %p94
      %p97 = scmp.ne.s32.totalorder %s80, %s96
      %p98 = scmp.eq.s32.totalorder %s25, 0
      %p99 = por %p97, %p98
      %s100 = ssub.s32 %s19, %s26
      %p101 = scmp.eq.s32.totalorder %s100, 0
      %s103 = sadd.s32 %s102, 1
      %s104 = scalar_select %p101, %s102, %s103
      %p107 = pneg %p101
      %p108 = scmp.eq.s32.totalorder %s19, 3
      %p109 = por %p107, %p108
      %p110 = scmp.ne.s32.totalorder %s102, %s105
      %p111 = scmp.eq.s32.totalorder %s19, 0
      %p112 = por %p110, %p111
      %p113 = scmp.ne.s32.totalorder %s102, %s105
      %p114 = scmp.eq.s32.totalorder %s24, 3
      %p115 = por %p113, %p114
      %p116 = scmp.ne.s32.totalorder %s105, %s106
      %p117 = scmp.eq.s32.totalorder %s24, 0
      %p118 = por %p116, %p117
      %p119 = scmp.ne.s32.totalorder %s105, %s106
      %p120 = scmp.eq.s32.totalorder %s25, 3
      %p121 = por %p119, %p120
      %p123 = scmp.ne.s32.totalorder %s106, %s122
      %p124 = scmp.eq.s32.totalorder %s25, 0
      %p125 = por %p123, %p124
      %s126 = ssub.s32 %s19, %s26
      %p127 = scmp.eq.s32.totalorder %s126, 0
      %s129 = sadd.s32 %s128, 1
      %s130 = scalar_select %p127, %s128, %s129
      %p133 = pneg %p127
      %p134 = scmp.eq.s32.totalorder %s19, 3
      %p135 = por %p133, %p134
      %p136 = scmp.ne.s32.totalorder %s128, %s131
      %p137 = scmp.eq.s32.totalorder %s19, 0
      %p138 = por %p136, %p137
      %p139 = scmp.ne.s32.totalorder %s128, %s131
      %p140 = scmp.eq.s32.totalorder %s24, 3
      %p141 = por %p139, %p140
      %p142 = scmp.ne.s32.totalorder %s131, %s132
      %p143 = scmp.eq.s32.totalorder %s24, 0
      %p144 = por %p142, %p143
      %p145 = scmp.ne.s32.totalorder %s131, %s132
      %p146 = scmp.eq.s32.totalorder %s25, 3
      %p147 = por %p145, %p146
      %p149 = scmp.ne.s32.totalorder %s132, %s148
      %p150 = scmp.eq.s32.totalorder %s25, 0
      %p151 = por %p149, %p150
      %s152 = ssub.s32 %s19, %s26
      %p153 = scmp.eq.s32.totalorder %s152, 0
      %s155 = sadd.s32 %s154, 1
      %s156 = scalar_select %p153, %s154, %s155
      %p159 = pneg %p153
      %p160 = scmp.eq.s32.totalorder %s19, 3
      %p161 = por %p159, %p160
      %p162 = scmp.ne.s32.totalorder %s154, %s157
      %p163 = scmp.eq.s32.totalorder %s19, 0
      %p164 = por %p162, %p163
      %p165 = scmp.ne.s32.totalorder %s154, %s157
      %p166 = scmp.eq.s32.totalorder %s24, 3
      %p167 = por %p165, %p166
      %p168 = scmp.ne.s32.totalorder %s157, %s158
      %p169 = scmp.eq.s32.totalorder %s24, 0
      %p170 = por %p168, %p169
      %p171 = scmp.ne.s32.totalorder %s157, %s158
      %p172 = scmp.eq.s32.totalorder %s25, 3
      %p173 = por %p171, %p172
      %p175 = scmp.ne.s32.totalorder %s158, %s174
      %p176 = scmp.eq.s32.totalorder %s25, 0
      %p177 = por %p175, %p176
      %s178 = ssub.s32 %s19, %s26
      %p179 = scmp.eq.s32.totalorder %s178, 0
      %s181 = sadd.s32 %s180, 1
      %s182 = scalar_select %p179, %s180, %s181
      %p185 = pneg %p179
      %p186 = scmp.eq.s32.totalorder %s19, 3
      %p187 = por %p185, %p186
      %p188 = scmp.ne.s32.totalorder %s180, %s183
      %p189 = scmp.eq.s32.totalorder %s19, 0
      %p190 = por %p188, %p189
      %p191 = scmp.ne.s32.totalorder %s180, %s183
      %p192 = scmp.eq.s32.totalorder %s24, 3
      %p193 = por %p191, %p192
      %p194 = scmp.ne.s32.totalorder %s183, %s184
      %p195 = scmp.eq.s32.totalorder %s24, 0
      %p196 = por %p194, %p195
      %p197 = scmp.ne.s32.totalorder %s183, %s184
      %p198 = scmp.eq.s32.totalorder %s25, 3
      %p199 = por %p197, %p198
      %p201 = scmp.ne.s32.totalorder %s184, %s200
      %p202 = scmp.eq.s32.totalorder %s25, 0
      %p203 = por %p201, %p202
      %p204 = scmp.le.s32.totalorder 1, %s19
      %p205 = scmp.lt.s32.totalorder %s19, 5
      %p206 = pnand %p204, %p205
      %p207 = pneg %p206
      // Predicated region
      $region9: #{forward.1} parent=5 // pred_check
        _
      $region10: #{forward.1} parent=5 // pred_check_branch
        %209 = sbr.rel (%p206) target = $region12
      $region11: #{forward.1} parent=5 // pred_region
        %s210 = ssub.s32 %s19, 1
        // Predicated region
        $region13: #{forward.1} parent=11 // pred_check
          %p211 = pneg %p40
        $region14: #{forward.1} parent=11 // pred_check_branch
          %213 = sbr.rel (%p211) target = $region16
        $region15: #{forward.1} parent=11 // pred_region
          %s215 = ssub.s32 78208, 78208
          %216 = vsyncadd [#allocation3], %s215
          %s217 = sshll.u32 [#allocation2], 4
          %s218 = int_to_ptr.vmem [resolvable:$true] %s217
          %223 = dma.hbm_to_vmem [thread:$0]  %s0, 78208, %s218, [#allocation3], 128, 128, 8
        $region16: #{forward.1} parent=11 // pred_fallthru
          _
      $region12: #{forward.1} parent=5 // pred_fallthru
        _
      %p224 = scmp.lt.s32.totalorder %s19, 4
      // Predicated region
      $region17: #{forward.1} parent=5 // pred_check
        %p225 = pneg %p224
      $region18: #{forward.1} parent=5 // pred_check_branch
        %227 = sbr.rel (%p225) target = $region20
      $region19: #{forward.1} parent=5 // pred_region
        // Predicated region
        $region21: #{forward.1} parent=19 // pred_check
          %p228 = pneg %p60
        $region22: #{forward.1} parent=19 // pred_check_branch
          %230 = sbr.rel (%p228) target = $region24
        $region23: #{forward.1} parent=19 // pred_region
          %s231 = sand.u32 %s19, 1
          %s232 = scalar_lea.sflag [#allocation5], %s231
          %s233 = sand.u32 %s50, 1
          %s234 = smul.addr %s233, 8
          %s235 = scalar_lea.vmem [#allocation4], %s234
          %s237 = ssub.s32 128, 128
          %238 = vsyncadd %s232, %s237
          %s239 = smul.addr %s19, 128
          %s240 = scalar_lea.hbm %s1, %s239
          %s242 = sshll.u32 %s235, 4
          %s243 = int_to_ptr.vmem [resolvable:$true] %s242
          %245 = dma.hbm_to_vmem [thread:$0]  %s240, 128, %s243, %s232
        $region24: #{forward.1} parent=19 // pred_fallthru
          _
        // Predicated region
        $region25: #{forward.1} parent=19 // pred_check
          %p246 = pneg %p86
        $region26: #{forward.1} parent=19 // pred_check_branch
          %248 = sbr.rel (%p246) target = $region28
        $region27: #{forward.1} parent=19 // pred_region
          %s249 = sand.u32 %s19, 1
          %s250 = scalar_lea.sflag [#allocation5], %s249
          %s251 = sand.u32 %s76, 1
          %s252 = smul.addr %s251, 16
          %s253 = scalar_lea.vmem [#allocation6], %s252
          %s255 = ssub.s32 256, 256
          %256 = vsyncadd %s250, %s255
          %s257 = smul.addr %s19, 2
          %s258 = smul.addr %s257, 128
          %s259 = scalar_lea.hbm %s2, %s258
          %s260 = sshll.u32 %s253, 4
          %s261 = int_to_ptr.vmem [resolvable:$true] %s260
          %266 = dma.hbm_to_vmem [thread:$0]  %s259, 256, %s261, %s250, 128, 128, 8
        $region28: #{forward.1} parent=19 // pred_fallthru
          _
        // Predicated region
        $region29: #{forward.1} parent=19 // pred_check
          %p267 = pneg %p112
        $region30: #{forward.1} parent=19 // pred_check_branch
          %269 = sbr.rel (%p267) target = $region32
        $region31: #{forward.1} parent=19 // pred_region
          %p270 = scmp.lt.s32.totalorder %s19, 3
          %s271 = scalar_select %p270, %s19, 3
          %s272 = smul.addr %s271, 4
          %s273 = smul.addr %s272, 8
          %s274 = scalar_lea.vmem %s3, %s273
        $region32: #{forward.1} parent=19 // pred_fallthru
          _
        // Predicated region
        $region33: #{forward.1} parent=19 // pred_check
          %p275 = pneg %p138
        $region34: #{forward.1} parent=19 // pred_check_branch
          %277 = sbr.rel (%p275) target = $region36
        $region35: #{forward.1} parent=19 // pred_region
          %s278 = sand.u32 %s19, 1
          %s279 = scalar_lea.sflag [#allocation8], %s278
          %s280 = sand.u32 %s128, 1
          %s281 = smul.addr %s280, 8
          %s282 = scalar_lea.vmem [#allocation7], %s281
          %s284 = ssub.s32 128, 128
          %285 = vsyncadd %s279, %s284
          %s286 = smul.addr %s19, 128
          %s287 = scalar_lea.hbm %s4, %s286
          %s289 = sshll.u32 %s282, 4
          %s290 = int_to_ptr.vmem [resolvable:$true] %s289
          %292 = dma.hbm_to_vmem [thread:$0]  %s287, 128, %s290, %s279
        $region36: #{forward.1} parent=19 // pred_fallthru
          _
        // Predicated region
        $region37: #{forward.1} parent=19 // pred_check
          %p293 = pneg %p164
        $region38: #{forward.1} parent=19 // pred_check_branch
          %295 = sbr.rel (%p293) target = $region40
        $region39: #{forward.1} parent=19 // pred_region
          %s296 = sand.u32 %s19, 1
          %s297 = scalar_lea.sflag [#allocation8], %s296
          %s298 = sand.u32 %s154, 1
          %s299 = smul.addr %s298, 16
          %s300 = scalar_lea.vmem [#allocation9], %s299
          %s302 = ssub.s32 256, 256
          %303 = vsyncadd %s297, %s302
          %s304 = smul.addr %s19, 2
          %s305 = smul.addr %s304, 128
          %s306 = scalar_lea.hbm %s5, %s305
          %s307 = sshll.u32 %s300, 4
          %s308 = int_to_ptr.vmem [resolvable:$true] %s307
          %313 = dma.hbm_to_vmem [thread:$0]  %s306, 256, %s308, %s297, 128, 128, 8
        $region40: #{forward.1} parent=19 // pred_fallthru
          _
      $region20: #{forward.1} parent=5 // pred_fallthru
        _
      %p314 = scmp.le.s32.totalorder 1, %s19
      %p315 = scmp.lt.s32.totalorder %s19, 5
      %p316 = pnand %p314, %p315
      %p317 = pneg %p316
      // Predicated region
      $region41: #{forward.1} parent=5 // pred_check
        _
      $region42: #{forward.1} parent=5 // pred_check_branch
        %319 = sbr.rel (%p316) target = $region44
      $region43: #{forward.1} parent=5 // pred_region
        %s320 = ssub.s32 %s19, 1
        // Predicated region
        $region45: #{forward.1} parent=43 // pred_check
          %p321 = pneg %p40
        $region46: #{forward.1} parent=43 // pred_check_branch
          %323 = sbr.rel (%p321) target = $region48
        $region47: #{forward.1} parent=43 // pred_region
          %324 = dma.done [#allocation3], 78208
        $region48: #{forward.1} parent=43 // pred_fallthru
          _
        %s325 = sand.u32 %s24, 1
        %s326 = scalar_lea.sflag [#allocation5], %s325
        %s327 = sand.u32 %s53, 1
        %s328 = smul.addr %s327, 8
        %s329 = scalar_lea.vmem [#allocation4], %s328
        // Predicated region
        $region49: #{forward.1} parent=43 // pred_check
          %p330 = pneg %p66
        $region50: #{forward.1} parent=43 // pred_check_branch
          %332 = sbr.rel (%p330) target = $region52
        $region51: #{forward.1} parent=43 // pred_region
          %333 = dma.done %s326, 128
        $region52: #{forward.1} parent=43 // pred_fallthru
          _
        %s334 = sand.u32 %s24, 1
        %s335 = scalar_lea.sflag [#allocation5], %s334
        %s336 = sand.u32 %s79, 1
        %s337 = smul.addr %s336, 16
        %s338 = scalar_lea.vmem [#allocation6], %s337
        // Predicated region
        $region53: #{forward.1} parent=43 // pred_check
          %p339 = pneg %p92
        $region54: #{forward.1} parent=43 // pred_check_branch
          %341 = sbr.rel (%p339) target = $region56
        $region55: #{forward.1} parent=43 // pred_region
          %342 = dma.done %s335, 256
        $region56: #{forward.1} parent=43 // pred_fallthru
          _
        %s343 = sand.u32 %s24, 1
        %s344 = scalar_lea.sflag [#allocation8], %s343
        %s345 = sand.u32 %s131, 1
        %s346 = smul.addr %s345, 8
        %s347 = scalar_lea.vmem [#allocation7], %s346
        // Predicated region
        $region57: #{forward.1} parent=43 // pred_check
          %p348 = pneg %p144
        $region58: #{forward.1} parent=43 // pred_check_branch
          %350 = sbr.rel (%p348) target = $region60
        $region59: #{forward.1} parent=43 // pred_region
          %351 = dma.done %s344, 128
        $region60: #{forward.1} parent=43 // pred_fallthru
          _
        %s352 = sand.u32 %s24, 1
        %s353 = scalar_lea.sflag [#allocation8], %s352
        %s354 = sand.u32 %s157, 1
        %s355 = smul.addr %s354, 16
        %s356 = scalar_lea.vmem [#allocation9], %s355
        // Predicated region
        $region61: #{forward.1} parent=43 // pred_check
          %p357 = pneg %p170
        $region62: #{forward.1} parent=43 // pred_check_branch
          %359 = sbr.rel (%p357) target = $region64
        $region63: #{forward.1} parent=43 // pred_region
          %360 = dma.done %s353, 256
        $region64: #{forward.1} parent=43 // pred_fallthru
          _
        %p361 = pneg %p40
        %p362 = pneg %p37
        %s363 = sand.u32 %s24, 1
        %s364 = scalar_lea.sflag [#allocation5], %s363
        %s365 = sand.u32 %s53, 1
        %s366 = smul.addr %s365, 8
        %s367 = scalar_lea.vmem [#allocation4], %s366
        %p368 = pneg %p66
        %p369 = pneg %p63
        %s370 = sand.u32 %s24, 1
        %s371 = scalar_lea.sflag [#allocation5], %s370
        %s372 = sand.u32 %s79, 1
        %s373 = smul.addr %s372, 16
        %s374 = scalar_lea.vmem [#allocation6], %s373
        %p375 = pneg %p92
        %p376 = pneg %p89
        %p377 = scmp.lt.s32.totalorder %s24, 3
        %s378 = scalar_select %p377, %s24, 3
        %s379 = smul.addr %s378, 4
        %s380 = smul.addr %s379, 8
        %s381 = scalar_lea.vmem %s3, %s380
        %p382 = pneg %p118
        %p383 = pneg %p115
        %s384 = sand.u32 %s24, 1
        %s385 = scalar_lea.sflag [#allocation8], %s384
        %s386 = sand.u32 %s131, 1
        %s387 = smul.addr %s386, 8
        %s388 = scalar_lea.vmem [#allocation7], %s387
        %p389 = pneg %p144
        %p390 = pneg %p141
        %s391 = sand.u32 %s24, 1
        %s392 = scalar_lea.sflag [#allocation8], %s391
        %s393 = sand.u32 %s157, 1
        %s394 = smul.addr %s393, 16
        %s395 = scalar_lea.vmem [#allocation9], %s394
        %p396 = pneg %p170
        %p397 = pneg %p167
        %p398 = pneg %p196
        %p399 = pneg %p193
        %p400 = scmp.lt.s32.totalorder %s24, 3
        %s401 = scalar_select %p400, %s24, 3
        %s402 = scalar_lea.vmem %s6, %s401
        %p403 = scmp.lt.s32.totalorder %s24, 3
        %s404 = scalar_select %p403, %s24, 3
        %s405 = smul.addr %s404, 4
        %s406 = smul.addr %s405, 8
        %s407 = scalar_lea.vmem %s3, %s406
        %p408 = scmp.lt.s32.totalorder %s24, 3
        %s409 = scalar_select %p408, %s24, 3
        %s410 = scalar_lea.vmem %s6, %s409
        %v411 = vld [vmem:[%s329] sm:$0xff]
        %v412 = vld [vmem:[%s338] sm:$0xff]
        %v413 = vld [vmem:[%s338 + $0x8] sm:$0xff]
        %v414 = vld [vmem:[%s407] sm:$0xff]
        %v415 = vld [vmem:[%s407 + $0x8] sm:$0xff]
        %v416 = vld [vmem:[%s407 + $0x10] sm:$0xff]
        %v417 = vld [vmem:[%s407 + $0x18] sm:$0xff]
        %v418 = vld [vmem:[%s347] sm:$0xff]
        %v419 = vld [vmem:[%s356] sm:$0xff]
        %v420 = vld [vmem:[%s356 + $0x8] sm:$0xff]
        %v421 = vld [vmem:[#allocation2] sm:$0xff]
        %v422 = vld [vmem:[#allocation2 + $0x8] sm:$0xff]
        %v423 = vld [vmem:[#allocation2 + $0x10] sm:$0xff]
        %v424 = vld [vmem:[#allocation2 + $0x18] sm:$0xff]
        %v425 = vld [vmem:[#allocation2 + $0x20] sm:$0xff]
        %v426 = vld [vmem:[#allocation2 + $0x28] sm:$0xff]
        %v427 = vld [vmem:[#allocation2 + $0x30] sm:$0xff]
        %v428 = vld [vmem:[#allocation2 + $0x38] sm:$0xff]
        %v429 = vld [vmem:[#allocation2 + $0x40] sm:$0xff]
        %v430 = vld [vmem:[#allocation2 + $0x48] sm:$0xff]
        %v431 = vld [vmem:[#allocation2 + $0x50] sm:$0xff]
        %v432 = vld [vmem:[#allocation2 + $0x58] sm:$0xff]
        %v433 = vld [vmem:[#allocation2 + $0x60] sm:$0xff]
        %v434 = vld [vmem:[#allocation2 + $0x68] sm:$0xff]
        %v435 = vld [vmem:[#allocation2 + $0x70] sm:$0xff]
        %v436 = vld [vmem:[#allocation2 + $0x78] sm:$0xff]
        %v437 = vld [vmem:[#allocation2 + $0x80] sm:$0xff]
        %v438 = vld [vmem:[#allocation2 + $0x88] sm:$0xff]
        %v439 = vld [vmem:[#allocation2 + $0x90] sm:$0xff]
        %v440 = vld [vmem:[#allocation2 + $0x98] sm:$0xff]
        %v441 = vld [vmem:[#allocation2 + $0xa0] sm:$0xff]
        %v442 = vld [vmem:[#allocation2 + $0xa8] sm:$0xff]
        %v443 = vld [vmem:[#allocation2 + $0xb0] sm:$0xff]
        %v444 = vld [vmem:[#allocation2 + $0xb8] sm:$0xff]
        %v445 = vld [vmem:[#allocation2 + $0xc0] sm:$0xff]
        %v446 = vld [vmem:[#allocation2 + $0xc8] sm:$0xff]
        %v447 = vld [vmem:[#allocation2 + $0xd0] sm:$0xff]
        %v448 = vld [vmem:[#allocation2 + $0xd8] sm:$0xff]
        %v449 = vld [vmem:[#allocation2 + $0xe0] sm:$0xff]
        %v450 = vld [vmem:[#allocation2 + $0xe8] sm:$0xff]
        %v451 = vld [vmem:[#allocation2 + $0xf0] sm:$0xff]
        %v452 = vld [vmem:[#allocation2 + $0xf8] sm:$0xff]
        %v453 = vld [vmem:[#allocation2 + $0x100] sm:$0xff]
        %v454 = vld [vmem:[#allocation2 + $0x108] sm:$0xff]
        %v455 = vld [vmem:[#allocation2 + $0x110] sm:$0xff]
        %v456 = vld [vmem:[#allocation2 + $0x118] sm:$0xff]
        %v457 = vld [vmem:[#allocation2 + $0x120] sm:$0xff]
        %v458 = vld [vmem:[#allocation2 + $0x128] sm:$0xff]
        %v459 = vld [vmem:[#allocation2 + $0x130] sm:$0xff]
        %v460 = vld [vmem:[#allocation2 + $0x138] sm:$0xff]
        %v461 = vld [vmem:[#allocation2 + $0x140] sm:$0xff]
        %v462 = vld [vmem:[#allocation2 + $0x148] sm:$0xff]
        %v463 = vld [vmem:[#allocation2 + $0x150] sm:$0xff]
        %v464 = vld [vmem:[#allocation2 + $0x158] sm:$0xff]
        %v465 = vld [vmem:[#allocation2 + $0x160] sm:$0xff]
        %v466 = vld [vmem:[#allocation2 + $0x168] sm:$0xff]
        %v467 = vld [vmem:[#allocation2 + $0x170] sm:$0xff]
        %v468 = vld [vmem:[#allocation2 + $0x178] sm:$0xff]
        %v469 = vld [vmem:[#allocation2 + $0x180] sm:$0xff]
        %v470 = vld [vmem:[#allocation2 + $0x188] sm:$0xff]
        %v471 = vld [vmem:[#allocation2 + $0x190] sm:$0xff]
        %v472 = vld [vmem:[#allocation2 + $0x198] sm:$0xff]
        %v473 = vld [vmem:[#allocation2 + $0x1a0] sm:$0xff]
        %v474 = vld [vmem:[#allocation2 + $0x1a8] sm:$0xff]
        %v475 = vld [vmem:[#allocation2 + $0x1b0] sm:$0xff]
        %v476 = vld [vmem:[#allocation2 + $0x1b8] sm:$0xff]
        %v477 = vld [vmem:[#allocation2 + $0x1c0] sm:$0xff]
        %v478 = vld [vmem:[#allocation2 + $0x1c8] sm:$0xff]
        %v479 = vld [vmem:[#allocation2 + $0x1d0] sm:$0xff]
        %v480 = vld [vmem:[#allocation2 + $0x1d8] sm:$0xff]
        %v481 = vld [vmem:[#allocation2 + $0x1e0] sm:$0xff]
        %v482 = vld [vmem:[#allocation2 + $0x1e8] sm:$0xff]
        %v483 = vld [vmem:[#allocation2 + $0x1f0] sm:$0xff]
        %v484 = vld [vmem:[#allocation2 + $0x1f8] sm:$0xff]
        %v485 = vlaneseq
        %v486 = vand.u32 %v485, 127
        %vm487 = vcmp.lt.s32.totalorder %v486, 64
        %v488 = vld [vmem:[#allocation2 + $0x980] sm:$0xff]
        %v489 = vld [vmem:[#allocation2 + $0x200] sm:$0xff]
        %v490 = vld [vmem:[#allocation2 + $0x208] sm:$0xff]
        %v491 = vld [vmem:[#allocation2 + $0x210] sm:$0xff]
        %v492 = vld [vmem:[#allocation2 + $0x218] sm:$0xff]
        %v493 = vld [vmem:[#allocation2 + $0x220] sm:$0xff]
        %v494 = vld [vmem:[#allocation2 + $0x228] sm:$0xff]
        %v495 = vld [vmem:[#allocation2 + $0x230] sm:$0xff]
        %v496 = vld [vmem:[#allocation2 + $0x238] sm:$0xff]
        %v497 = vld [vmem:[#allocation2 + $0x240] sm:$0xff]
        %v498 = vld [vmem:[#allocation2 + $0x248] sm:$0xff]
        %v499 = vld [vmem:[#allocation2 + $0x250] sm:$0xff]
        %v500 = vld [vmem:[#allocation2 + $0x258] sm:$0xff]
        %v501 = vld [vmem:[#allocation2 + $0x260] sm:$0xff]
        %v502 = vld [vmem:[#allocation2 + $0x268] sm:$0xff]
        %v503 = vld [vmem:[#allocation2 + $0x270] sm:$0xff]
        %v504 = vld [vmem:[#allocation2 + $0x278] sm:$0xff]
        %v505 = vlaneseq
        %v506 = vshrl.u32 %v505, 7
        %v507 = vsub.s32 0, %v506
        %v508 = vrot.slane %v488, %v507
        %509 = vmatprep.subr.mxu0 0.0
        %510 = vmatpush1.msra.mxu0 %v504
        %511 = vmatprep.subr.mxu0 0.0
        %512 = vmatpush1.msra.mxu0 %v503
        %513 = vmatprep.subr.mxu0 0.0
        %514 = vmatpush1.msra.mxu0 %v502
        %515 = vmatprep.subr.mxu0 0.0
        %516 = vmatpush1.msra.mxu0 %v501
        %517 = vmatprep.subr.mxu0 0.0
        %518 = vmatpush1.msra.mxu0 %v500
        %519 = vmatprep.subr.mxu0 0.0
        %520 = vmatpush1.msra.mxu0 %v499
        %521 = vmatprep.subr.mxu0 0.0
        %522 = vmatpush1.msra.mxu0 %v498
        %523 = vmatprep.subr.mxu0 0.0
        %524 = vmatpush1.msra.mxu0 %v497
        %525 = vmatprep.subr.mxu0 0.0
        %526 = vmatpush1.msra.mxu0 %v496
        %527 = vmatprep.subr.mxu0 0.0
        %528 = vmatpush1.msra.mxu0 %v495
        %529 = vmatprep.subr.mxu0 0.0
        %530 = vmatpush1.msra.mxu0 %v494
        %531 = vmatprep.subr.mxu0 0.0
        %532 = vmatpush1.msra.mxu0 %v493
        %533 = vmatprep.subr.mxu0 0.0
        %534 = vmatpush1.msra.mxu0 %v492
        %535 = vmatprep.subr.mxu0 0.0
        %536 = vmatpush1.msra.mxu0 %v491
        %537 = vmatprep.subr.mxu0 0.0
        %538 = vmatpush1.msra.mxu0 %v490
        %539 = vmatprep.subr.mxu0 0.0
        %540 = vmatpush1.msra.mxu0 %v489
        %541 = vmatprep.subr.mxu0 0.0
        %542 = vmatpush2.msra.mxu0 0.0
        %543 = vmatprep.subr.mxu0 0.0
        %544 = vmatpush2.msra.mxu0 0.0
        %545 = vmatprep.subr.mxu0 0.0
        %546 = vmatpush2.msra.mxu0 0.0
        %547 = vmatprep.subr.mxu0 0.0
        %548 = vmatpush2.msra.mxu0 0.0
        %549 = vmatprep.subr.mxu0 0.0
        %550 = vmatpush2.msra.mxu0 0.0
        %551 = vmatprep.subr.mxu0 0.0
        %552 = vmatpush2.msra.mxu0 0.0
        %553 = vmatprep.subr.mxu0 0.0
        %554 = vmatpush2.msra.mxu0 0.0
        %555 = vmatprep.subr.mxu0 0.0
        %556 = vmatpush2.msra.mxu0 0.0
        %557 = vmatprep.subr.mxu0 0.0
        %558 = vmatpush2.msra.mxu0 0.0
        %559 = vmatprep.subr.mxu0 0.0
        %560 = vmatpush2.msra.mxu0 0.0
        %561 = vmatprep.subr.mxu0 0.0
        %562 = vmatpush2.msra.mxu0 0.0
        %563 = vmatprep.subr.mxu0 0.0
        %564 = vmatpush2.msra.mxu0 0.0
        %565 = vmatprep.subr.mxu0 0.0
        %566 = vmatpush2.msra.mxu0 0.0
        %567 = vmatprep.subr.mxu0 0.0
        %568 = vmatpush2.msra.mxu0 0.0
        %569 = vmatprep.subr.mxu0 0.0
        %570 = vmatpush2.msra.mxu0 0.0
        %571 = vmatprep.subr.mxu0 0.0
        %572 = vmatpush2.msra.mxu0 0.0
        %573 = vmatprep.mubr.f32.mxu0 0.0
        %574 = vmatmul.mubr.f32.gmra.mxu0 %v411
        %v575 = vpop.f32.mrf.mxu0
        %v576 = vadd.f32 %v508, %v575
        %v577 = vpop.f32.mrf.mxu0
        %578 = vdwg.mxu0
        %v579 = vld [vmem:[#allocation2 + $0x280] sm:$0xff]
        %v580 = vld [vmem:[#allocation2 + $0x288] sm:$0xff]
        %v581 = vld [vmem:[#allocation2 + $0x290] sm:$0xff]
        %v582 = vld [vmem:[#allocation2 + $0x298] sm:$0xff]
        %v583 = vld [vmem:[#allocation2 + $0x2a0] sm:$0xff]
        %v584 = vld [vmem:[#allocation2 + $0x2a8] sm:$0xff]
        %v585 = vld [vmem:[#allocation2 + $0x2b0] sm:$0xff]
        %v586 = vld [vmem:[#allocation2 + $0x2b8] sm:$0xff]
        %v587 = vld [vmem:[#allocation2 + $0x2c0] sm:$0xff]
        %v588 = vld [vmem:[#allocation2 + $0x2c8] sm:$0xff]
        %v589 = vld [vmem:[#allocation2 + $0x2d0] sm:$0xff]
        %v590 = vld [vmem:[#allocation2 + $0x2d8] sm:$0xff]
        %v591 = vld [vmem:[#allocation2 + $0x2e0] sm:$0xff]
        %v592 = vld [vmem:[#allocation2 + $0x2e8] sm:$0xff]
        %v593 = vld [vmem:[#allocation2 + $0x2f0] sm:$0xff]
        %v594 = vld [vmem:[#allocation2 + $0x2f8] sm:$0xff]
        %v595 = vlaneseq
        %v596 = vshrl.u32 %v595, 7
        %v597 = vsub.s32 1, %v596
        %v598 = vrot.slane %v488, %v597
        %599 = vmatprep.subr.mxu0 0.0
        %600 = vmatpush1.msra.mxu0 %v594
        %601 = vmatprep.subr.mxu0 0.0
        %602 = vmatpush1.msra.mxu0 %v593
        %603 = vmatprep.subr.mxu0 0.0
        %604 = vmatpush1.msra.mxu0 %v592
        %605 = vmatprep.subr.mxu0 0.0
        %606 = vmatpush1.msra.mxu0 %v591
        %607 = vmatprep.subr.mxu0 0.0
        %608 = vmatpush1.msra.mxu0 %v590
        %609 = vmatprep.subr.mxu0 0.0
        %610 = vmatpush1.msra.mxu0 %v589
        %611 = vmatprep.subr.mxu0 0.0
        %612 = vmatpush1.msra.mxu0 %v588
        %613 = vmatprep.subr.mxu0 0.0
        %614 = vmatpush1.msra.mxu0 %v587
        %615 = vmatprep.subr.mxu0 0.0
        %616 = vmatpush1.msra.mxu0 %v586
        %617 = vmatprep.subr.mxu0 0.0
        %618 = vmatpush1.msra.mxu0 %v585
        %619 = vmatprep.subr.mxu0 0.0
        %620 = vmatpush1.msra.mxu0 %v584
        %621 = vmatprep.subr.mxu0 0.0
        %622 = vmatpush1.msra.mxu0 %v583
        %623 = vmatprep.subr.mxu0 0.0
        %624 = vmatpush1.msra.mxu0 %v582
        %625 = vmatprep.subr.mxu0 0.0
        %626 = vmatpush1.msra.mxu0 %v581
        %627 = vmatprep.subr.mxu0 0.0
        %628 = vmatpush1.msra.mxu0 %v580
        %629 = vmatprep.subr.mxu0 0.0
        %630 = vmatpush1.msra.mxu0 %v579
        %631 = vmatprep.subr.mxu0 0.0
        %632 = vmatpush2.msra.mxu0 0.0
        %633 = vmatprep.subr.mxu0 0.0
        %634 = vmatpush2.msra.mxu0 0.0
        %635 = vmatprep.subr.mxu0 0.0
        %636 = vmatpush2.msra.mxu0 0.0
        %637 = vmatprep.subr.mxu0 0.0
        %638 = vmatpush2.msra.mxu0 0.0
        %639 = vmatprep.subr.mxu0 0.0
        %640 = vmatpush2.msra.mxu0 0.0
        %641 = vmatprep.subr.mxu0 0.0
        %642 = vmatpush2.msra.mxu0 0.0
        %643 = vmatprep.subr.mxu0 0.0
        %644 = vmatpush2.msra.mxu0 0.0
        %645 = vmatprep.subr.mxu0 0.0
        %646 = vmatpush2.msra.mxu0 0.0
        %647 = vmatprep.subr.mxu0 0.0
        %648 = vmatpush2.msra.mxu0 0.0
        %649 = vmatprep.subr.mxu0 0.0
        %650 = vmatpush2.msra.mxu0 0.0
        %651 = vmatprep.subr.mxu0 0.0
        %652 = vmatpush2.msra.mxu0 0.0
        %653 = vmatprep.subr.mxu0 0.0
        %654 = vmatpush2.msra.mxu0 0.0
        %655 = vmatprep.subr.mxu0 0.0
        %656 = vmatpush2.msra.mxu0 0.0
        %657 = vmatprep.subr.mxu0 0.0
        %658 = vmatpush2.msra.mxu0 0.0
        %659 = vmatprep.subr.mxu0 0.0
        %660 = vmatpush2.msra.mxu0 0.0
        %661 = vmatprep.subr.mxu0 0.0
        %662 = vmatpush2.msra.mxu0 0.0
        %663 = vmatprep.mubr.f32.mxu0 0.0
        %664 = vmatmul.mubr.f32.gmra.mxu0 %v412
        %v665 = vpop.f32.mrf.mxu0
        %v666 = vadd.f32 %v598, %v665
        %v667 = vpop.f32.mrf.mxu0
        %668 = vmatprep.mubr.f32.mxu0 0.0
        %669 = vmatmul.mubr.f32.gmra.mxu0 %v413
        %v670 = vpop.f32.mrf.mxu0
        %v671 = vadd.f32 %v598, %v670
        %v672 = vpop.f32.mrf.mxu0
        %673 = vdwg.mxu0
        %v674 = vmax.f32 %v576, 0.0
        %v675 = vsel %vm487, %v576, %v674
        %vm676 = vcmask 64512
        %v678 = vsel %vm676, %v414, 0
        %v681 = vsel %vm676, %v415, 0
        %v684 = vsel %vm676, %v416, 0
        %v687 = vsel %vm676, %v417, 0
        %689 = vmatprep.subr.mxu0 0.0
        %690 = vmatpush1.msra.mxu0 0.0
        %691 = vmatprep.subr.mxu0 0.0
        %692 = vmatpush1.msra.mxu0 0.0
        %693 = vmatprep.subr.mxu0 0.0
        %694 = vmatpush1.msra.mxu0 0.0
        %695 = vmatprep.subr.mxu0 0.0
        %696 = vmatpush1.msra.mxu0 0.0
        %697 = vmatprep.subr.mxu0 0.0
        %698 = vmatpush1.msra.mxu0 0.0
        %699 = vmatprep.subr.mxu0 0.0
        %700 = vmatpush1.msra.mxu0 0.0
        %701 = vmatprep.subr.mxu0 0.0
        %702 = vmatpush1.msra.mxu0 0.0
        %703 = vmatprep.subr.mxu0 0.0
        %704 = vmatpush1.msra.mxu0 0.0
        %705 = vmatprep.subr.mxu0 0.0
        %706 = vmatpush1.msra.mxu0 0.0
        %707 = vmatprep.subr.mxu0 0.0
        %708 = vmatpush1.msra.mxu0 0.0
        %709 = vmatprep.subr.mxu0 0.0
        %710 = vmatpush1.msra.mxu0 0.0
        %711 = vmatprep.subr.mxu0 0.0
        %712 = vmatpush1.msra.mxu0 0.0
        %713 = vmatprep.subr.mxu0 0.0
        %714 = vmatpush1.msra.mxu0 0.0
        %715 = vmatprep.subr.mxu0 0.0
        %716 = vmatpush1.msra.mxu0 0.0
        %717 = vmatprep.subr.mxu0 0.0
        %718 = vmatpush1.msra.mxu0 0.0
        %719 = vmatprep.subr.mxu0 0.0
        %720 = vmatpush1.msra.mxu0 %v675
        %721 = vmatprep.subr.mxu0 0.0
        %722 = vmatpush2.msra.mxu0 0.0
        %723 = vmatprep.subr.mxu0 0.0
        %724 = vmatpush2.msra.mxu0 0.0
        %725 = vmatprep.subr.mxu0 0.0
        %726 = vmatpush2.msra.mxu0 0.0
        %727 = vmatprep.subr.mxu0 0.0
        %728 = vmatpush2.msra.mxu0 0.0
        %729 = vmatprep.subr.mxu0 0.0
        %730 = vmatpush2.msra.mxu0 0.0
        %731 = vmatprep.subr.mxu0 0.0
        %732 = vmatpush2.msra.mxu0 0.0
        %733 = vmatprep.subr.mxu0 0.0
        %734 = vmatpush2.msra.mxu0 0.0
        %735 = vmatprep.subr.mxu0 0.0
        %736 = vmatpush2.msra.mxu0 0.0
        %737 = vmatprep.subr.mxu0 0.0
        %738 = vmatpush2.msra.mxu0 0.0
        %739 = vmatprep.subr.mxu0 0.0
        %740 = vmatpush2.msra.mxu0 0.0
        %741 = vmatprep.subr.mxu0 0.0
        %742 = vmatpush2.msra.mxu0 0.0
        %743 = vmatprep.subr.mxu0 0.0
        %744 = vmatpush2.msra.mxu0 0.0
        %745 = vmatprep.subr.mxu0 0.0
        %746 = vmatpush2.msra.mxu0 0.0
        %747 = vmatprep.subr.mxu0 0.0
        %748 = vmatpush2.msra.mxu0 0.0
        %749 = vmatprep.subr.mxu0 0.0
        %750 = vmatpush2.msra.mxu0 0.0
        %751 = vmatprep.subr.mxu0 0.0
        %752 = vmatpush2.msra.mxu0 0.0
        %753 = vmatprep.mubr.f32.mxu0 0.0
        %754 = vmatmul.mubr.f32.gmra.mxu0 %v678
        %v755 = vpop.f32.mrf.mxu0
        %v756 = vadd.f32 0.0, %v755
        %v757 = vpop.f32.mrf.mxu0
        %758 = vmatprep.mubr.f32.mxu0 0.0
        %759 = vmatmul.mubr.f32.gmra.mxu0 %v681
        %v760 = vpop.f32.mrf.mxu0
        %v761 = vadd.f32 0.0, %v760
        %v762 = vpop.f32.mrf.mxu0
        %763 = vmatprep.mubr.f32.mxu0 0.0
        %764 = vmatmul.mubr.f32.gmra.mxu0 %v684
        %v765 = vpop.f32.mrf.mxu0
        %v766 = vadd.f32 0.0, %v765
        %v767 = vpop.f32.mrf.mxu0
        %768 = vmatprep.mubr.f32.mxu0 0.0
        %769 = vmatmul.mubr.f32.gmra.mxu0 %v687
        %v770 = vpop.f32.mrf.mxu0
        %v771 = vadd.f32 0.0, %v770
        %v772 = vpop.f32.mrf.mxu0
        %773 = vdwg.mxu0
        %v774 = vadd.f32 %v756, %v766
        %v775 = vadd.f32 %v761, %v771
        %v776 = vld [vmem:[#allocation2 + $0x300] sm:$0xff]
        %v777 = vld [vmem:[#allocation2 + $0x308] sm:$0xff]
        %v778 = vld [vmem:[#allocation2 + $0x310] sm:$0xff]
        %v779 = vld [vmem:[#allocation2 + $0x318] sm:$0xff]
        %v780 = vld [vmem:[#allocation2 + $0x320] sm:$0xff]
        %v781 = vld [vmem:[#allocation2 + $0x328] sm:$0xff]
        %v782 = vld [vmem:[#allocation2 + $0x330] sm:$0xff]
        %v783 = vld [vmem:[#allocation2 + $0x338] sm:$0xff]
        %v784 = vld [vmem:[#allocation2 + $0x340] sm:$0xff]
        %v785 = vld [vmem:[#allocation2 + $0x348] sm:$0xff]
        %v786 = vld [vmem:[#allocation2 + $0x350] sm:$0xff]
        %v787 = vld [vmem:[#allocation2 + $0x358] sm:$0xff]
        %v788 = vld [vmem:[#allocation2 + $0x360] sm:$0xff]
        %v789 = vld [vmem:[#allocation2 + $0x368] sm:$0xff]
        %v790 = vld [vmem:[#allocation2 + $0x370] sm:$0xff]
        %v791 = vld [vmem:[#allocation2 + $0x378] sm:$0xff]
        %v792 = vadd.f32 %v756, %v666
        %v793 = vadd.f32 %v761, %v671
        %v794 = vld [vmem:[#allocation2 + $0x380] sm:$0xff]
        %v795 = vld [vmem:[#allocation2 + $0x388] sm:$0xff]
        %v796 = vld [vmem:[#allocation2 + $0x390] sm:$0xff]
        %v797 = vld [vmem:[#allocation2 + $0x398] sm:$0xff]
        %v798 = vld [vmem:[#allocation2 + $0x3a0] sm:$0xff]
        %v799 = vld [vmem:[#allocation2 + $0x3a8] sm:$0xff]
        %v800 = vld [vmem:[#allocation2 + $0x3b0] sm:$0xff]
        %v801 = vld [vmem:[#allocation2 + $0x3b8] sm:$0xff]
        %v802 = vld [vmem:[#allocation2 + $0x3c0] sm:$0xff]
        %v803 = vld [vmem:[#allocation2 + $0x3c8] sm:$0xff]
        %v804 = vld [vmem:[#allocation2 + $0x3d0] sm:$0xff]
        %v805 = vld [vmem:[#allocation2 + $0x3d8] sm:$0xff]
        %v806 = vld [vmem:[#allocation2 + $0x3e0] sm:$0xff]
        %v807 = vld [vmem:[#allocation2 + $0x3e8] sm:$0xff]
        %v808 = vld [vmem:[#allocation2 + $0x3f0] sm:$0xff]
        %v809 = vld [vmem:[#allocation2 + $0x3f8] sm:$0xff]
        %810 = vmatprep.subr.mxu0 0.0
        %811 = vmatpush1.msra.mxu0 %v809
        %812 = vmatprep.subr.mxu0 0.0
        %813 = vmatpush1.msra.mxu0 %v808
        %814 = vmatprep.subr.mxu0 0.0
        %815 = vmatpush1.msra.mxu0 %v807
        %816 = vmatprep.subr.mxu0 0.0
        %817 = vmatpush1.msra.mxu0 %v806
        %818 = vmatprep.subr.mxu0 0.0
        %819 = vmatpush1.msra.mxu0 %v805
        %820 = vmatprep.subr.mxu0 0.0
        %821 = vmatpush1.msra.mxu0 %v804
        %822 = vmatprep.subr.mxu0 0.0
        %823 = vmatpush1.msra.mxu0 %v803
        %824 = vmatprep.subr.mxu0 0.0
        %825 = vmatpush1.msra.mxu0 %v802
        %826 = vmatprep.subr.mxu0 0.0
        %827 = vmatpush1.msra.mxu0 %v801
        %828 = vmatprep.subr.mxu0 0.0
        %829 = vmatpush1.msra.mxu0 %v800
        %830 = vmatprep.subr.mxu0 0.0
        %831 = vmatpush1.msra.mxu0 %v799
        %832 = vmatprep.subr.mxu0 0.0
        %833 = vmatpush1.msra.mxu0 %v798
        %834 = vmatprep.subr.mxu0 0.0
        %835 = vmatpush1.msra.mxu0 %v797
        %836 = vmatprep.subr.mxu0 0.0
        %837 = vmatpush1.msra.mxu0 %v796
        %838 = vmatprep.subr.mxu0 0.0
        %839 = vmatpush1.msra.mxu0 %v795
        %840 = vmatprep.subr.mxu0 0.0
        %841 = vmatpush1.msra.mxu0 %v794
        %842 = vmatprep.subr.mxu0 0.0
        %843 = vmatpush2.msra.mxu0 0.0
        %844 = vmatprep.subr.mxu0 0.0
        %845 = vmatpush2.msra.mxu0 0.0
        %846 = vmatprep.subr.mxu0 0.0
        %847 = vmatpush2.msra.mxu0 0.0
        %848 = vmatprep.subr.mxu0 0.0
        %849 = vmatpush2.msra.mxu0 0.0
        %850 = vmatprep.subr.mxu0 0.0
        %851 = vmatpush2.msra.mxu0 0.0
        %852 = vmatprep.subr.mxu0 0.0
        %853 = vmatpush2.msra.mxu0 0.0
        %854 = vmatprep.subr.mxu0 0.0
        %855 = vmatpush2.msra.mxu0 0.0
        %856 = vmatprep.subr.mxu0 0.0
        %857 = vmatpush2.msra.mxu0 0.0
        %858 = vmatprep.subr.mxu0 0.0
        %859 = vmatpush2.msra.mxu0 0.0
        %860 = vmatprep.subr.mxu0 0.0
        %861 = vmatpush2.msra.mxu0 0.0
        %862 = vmatprep.subr.mxu0 0.0
        %863 = vmatpush2.msra.mxu0 0.0
        %864 = vmatprep.subr.mxu0 0.0
        %865 = vmatpush2.msra.mxu0 0.0
        %866 = vmatprep.subr.mxu0 0.0
        %867 = vmatpush2.msra.mxu0 0.0
        %868 = vmatprep.subr.mxu0 0.0
        %869 = vmatpush2.msra.mxu0 0.0
        %870 = vmatprep.subr.mxu0 0.0
        %871 = vmatpush2.msra.mxu0 0.0
        %872 = vmatprep.subr.mxu0 0.0
        %873 = vmatpush2.msra.mxu0 0.0
        %874 = vmatprep.mubr.f32.mxu0 0.0
        %875 = vmatmul.mubr.f32.gmra.mxu0 %v792
        %v876 = vpop.f32.mrf.mxu0
        %v877 = vadd.f32 0.0, %v876
        %v878 = vpop.f32.mrf.mxu0
        %879 = vmatprep.mubr.f32.mxu0 0.0
        %880 = vmatmul.mubr.f32.gmra.mxu0 %v793
        %v881 = vpop.f32.mrf.mxu0
        %v882 = vadd.f32 0.0, %v881
        %v883 = vpop.f32.mrf.mxu0
        %884 = vdwg.mxu0
        %885 = vmatprep.subr.mxu0 0.0
        %886 = vmatpush1.msra.mxu0 %v791
        %887 = vmatprep.subr.mxu0 0.0
        %888 = vmatpush1.msra.mxu0 %v790
        %889 = vmatprep.subr.mxu0 0.0
        %890 = vmatpush1.msra.mxu0 %v789
        %891 = vmatprep.subr.mxu0 0.0
        %892 = vmatpush1.msra.mxu0 %v788
        %893 = vmatprep.subr.mxu0 0.0
        %894 = vmatpush1.msra.mxu0 %v787
        %895 = vmatprep.subr.mxu0 0.0
        %896 = vmatpush1.msra.mxu0 %v786
        %897 = vmatprep.subr.mxu0 0.0
        %898 = vmatpush1.msra.mxu0 %v785
        %899 = vmatprep.subr.mxu0 0.0
        %900 = vmatpush1.msra.mxu0 %v784
        %901 = vmatprep.subr.mxu0 0.0
        %902 = vmatpush1.msra.mxu0 %v783
        %903 = vmatprep.subr.mxu0 0.0
        %904 = vmatpush1.msra.mxu0 %v782
        %905 = vmatprep.subr.mxu0 0.0
        %906 = vmatpush1.msra.mxu0 %v781
        %907 = vmatprep.subr.mxu0 0.0
        %908 = vmatpush1.msra.mxu0 %v780
        %909 = vmatprep.subr.mxu0 0.0
        %910 = vmatpush1.msra.mxu0 %v779
        %911 = vmatprep.subr.mxu0 0.0
        %912 = vmatpush1.msra.mxu0 %v778
        %913 = vmatprep.subr.mxu0 0.0
        %914 = vmatpush1.msra.mxu0 %v777
        %915 = vmatprep.subr.mxu0 0.0
        %916 = vmatpush1.msra.mxu0 %v776
        %917 = vmatprep.subr.mxu0 0.0
        %918 = vmatpush2.msra.mxu0 0.0
        %919 = vmatprep.subr.mxu0 0.0
        %920 = vmatpush2.msra.mxu0 0.0
        %921 = vmatprep.subr.mxu0 0.0
        %922 = vmatpush2.msra.mxu0 0.0
        %923 = vmatprep.subr.mxu0 0.0
        %924 = vmatpush2.msra.mxu0 0.0
        %925 = vmatprep.subr.mxu0 0.0
        %926 = vmatpush2.msra.mxu0 0.0
        %927 = vmatprep.subr.mxu0 0.0
        %928 = vmatpush2.msra.mxu0 0.0
        %929 = vmatprep.subr.mxu0 0.0
        %930 = vmatpush2.msra.mxu0 0.0
        %931 = vmatprep.subr.mxu0 0.0
        %932 = vmatpush2.msra.mxu0 0.0
        %933 = vmatprep.subr.mxu0 0.0
        %934 = vmatpush2.msra.mxu0 0.0
        %935 = vmatprep.subr.mxu0 0.0
        %936 = vmatpush2.msra.mxu0 0.0
        %937 = vmatprep.subr.mxu0 0.0
        %938 = vmatpush2.msra.mxu0 0.0
        %939 = vmatprep.subr.mxu0 0.0
        %940 = vmatpush2.msra.mxu0 0.0
        %941 = vmatprep.subr.mxu0 0.0
        %942 = vmatpush2.msra.mxu0 0.0
        %943 = vmatprep.subr.mxu0 0.0
        %944 = vmatpush2.msra.mxu0 0.0
        %945 = vmatprep.subr.mxu0 0.0
        %946 = vmatpush2.msra.mxu0 0.0
        %947 = vmatprep.subr.mxu0 0.0
        %948 = vmatpush2.msra.mxu0 0.0
        %949 = vmatprep.mubr.f32.mxu0 0.0
        %950 = vmatmul.mubr.f32.gmra.mxu0 %v774
        %v951 = vpop.f32.mrf.mxu0
        %v952 = vadd.f32 %v877, %v951
        %v953 = vpop.f32.mrf.mxu0
        %954 = vmatprep.mubr.f32.mxu0 0.0
        %955 = vmatmul.mubr.f32.gmra.mxu0 %v775
        %v956 = vpop.f32.mrf.mxu0
        %v957 = vadd.f32 %v882, %v956
        %v958 = vpop.f32.mrf.mxu0
        %959 = vdwg.mxu0
        %vm960 = vcmp.ge.f32.partialorder %v952, 0.0
        %vm961 = vcmp.ge.f32.partialorder %v957, 0.0
        %v962 = vmul.f32 %v952, 0.2
        %v963 = vmul.f32 %v957, 0.2
        %v964 = vsel %vm960, %v952, %v962
        %v965 = vsel %vm961, %v957, %v963
        %966 = vmatprep.subr.mxu0 0.0
        %967 = vmatpush1.msra.mxu0 %v436
        %968 = vmatprep.subr.mxu0 0.0
        %969 = vmatpush1.msra.mxu0 %v435
        %970 = vmatprep.subr.mxu0 0.0
        %971 = vmatpush1.msra.mxu0 %v434
        %972 = vmatprep.subr.mxu0 0.0
        %973 = vmatpush1.msra.mxu0 %v433
        %974 = vmatprep.subr.mxu0 0.0
        %975 = vmatpush1.msra.mxu0 %v432
        %976 = vmatprep.subr.mxu0 0.0
        %977 = vmatpush1.msra.mxu0 %v431
        %978 = vmatprep.subr.mxu0 0.0
        %979 = vmatpush1.msra.mxu0 %v430
        %980 = vmatprep.subr.mxu0 0.0
        %981 = vmatpush1.msra.mxu0 %v429
        %982 = vmatprep.subr.mxu0 0.0
        %983 = vmatpush1.msra.mxu0 %v428
        %984 = vmatprep.subr.mxu0 0.0
        %985 = vmatpush1.msra.mxu0 %v427
        %986 = vmatprep.subr.mxu0 0.0
        %987 = vmatpush1.msra.mxu0 %v426
        %988 = vmatprep.subr.mxu0 0.0
        %989 = vmatpush1.msra.mxu0 %v425
        %990 = vmatprep.subr.mxu0 0.0
        %991 = vmatpush1.msra.mxu0 %v424
        %992 = vmatprep.subr.mxu0 0.0
        %993 = vmatpush1.msra.mxu0 %v423
        %994 = vmatprep.subr.mxu0 0.0
        %995 = vmatpush1.msra.mxu0 %v422
        %996 = vmatprep.subr.mxu0 0.0
        %997 = vmatpush1.msra.mxu0 %v421
        %998 = vmatprep.subr.mxu0 0.0
        %999 = vmatpush2.msra.mxu0 0.0
        %1000 = vmatprep.subr.mxu0 0.0
        %1001 = vmatpush2.msra.mxu0 0.0
        %1002 = vmatprep.subr.mxu0 0.0
        %1003 = vmatpush2.msra.mxu0 0.0
        %1004 = vmatprep.subr.mxu0 0.0
        %1005 = vmatpush2.msra.mxu0 0.0
        %1006 = vmatprep.subr.mxu0 0.0
        %1007 = vmatpush2.msra.mxu0 0.0
        %1008 = vmatprep.subr.mxu0 0.0
        %1009 = vmatpush2.msra.mxu0 0.0
        %1010 = vmatprep.subr.mxu0 0.0
        %1011 = vmatpush2.msra.mxu0 0.0
        %1012 = vmatprep.subr.mxu0 0.0
        %1013 = vmatpush2.msra.mxu0 0.0
        %1014 = vmatprep.subr.mxu0 0.0
        %1015 = vmatpush2.msra.mxu0 0.0
        %1016 = vmatprep.subr.mxu0 0.0
        %1017 = vmatpush2.msra.mxu0 0.0
        %1018 = vmatprep.subr.mxu0 0.0
        %1019 = vmatpush2.msra.mxu0 0.0
        %1020 = vmatprep.subr.mxu0 0.0
        %1021 = vmatpush2.msra.mxu0 0.0
        %1022 = vmatprep.subr.mxu0 0.0
        %1023 = vmatpush2.msra.mxu0 0.0
        %1024 = vmatprep.subr.mxu0 0.0
        %1025 = vmatpush2.msra.mxu0 0.0
        %1026 = vmatprep.subr.mxu0 0.0
        %1027 = vmatpush2.msra.mxu0 0.0
        %1028 = vmatprep.subr.mxu0 0.0
        %1029 = vmatpush2.msra.mxu0 0.0
        %1030 = vmatprep.mubr.f32.mxu0 0.0
        %1031 = vmatmul.mubr.f32.gmra.mxu0 %v964
        %v1032 = vpop.f32.mrf.mxu0
        %v1033 = vadd.f32 0.0, %v1032
        %v1034 = vpop.f32.mrf.mxu0
        %1035 = vmatprep.mubr.f32.mxu0 0.0
        %1036 = vmatmul.mubr.f32.gmra.mxu0 %v965
        %v1037 = vpop.f32.mrf.mxu0
        %v1038 = vadd.f32 0.0, %v1037
        %v1039 = vpop.f32.mrf.mxu0
        %1040 = vdwg.mxu0
        %vm1041 = vcmp.gt.f32.partialorder %v419, 0.5
        %vm1042 = vcmp.gt.f32.partialorder %v420, 0.5
        %v1043 = vsel %vm1041, %v1033, -1e+30
        %v1044 = vsel %vm1042, %v1038, -1e+30
        %v1045 = vmax.f32 %v1043, %v1044
        %v1046 = vrot.slane %v1045, 4
        %v1047 = vmax.f32 %v1045, %v1046
        %v1048 = vrot.slane %v1047, 2
        %v1049 = vmax.f32 %v1047, %v1048
        %v1050 = vrot.slane %v1049, 1
        %v1051 = vmax.f32 %v1049, %v1050
        %v1052 = vmul.f32 %v419, %v1051
        %v1053 = vmul.f32 %v420, %v1051
        %1054 = vmatprep.subr.mxu0 0.0
        %1055 = vmatpush1.msra.mxu0 %v452
        %1056 = vmatprep.subr.mxu0 0.0
        %1057 = vmatpush1.msra.mxu0 %v451
        %1058 = vmatprep.subr.mxu0 0.0
        %1059 = vmatpush1.msra.mxu0 %v450
        %1060 = vmatprep.subr.mxu0 0.0
        %1061 = vmatpush1.msra.mxu0 %v449
        %1062 = vmatprep.subr.mxu0 0.0
        %1063 = vmatpush1.msra.mxu0 %v448
        %1064 = vmatprep.subr.mxu0 0.0
        %1065 = vmatpush1.msra.mxu0 %v447
        %1066 = vmatprep.subr.mxu0 0.0
        %1067 = vmatpush1.msra.mxu0 %v446
        %1068 = vmatprep.subr.mxu0 0.0
        %1069 = vmatpush1.msra.mxu0 %v445
        %1070 = vmatprep.subr.mxu0 0.0
        %1071 = vmatpush1.msra.mxu0 %v444
        %1072 = vmatprep.subr.mxu0 0.0
        %1073 = vmatpush1.msra.mxu0 %v443
        %1074 = vmatprep.subr.mxu0 0.0
        %1075 = vmatpush1.msra.mxu0 %v442
        %1076 = vmatprep.subr.mxu0 0.0
        %1077 = vmatpush1.msra.mxu0 %v441
        %1078 = vmatprep.subr.mxu0 0.0
        %1079 = vmatpush1.msra.mxu0 %v440
        %1080 = vmatprep.subr.mxu0 0.0
        %1081 = vmatpush1.msra.mxu0 %v439
        %1082 = vmatprep.subr.mxu0 0.0
        %1083 = vmatpush1.msra.mxu0 %v438
        %1084 = vmatprep.subr.mxu0 0.0
        %1085 = vmatpush1.msra.mxu0 %v437
        %1086 = vmatprep.subr.mxu0 0.0
        %1087 = vmatpush2.msra.mxu0 0.0
        %1088 = vmatprep.subr.mxu0 0.0
        %1089 = vmatpush2.msra.mxu0 0.0
        %1090 = vmatprep.subr.mxu0 0.0
        %1091 = vmatpush2.msra.mxu0 0.0
        %1092 = vmatprep.subr.mxu0 0.0
        %1093 = vmatpush2.msra.mxu0 0.0
        %1094 = vmatprep.subr.mxu0 0.0
        %1095 = vmatpush2.msra.mxu0 0.0
        %1096 = vmatprep.subr.mxu0 0.0
        %1097 = vmatpush2.msra.mxu0 0.0
        %1098 = vmatprep.subr.mxu0 0.0
        %1099 = vmatpush2.msra.mxu0 0.0
        %1100 = vmatprep.subr.mxu0 0.0
        %1101 = vmatpush2.msra.mxu0 0.0
        %1102 = vmatprep.subr.mxu0 0.0
        %1103 = vmatpush2.msra.mxu0 0.0
        %1104 = vmatprep.subr.mxu0 0.0
        %1105 = vmatpush2.msra.mxu0 0.0
        %1106 = vmatprep.subr.mxu0 0.0
        %1107 = vmatpush2.msra.mxu0 0.0
        %1108 = vmatprep.subr.mxu0 0.0
        %1109 = vmatpush2.msra.mxu0 0.0
        %1110 = vmatprep.subr.mxu0 0.0
        %1111 = vmatpush2.msra.mxu0 0.0
        %1112 = vmatprep.subr.mxu0 0.0
        %1113 = vmatpush2.msra.mxu0 0.0
        %1114 = vmatprep.subr.mxu0 0.0
        %1115 = vmatpush2.msra.mxu0 0.0
        %1116 = vmatprep.subr.mxu0 0.0
        %1117 = vmatpush2.msra.mxu0 0.0
        %1118 = vmatprep.mubr.f32.mxu0 0.0
        %1119 = vmatmul.mubr.f32.gmra.mxu0 %v1052
        %v1120 = vpop.f32.mrf.mxu0
        %v1121 = vadd.f32 0.0, %v1120
        %v1122 = vpop.f32.mrf.mxu0
        %1123 = vmatprep.mubr.f32.mxu0 0.0
        %1124 = vmatmul.mubr.f32.gmra.mxu0 %v1053
        %v1125 = vpop.f32.mrf.mxu0
        %v1126 = vadd.f32 0.0, %v1125
        %v1127 = vpop.f32.mrf.mxu0
        %1128 = vdwg.mxu0
        %v1129 = vsub.f32 %v964, %v1121
        %v1130 = vsub.f32 %v965, %v1126
        %v1131 = vmul.f32 %v1129, 1.442695
        %v1132 = vpow.pop %v1131
        %v1133 = vmul.f32 %v1130, 1.442695
        %v1134 = vpow.pop %v1133
        %vm1135 = vcmask 130048
        %v1137 = vsel %vm1135, %v418, 0
        %1139 = vmatprep.subr.mxu0 0.0
        %1140 = vmatpush1.msra.mxu0 0.0
        %1141 = vmatprep.subr.mxu0 0.0
        %1142 = vmatpush1.msra.mxu0 0.0
        %1143 = vmatprep.subr.mxu0 0.0
        %1144 = vmatpush1.msra.mxu0 0.0
        %1145 = vmatprep.subr.mxu0 0.0
        %1146 = vmatpush1.msra.mxu0 0.0
        %1147 = vmatprep.subr.mxu0 0.0
        %1148 = vmatpush1.msra.mxu0 0.0
        %1149 = vmatprep.subr.mxu0 0.0
        %1150 = vmatpush1.msra.mxu0 0.0
        %1151 = vmatprep.subr.mxu0 0.0
        %1152 = vmatpush1.msra.mxu0 0.0
        %1153 = vmatprep.subr.mxu0 0.0
        %1154 = vmatpush1.msra.mxu0 0.0
        %1155 = vmatprep.subr.mxu0 0.0
        %1156 = vmatpush1.msra.mxu0 0.0
        %1157 = vmatprep.subr.mxu0 0.0
        %1158 = vmatpush1.msra.mxu0 0.0
        %1159 = vmatprep.subr.mxu0 0.0
        %1160 = vmatpush1.msra.mxu0 0.0
        %1161 = vmatprep.subr.mxu0 0.0
        %1162 = vmatpush1.msra.mxu0 0.0
        %1163 = vmatprep.subr.mxu0 0.0
        %1164 = vmatpush1.msra.mxu0 0.0
        %1165 = vmatprep.subr.mxu0 0.0
        %1166 = vmatpush1.msra.mxu0 0.0
        %1167 = vmatprep.subr.mxu0 0.0
        %1168 = vmatpush1.msra.mxu0 %v1134
        %1169 = vmatprep.subr.mxu0 0.0
        %1170 = vmatpush1.msra.mxu0 %v1132
        %1171 = vmatprep.subr.mxu0 0.0
        %1172 = vmatpush2.msra.mxu0 0.0
        %1173 = vmatprep.subr.mxu0 0.0
        %1174 = vmatpush2.msra.mxu0 0.0
        %1175 = vmatprep.subr.mxu0 0.0
        %1176 = vmatpush2.msra.mxu0 0.0
        %1177 = vmatprep.subr.mxu0 0.0
        %1178 = vmatpush2.msra.mxu0 0.0
        %1179 = vmatprep.subr.mxu0 0.0
        %1180 = vmatpush2.msra.mxu0 0.0
        %1181 = vmatprep.subr.mxu0 0.0
        %1182 = vmatpush2.msra.mxu0 0.0
        %1183 = vmatprep.subr.mxu0 0.0
        %1184 = vmatpush2.msra.mxu0 0.0
        %1185 = vmatprep.subr.mxu0 0.0
        %1186 = vmatpush2.msra.mxu0 0.0
        %1187 = vmatprep.subr.mxu0 0.0
        %1188 = vmatpush2.msra.mxu0 0.0
        %1189 = vmatprep.subr.mxu0 0.0
        %1190 = vmatpush2.msra.mxu0 0.0
        %1191 = vmatprep.subr.mxu0 0.0
        %1192 = vmatpush2.msra.mxu0 0.0
        %1193 = vmatprep.subr.mxu0 0.0
        %1194 = vmatpush2.msra.mxu0 0.0
        %1195 = vmatprep.subr.mxu0 0.0
        %1196 = vmatpush2.msra.mxu0 0.0
        %1197 = vmatprep.subr.mxu0 0.0
        %1198 = vmatpush2.msra.mxu0 0.0
        %1199 = vmatprep.subr.mxu0 0.0
        %1200 = vmatpush2.msra.mxu0 0.0
        %1201 = vmatprep.subr.mxu0 0.0
        %1202 = vmatpush2.msra.mxu0 0.0
        %1203 = vmatprep.mubr.f32.mxu0 0.0
        %1204 = vmatmul.mubr.f32.gmra.mxu0 %v1137
        %v1205 = vpop.f32.mrf.mxu0
        %v1206 = vadd.f32 0.0, %v1205
        %v1207 = vpop.f32.mrf.mxu0
        %1208 = vdwg.mxu0
        %v1209 = vmax.f32 %v1206, 1e-12
        %v1210 = vrcp.pop %v1209
        %1211 = vmatprep.subr.mxu0 0.0
        %1212 = vmatpush1.msra.mxu0 0.0
        %1213 = vmatprep.subr.mxu0 0.0
        %1214 = vmatpush1.msra.mxu0 0.0
        %1215 = vmatprep.subr.mxu0 0.0
        %1216 = vmatpush1.msra.mxu0 0.0
        %1217 = vmatprep.subr.mxu0 0.0
        %1218 = vmatpush1.msra.mxu0 0.0
        %1219 = vmatprep.subr.mxu0 0.0
        %1220 = vmatpush1.msra.mxu0 0.0
        %1221 = vmatprep.subr.mxu0 0.0
        %1222 = vmatpush1.msra.mxu0 0.0
        %1223 = vmatprep.subr.mxu0 0.0
        %1224 = vmatpush1.msra.mxu0 0.0
        %1225 = vmatprep.subr.mxu0 0.0
        %1226 = vmatpush1.msra.mxu0 0.0
        %1227 = vmatprep.subr.mxu0 0.0
        %1228 = vmatpush1.msra.mxu0 0.0
        %1229 = vmatprep.subr.mxu0 0.0
        %1230 = vmatpush1.msra.mxu0 0.0
        %1231 = vmatprep.subr.mxu0 0.0
        %1232 = vmatpush1.msra.mxu0 0.0
        %1233 = vmatprep.subr.mxu0 0.0
        %1234 = vmatpush1.msra.mxu0 0.0
        %1235 = vmatprep.subr.mxu0 0.0
        %1236 = vmatpush1.msra.mxu0 0.0
        %1237 = vmatprep.subr.mxu0 0.0
        %1238 = vmatpush1.msra.mxu0 0.0
        %1239 = vmatprep.subr.mxu0 0.0
        %1240 = vmatpush1.msra.mxu0 0.0
        %1241 = vmatprep.subr.mxu0 0.0
        %1242 = vmatpush1.msra.mxu0 %v1210
        %1243 = vmatprep.subr.mxu0 0.0
        %1244 = vmatpush2.msra.mxu0 0.0
        %1245 = vmatprep.subr.mxu0 0.0
        %1246 = vmatpush2.msra.mxu0 0.0
        %1247 = vmatprep.subr.mxu0 0.0
        %1248 = vmatpush2.msra.mxu0 0.0
        %1249 = vmatprep.subr.mxu0 0.0
        %1250 = vmatpush2.msra.mxu0 0.0
        %1251 = vmatprep.subr.mxu0 0.0
        %1252 = vmatpush2.msra.mxu0 0.0
        %1253 = vmatprep.subr.mxu0 0.0
        %1254 = vmatpush2.msra.mxu0 0.0
        %1255 = vmatprep.subr.mxu0 0.0
        %1256 = vmatpush2.msra.mxu0 0.0
        %1257 = vmatprep.subr.mxu0 0.0
        %1258 = vmatpush2.msra.mxu0 0.0
        %1259 = vmatprep.subr.mxu0 0.0
        %1260 = vmatpush2.msra.mxu0 0.0
        %1261 = vmatprep.subr.mxu0 0.0
        %1262 = vmatpush2.msra.mxu0 0.0
        %1263 = vmatprep.subr.mxu0 0.0
        %1264 = vmatpush2.msra.mxu0 0.0
        %1265 = vmatprep.subr.mxu0 0.0
        %1266 = vmatpush2.msra.mxu0 0.0
        %1267 = vmatprep.subr.mxu0 0.0
        %1268 = vmatpush2.msra.mxu0 0.0
        %1269 = vmatprep.subr.mxu0 0.0
        %1270 = vmatpush2.msra.mxu0 0.0
        %1271 = vmatprep.subr.mxu0 0.0
        %1272 = vmatpush2.msra.mxu0 0.0
        %1273 = vmatprep.subr.mxu0 0.0
        %1274 = vmatpush2.msra.mxu0 0.0
        %1275 = vmatprep.mubr.f32.mxu0 0.0
        %1276 = vmatmul.mubr.f32.gmra.mxu0 %v684
        %v1277 = vpop.f32.mrf.mxu0
        %v1278 = vadd.f32 0.0, %v1277
        %v1279 = vpop.f32.mrf.mxu0
        %1280 = vmatprep.mubr.f32.mxu0 0.0
        %1281 = vmatmul.mubr.f32.gmra.mxu0 %v687
        %v1282 = vpop.f32.mrf.mxu0
        %v1283 = vadd.f32 0.0, %v1282
        %v1284 = vpop.f32.mrf.mxu0
        %1285 = vdwg.mxu0
        %v1286 = vmul.f32 %v1132, %v1278
        %v1287 = vmul.f32 %v1134, %v1283
        %1288 = vmatprep.subr.mxu0 0.0
        %1289 = vmatpush1.msra.mxu0 %v468
        %1290 = vmatprep.subr.mxu0 0.0
        %1291 = vmatpush1.msra.mxu0 %v467
        %1292 = vmatprep.subr.mxu0 0.0
        %1293 = vmatpush1.msra.mxu0 %v466
        %1294 = vmatprep.subr.mxu0 0.0
        %1295 = vmatpush1.msra.mxu0 %v465
        %1296 = vmatprep.subr.mxu0 0.0
        %1297 = vmatpush1.msra.mxu0 %v464
        %1298 = vmatprep.subr.mxu0 0.0
        %1299 = vmatpush1.msra.mxu0 %v463
        %1300 = vmatprep.subr.mxu0 0.0
        %1301 = vmatpush1.msra.mxu0 %v462
        %1302 = vmatprep.subr.mxu0 0.0
        %1303 = vmatpush1.msra.mxu0 %v461
        %1304 = vmatprep.subr.mxu0 0.0
        %1305 = vmatpush1.msra.mxu0 %v460
        %1306 = vmatprep.subr.mxu0 0.0
        %1307 = vmatpush1.msra.mxu0 %v459
        %1308 = vmatprep.subr.mxu0 0.0
        %1309 = vmatpush1.msra.mxu0 %v458
        %1310 = vmatprep.subr.mxu0 0.0
        %1311 = vmatpush1.msra.mxu0 %v457
        %1312 = vmatprep.subr.mxu0 0.0
        %1313 = vmatpush1.msra.mxu0 %v456
        %1314 = vmatprep.subr.mxu0 0.0
        %1315 = vmatpush1.msra.mxu0 %v455
        %1316 = vmatprep.subr.mxu0 0.0
        %1317 = vmatpush1.msra.mxu0 %v454
        %1318 = vmatprep.subr.mxu0 0.0
        %1319 = vmatpush1.msra.mxu0 %v453
        %1320 = vmatprep.subr.mxu0 0.0
        %1321 = vmatpush2.msra.mxu0 0.0
        %1322 = vmatprep.subr.mxu0 0.0
        %1323 = vmatpush2.msra.mxu0 0.0
        %1324 = vmatprep.subr.mxu0 0.0
        %1325 = vmatpush2.msra.mxu0 0.0
        %1326 = vmatprep.subr.mxu0 0.0
        %1327 = vmatpush2.msra.mxu0 0.0
        %1328 = vmatprep.subr.mxu0 0.0
        %1329 = vmatpush2.msra.mxu0 0.0
        %1330 = vmatprep.subr.mxu0 0.0
        %1331 = vmatpush2.msra.mxu0 0.0
        %1332 = vmatprep.subr.mxu0 0.0
        %1333 = vmatpush2.msra.mxu0 0.0
        %1334 = vmatprep.subr.mxu0 0.0
        %1335 = vmatpush2.msra.mxu0 0.0
        %1336 = vmatprep.subr.mxu0 0.0
        %1337 = vmatpush2.msra.mxu0 0.0
        %1338 = vmatprep.subr.mxu0 0.0
        %1339 = vmatpush2.msra.mxu0 0.0
        %1340 = vmatprep.subr.mxu0 0.0
        %1341 = vmatpush2.msra.mxu0 0.0
        %1342 = vmatprep.subr.mxu0 0.0
        %1343 = vmatpush2.msra.mxu0 0.0
        %1344 = vmatprep.subr.mxu0 0.0
        %1345 = vmatpush2.msra.mxu0 0.0
        %1346 = vmatprep.subr.mxu0 0.0
        %1347 = vmatpush2.msra.mxu0 0.0
        %1348 = vmatprep.subr.mxu0 0.0
        %1349 = vmatpush2.msra.mxu0 0.0
        %1350 = vmatprep.subr.mxu0 0.0
        %1351 = vmatpush2.msra.mxu0 0.0
        %1352 = vmatprep.mubr.f32.mxu0 0.0
        %1353 = vmatmul.mubr.f32.gmra.mxu0 %v1286
        %v1354 = vpop.f32.mrf.mxu0
        %v1355 = vadd.f32 0.0, %v1354
        %v1356 = vpop.f32.mrf.mxu0
        %1357 = vmatprep.mubr.f32.mxu0 0.0
        %1358 = vmatmul.mubr.f32.gmra.mxu0 %v1287
        %v1359 = vpop.f32.mrf.mxu0
        %v1360 = vadd.f32 0.0, %v1359
        %v1361 = vpop.f32.mrf.mxu0
        %1362 = vdwg.mxu0
        %1363 = vmatprep.subr.mxu0 0.0
        %1364 = vmatpush1.msra.mxu0 %v484
        %1365 = vmatprep.subr.mxu0 0.0
        %1366 = vmatpush1.msra.mxu0 %v483
        %1367 = vmatprep.subr.mxu0 0.0
        %1368 = vmatpush1.msra.mxu0 %v482
        %1369 = vmatprep.subr.mxu0 0.0
        %1370 = vmatpush1.msra.mxu0 %v481
        %1371 = vmatprep.subr.mxu0 0.0
        %1372 = vmatpush1.msra.mxu0 %v480
        %1373 = vmatprep.subr.mxu0 0.0
        %1374 = vmatpush1.msra.mxu0 %v479
        %1375 = vmatprep.subr.mxu0 0.0
        %1376 = vmatpush1.msra.mxu0 %v478
        %1377 = vmatprep.subr.mxu0 0.0
        %1378 = vmatpush1.msra.mxu0 %v477
        %1379 = vmatprep.subr.mxu0 0.0
        %1380 = vmatpush1.msra.mxu0 %v476
        %1381 = vmatprep.subr.mxu0 0.0
        %1382 = vmatpush1.msra.mxu0 %v475
        %1383 = vmatprep.subr.mxu0 0.0
        %1384 = vmatpush1.msra.mxu0 %v474
        %1385 = vmatprep.subr.mxu0 0.0
        %1386 = vmatpush1.msra.mxu0 %v473
        %1387 = vmatprep.subr.mxu0 0.0
        %1388 = vmatpush1.msra.mxu0 %v472
        %1389 = vmatprep.subr.mxu0 0.0
        %1390 = vmatpush1.msra.mxu0 %v471
        %1391 = vmatprep.subr.mxu0 0.0
        %1392 = vmatpush1.msra.mxu0 %v470
        %1393 = vmatprep.subr.mxu0 0.0
        %1394 = vmatpush1.msra.mxu0 %v469
        %1395 = vmatprep.subr.mxu0 0.0
        %1396 = vmatpush2.msra.mxu0 0.0
        %1397 = vmatprep.subr.mxu0 0.0
        %1398 = vmatpush2.msra.mxu0 0.0
        %1399 = vmatprep.subr.mxu0 0.0
        %1400 = vmatpush2.msra.mxu0 0.0
        %1401 = vmatprep.subr.mxu0 0.0
        %1402 = vmatpush2.msra.mxu0 0.0
        %1403 = vmatprep.subr.mxu0 0.0
        %1404 = vmatpush2.msra.mxu0 0.0
        %1405 = vmatprep.subr.mxu0 0.0
        %1406 = vmatpush2.msra.mxu0 0.0
        %1407 = vmatprep.subr.mxu0 0.0
        %1408 = vmatpush2.msra.mxu0 0.0
        %1409 = vmatprep.subr.mxu0 0.0
        %1410 = vmatpush2.msra.mxu0 0.0
        %1411 = vmatprep.subr.mxu0 0.0
        %1412 = vmatpush2.msra.mxu0 0.0
        %1413 = vmatprep.subr.mxu0 0.0
        %1414 = vmatpush2.msra.mxu0 0.0
        %1415 = vmatprep.subr.mxu0 0.0
        %1416 = vmatpush2.msra.mxu0 0.0
        %1417 = vmatprep.subr.mxu0 0.0
        %1418 = vmatpush2.msra.mxu0 0.0
        %1419 = vmatprep.subr.mxu0 0.0
        %1420 = vmatpush2.msra.mxu0 0.0
        %1421 = vmatprep.subr.mxu0 0.0
        %1422 = vmatpush2.msra.mxu0 0.0
        %1423 = vmatprep.subr.mxu0 0.0
        %1424 = vmatpush2.msra.mxu0 0.0
        %1425 = vmatprep.subr.mxu0 0.0
        %1426 = vmatpush2.msra.mxu0 0.0
        %1427 = vmatprep.mubr.f32.mxu0 0.0
        %1428 = vmatmul.mubr.f32.gmra.mxu0 %v1286
        %v1429 = vpop.f32.mrf.mxu0
        %v1430 = vadd.f32 0.0, %v1429
        %v1431 = vpop.f32.mrf.mxu0
        %1432 = vmatprep.mubr.f32.mxu0 0.0
        %1433 = vmatmul.mubr.f32.gmra.mxu0 %v1287
        %v1434 = vpop.f32.mrf.mxu0
        %v1435 = vadd.f32 0.0, %v1434
        %v1436 = vpop.f32.mrf.mxu0
        %1437 = vdwg.mxu0
        %v1438 = vmul.f32 %v1355, %v756
        %v1439 = vmul.f32 %v1360, %v761
        %v1440 = vmul.f32 %v1430, %v666
        %v1441 = vmul.f32 %v1435, %v671
        %1442 = vmatprep.subr.mxu0 0.0
        %1443 = vmatpush1.msra.mxu0 0.0
        %1444 = vmatprep.subr.mxu0 0.0
        %1445 = vmatpush1.msra.mxu0 0.0
        %1446 = vmatprep.subr.mxu0 0.0
        %1447 = vmatpush1.msra.mxu0 0.0
        %1448 = vmatprep.subr.mxu0 0.0
        %1449 = vmatpush1.msra.mxu0 0.0
        %1450 = vmatprep.subr.mxu0 0.0
        %1451 = vmatpush1.msra.mxu0 0.0
        %1452 = vmatprep.subr.mxu0 0.0
        %1453 = vmatpush1.msra.mxu0 0.0
        %1454 = vmatprep.subr.mxu0 0.0
        %1455 = vmatpush1.msra.mxu0 0.0
        %1456 = vmatprep.subr.mxu0 0.0
        %1457 = vmatpush1.msra.mxu0 0.0
        %1458 = vmatprep.subr.mxu0 0.0
        %1459 = vmatpush1.msra.mxu0 0.0
        %1460 = vmatprep.subr.mxu0 0.0
        %1461 = vmatpush1.msra.mxu0 0.0
        %1462 = vmatprep.subr.mxu0 0.0
        %1463 = vmatpush1.msra.mxu0 0.0
        %1464 = vmatprep.subr.mxu0 0.0
        %1465 = vmatpush1.msra.mxu0 0.0
        %1466 = vmatprep.subr.mxu0 0.0
        %1467 = vmatpush1.msra.mxu0 0.0
        %1468 = vmatprep.subr.mxu0 0.0
        %1469 = vmatpush1.msra.mxu0 0.0
        %1470 = vmatprep.subr.mxu0 0.0
        %1471 = vmatpush1.msra.mxu0 %v1439
        %1472 = vmatprep.subr.mxu0 0.0
        %1473 = vmatpush1.msra.mxu0 %v1438
        %1474 = vmatprep.subr.mxu0 0.0
        %1475 = vmatpush2.msra.mxu0 0.0
        %1476 = vmatprep.subr.mxu0 0.0
        %1477 = vmatpush2.msra.mxu0 0.0
        %1478 = vmatprep.subr.mxu0 0.0
        %1479 = vmatpush2.msra.mxu0 0.0
        %1480 = vmatprep.subr.mxu0 0.0
        %1481 = vmatpush2.msra.mxu0 0.0
        %1482 = vmatprep.subr.mxu0 0.0
        %1483 = vmatpush2.msra.mxu0 0.0
        %1484 = vmatprep.subr.mxu0 0.0
        %1485 = vmatpush2.msra.mxu0 0.0
        %1486 = vmatprep.subr.mxu0 0.0
        %1487 = vmatpush2.msra.mxu0 0.0
        %1488 = vmatprep.subr.mxu0 0.0
        %1489 = vmatpush2.msra.mxu0 0.0
        %1490 = vmatprep.subr.mxu0 0.0
        %1491 = vmatpush2.msra.mxu0 0.0
        %1492 = vmatprep.subr.mxu0 0.0
        %1493 = vmatpush2.msra.mxu0 0.0
        %1494 = vmatprep.subr.mxu0 0.0
        %1495 = vmatpush2.msra.mxu0 0.0
        %1496 = vmatprep.subr.mxu0 0.0
        %1497 = vmatpush2.msra.mxu0 0.0
        %1498 = vmatprep.subr.mxu0 0.0
        %1499 = vmatpush2.msra.mxu0 0.0
        %1500 = vmatprep.subr.mxu0 0.0
        %1501 = vmatpush2.msra.mxu0 0.0
        %1502 = vmatprep.subr.mxu0 0.0
        %1503 = vmatpush2.msra.mxu0 0.0
        %1504 = vmatprep.subr.mxu0 0.0
        %1505 = vmatpush2.msra.mxu0 0.0
        %1506 = vmatprep.mubr.f32.mxu0 0.0
        %1507 = vmatmul.mubr.f32.gmra.mxu0 %v1137
        %v1508 = vpop.f32.mrf.mxu0
        %v1509 = vadd.f32 %v576, %v1508
        %v1510 = vpop.f32.mrf.mxu0
        %1511 = vdwg.mxu0
        %v1512 = vmax.f32 %v1509, 0.0
        %1513 = vmatprep.subr.mxu0 0.0
        %1514 = vmatpush1.msra.mxu0 0.0
        %1515 = vmatprep.subr.mxu0 0.0
        %1516 = vmatpush1.msra.mxu0 0.0
        %1517 = vmatprep.subr.mxu0 0.0
        %1518 = vmatpush1.msra.mxu0 0.0
        %1519 = vmatprep.subr.mxu0 0.0
        %1520 = vmatpush1.msra.mxu0 0.0
        %1521 = vmatprep.subr.mxu0 0.0
        %1522 = vmatpush1.msra.mxu0 0.0
        %1523 = vmatprep.subr.mxu0 0.0
        %1524 = vmatpush1.msra.mxu0 0.0
        %1525 = vmatprep.subr.mxu0 0.0
        %1526 = vmatpush1.msra.mxu0 0.0
        %1527 = vmatprep.subr.mxu0 0.0
        %1528 = vmatpush1.msra.mxu0 0.0
        %1529 = vmatprep.subr.mxu0 0.0
        %1530 = vmatpush1.msra.mxu0 0.0
        %1531 = vmatprep.subr.mxu0 0.0
        %1532 = vmatpush1.msra.mxu0 0.0
        %1533 = vmatprep.subr.mxu0 0.0
        %1534 = vmatpush1.msra.mxu0 0.0
        %1535 = vmatprep.subr.mxu0 0.0
        %1536 = vmatpush1.msra.mxu0 0.0
        %1537 = vmatprep.subr.mxu0 0.0
        %1538 = vmatpush1.msra.mxu0 0.0
        %1539 = vmatprep.subr.mxu0 0.0
        %1540 = vmatpush1.msra.mxu0 0.0
        %1541 = vmatprep.subr.mxu0 0.0
        %1542 = vmatpush1.msra.mxu0 %v1441
        %1543 = vmatprep.subr.mxu0 0.0
        %1544 = vmatpush1.msra.mxu0 %v1440
        %1545 = vmatprep.subr.mxu0 0.0
        %1546 = vmatpush2.msra.mxu0 0.0
        %1547 = vmatprep.subr.mxu0 0.0
        %1548 = vmatpush2.msra.mxu0 0.0
        %1549 = vmatprep.subr.mxu0 0.0
        %1550 = vmatpush2.msra.mxu0 0.0
        %1551 = vmatprep.subr.mxu0 0.0
        %1552 = vmatpush2.msra.mxu0 0.0
        %1553 = vmatprep.subr.mxu0 0.0
        %1554 = vmatpush2.msra.mxu0 0.0
        %1555 = vmatprep.subr.mxu0 0.0
        %1556 = vmatpush2.msra.mxu0 0.0
        %1557 = vmatprep.subr.mxu0 0.0
        %1558 = vmatpush2.msra.mxu0 0.0
        %1559 = vmatprep.subr.mxu0 0.0
        %1560 = vmatpush2.msra.mxu0 0.0
        %1561 = vmatprep.subr.mxu0 0.0
        %1562 = vmatpush2.msra.mxu0 0.0
        %1563 = vmatprep.subr.mxu0 0.0
        %1564 = vmatpush2.msra.mxu0 0.0
        %1565 = vmatprep.subr.mxu0 0.0
        %1566 = vmatpush2.msra.mxu0 0.0
        %1567 = vmatprep.subr.mxu0 0.0
        %1568 = vmatpush2.msra.mxu0 0.0
        %1569 = vmatprep.subr.mxu0 0.0
        %1570 = vmatpush2.msra.mxu0 0.0
        %1571 = vmatprep.subr.mxu0 0.0
        %1572 = vmatpush2.msra.mxu0 0.0
        %1573 = vmatprep.subr.mxu0 0.0
        %1574 = vmatpush2.msra.mxu0 0.0
        %1575 = vmatprep.subr.mxu0 0.0
        %1576 = vmatpush2.msra.mxu0 0.0
        %1577 = vmatprep.mubr.f32.mxu0 0.0
        %1578 = vmatmul.mubr.f32.gmra.mxu0 %v1137
        %v1579 = vpop.f32.mrf.mxu0
        %v1580 = vadd.f32 %v576, %v1579
        %v1581 = vpop.f32.mrf.mxu0
        %1582 = vdwg.mxu0
        %v1583 = vmax.f32 %v1580, 0.0
        %v1584 = vld [vmem:[#allocation2 + $0x400] sm:$0xff]
        %v1585 = vld [vmem:[#allocation2 + $0x408] sm:$0xff]
        %v1586 = vld [vmem:[#allocation2 + $0x410] sm:$0xff]
        %v1587 = vld [vmem:[#allocation2 + $0x418] sm:$0xff]
        %v1588 = vld [vmem:[#allocation2 + $0x420] sm:$0xff]
        %v1589 = vld [vmem:[#allocation2 + $0x428] sm:$0xff]
        %v1590 = vld [vmem:[#allocation2 + $0x430] sm:$0xff]
        %v1591 = vld [vmem:[#allocation2 + $0x438] sm:$0xff]
        %v1592 = vld [vmem:[#allocation2 + $0x440] sm:$0xff]
        %v1593 = vld [vmem:[#allocation2 + $0x448] sm:$0xff]
        %v1594 = vld [vmem:[#allocation2 + $0x450] sm:$0xff]
        %v1595 = vld [vmem:[#allocation2 + $0x458] sm:$0xff]
        %v1596 = vld [vmem:[#allocation2 + $0x460] sm:$0xff]
        %v1597 = vld [vmem:[#allocation2 + $0x468] sm:$0xff]
        %v1598 = vld [vmem:[#allocation2 + $0x470] sm:$0xff]
        %v1599 = vld [vmem:[#allocation2 + $0x478] sm:$0xff]
        %v1600 = vld [vmem:[#allocation2 + $0x480] sm:$0xff]
        %v1601 = vld [vmem:[#allocation2 + $0x488] sm:$0xff]
        %v1602 = vld [vmem:[#allocation2 + $0x490] sm:$0xff]
        %v1603 = vld [vmem:[#allocation2 + $0x498] sm:$0xff]
        %v1604 = vld [vmem:[#allocation2 + $0x4a0] sm:$0xff]
        %v1605 = vld [vmem:[#allocation2 + $0x4a8] sm:$0xff]
        %v1606 = vld [vmem:[#allocation2 + $0x4b0] sm:$0xff]
        %v1607 = vld [vmem:[#allocation2 + $0x4b8] sm:$0xff]
        %v1608 = vld [vmem:[#allocation2 + $0x4c0] sm:$0xff]
        %v1609 = vld [vmem:[#allocation2 + $0x4c8] sm:$0xff]
        %v1610 = vld [vmem:[#allocation2 + $0x4d0] sm:$0xff]
        %v1611 = vld [vmem:[#allocation2 + $0x4d8] sm:$0xff]
        %v1612 = vld [vmem:[#allocation2 + $0x4e0] sm:$0xff]
        %v1613 = vld [vmem:[#allocation2 + $0x4e8] sm:$0xff]
        %v1614 = vld [vmem:[#allocation2 + $0x4f0] sm:$0xff]
        %v1615 = vld [vmem:[#allocation2 + $0x4f8] sm:$0xff]
        %1616 = vmatprep.subr.mxu0 0.0
        %1617 = vmatpush1.msra.mxu0 %v1615
        %1618 = vmatprep.subr.mxu0 0.0
        %1619 = vmatpush1.msra.mxu0 %v1614
        %1620 = vmatprep.subr.mxu0 0.0
        %1621 = vmatpush1.msra.mxu0 %v1613
        %1622 = vmatprep.subr.mxu0 0.0
        %1623 = vmatpush1.msra.mxu0 %v1612
        %1624 = vmatprep.subr.mxu0 0.0
        %1625 = vmatpush1.msra.mxu0 %v1611
        %1626 = vmatprep.subr.mxu0 0.0
        %1627 = vmatpush1.msra.mxu0 %v1610
        %1628 = vmatprep.subr.mxu0 0.0
        %1629 = vmatpush1.msra.mxu0 %v1609
        %1630 = vmatprep.subr.mxu0 0.0
        %1631 = vmatpush1.msra.mxu0 %v1608
        %1632 = vmatprep.subr.mxu0 0.0
        %1633 = vmatpush1.msra.mxu0 %v1607
        %1634 = vmatprep.subr.mxu0 0.0
        %1635 = vmatpush1.msra.mxu0 %v1606
        %1636 = vmatprep.subr.mxu0 0.0
        %1637 = vmatpush1.msra.mxu0 %v1605
        %1638 = vmatprep.subr.mxu0 0.0
        %1639 = vmatpush1.msra.mxu0 %v1604
        %1640 = vmatprep.subr.mxu0 0.0
        %1641 = vmatpush1.msra.mxu0 %v1603
        %1642 = vmatprep.subr.mxu0 0.0
        %1643 = vmatpush1.msra.mxu0 %v1602
        %1644 = vmatprep.subr.mxu0 0.0
        %1645 = vmatpush1.msra.mxu0 %v1601
        %1646 = vmatprep.subr.mxu0 0.0
        %1647 = vmatpush1.msra.mxu0 %v1600
        %1648 = vmatprep.subr.mxu0 0.0
        %1649 = vmatpush2.msra.mxu0 0.0
        %1650 = vmatprep.subr.mxu0 0.0
        %1651 = vmatpush2.msra.mxu0 0.0
        %1652 = vmatprep.subr.mxu0 0.0
        %1653 = vmatpush2.msra.mxu0 0.0
        %1654 = vmatprep.subr.mxu0 0.0
        %1655 = vmatpush2.msra.mxu0 0.0
        %1656 = vmatprep.subr.mxu0 0.0
        %1657 = vmatpush2.msra.mxu0 0.0
        %1658 = vmatprep.subr.mxu0 0.0
        %1659 = vmatpush2.msra.mxu0 0.0
        %1660 = vmatprep.subr.mxu0 0.0
        %1661 = vmatpush2.msra.mxu0 0.0
        %1662 = vmatprep.subr.mxu0 0.0
        %1663 = vmatpush2.msra.mxu0 0.0
        %1664 = vmatprep.subr.mxu0 0.0
        %1665 = vmatpush2.msra.mxu0 0.0
        %1666 = vmatprep.subr.mxu0 0.0
        %1667 = vmatpush2.msra.mxu0 0.0
        %1668 = vmatprep.subr.mxu0 0.0
        %1669 = vmatpush2.msra.mxu0 0.0
        %1670 = vmatprep.subr.mxu0 0.0
        %1671 = vmatpush2.msra.mxu0 0.0
        %1672 = vmatprep.subr.mxu0 0.0
        %1673 = vmatpush2.msra.mxu0 0.0
        %1674 = vmatprep.subr.mxu0 0.0
        %1675 = vmatpush2.msra.mxu0 0.0
        %1676 = vmatprep.subr.mxu0 0.0
        %1677 = vmatpush2.msra.mxu0 0.0
        %1678 = vmatprep.subr.mxu0 0.0
        %1679 = vmatpush2.msra.mxu0 0.0
        %1680 = vmatprep.mubr.f32.mxu0 0.0
        %1681 = vmatmul.mubr.f32.gmra.mxu0 %v1583
        %v1682 = vpop.f32.mrf.mxu0
        %v1683 = vadd.f32 0.0, %v1682
        %v1684 = vpop.f32.mrf.mxu0
        %1685 = vdwg.mxu0
        %1686 = vmatprep.subr.mxu0 0.0
        %1687 = vmatpush1.msra.mxu0 %v1599
        %1688 = vmatprep.subr.mxu0 0.0
        %1689 = vmatpush1.msra.mxu0 %v1598
        %1690 = vmatprep.subr.mxu0 0.0
        %1691 = vmatpush1.msra.mxu0 %v1597
        %1692 = vmatprep.subr.mxu0 0.0
        %1693 = vmatpush1.msra.mxu0 %v1596
        %1694 = vmatprep.subr.mxu0 0.0
        %1695 = vmatpush1.msra.mxu0 %v1595
        %1696 = vmatprep.subr.mxu0 0.0
        %1697 = vmatpush1.msra.mxu0 %v1594
        %1698 = vmatprep.subr.mxu0 0.0
        %1699 = vmatpush1.msra.mxu0 %v1593
        %1700 = vmatprep.subr.mxu0 0.0
        %1701 = vmatpush1.msra.mxu0 %v1592
        %1702 = vmatprep.subr.mxu0 0.0
        %1703 = vmatpush1.msra.mxu0 %v1591
        %1704 = vmatprep.subr.mxu0 0.0
        %1705 = vmatpush1.msra.mxu0 %v1590
        %1706 = vmatprep.subr.mxu0 0.0
        %1707 = vmatpush1.msra.mxu0 %v1589
        %1708 = vmatprep.subr.mxu0 0.0
        %1709 = vmatpush1.msra.mxu0 %v1588
        %1710 = vmatprep.subr.mxu0 0.0
        %1711 = vmatpush1.msra.mxu0 %v1587
        %1712 = vmatprep.subr.mxu0 0.0
        %1713 = vmatpush1.msra.mxu0 %v1586
        %1714 = vmatprep.subr.mxu0 0.0
        %1715 = vmatpush1.msra.mxu0 %v1585
        %1716 = vmatprep.subr.mxu0 0.0
        %1717 = vmatpush1.msra.mxu0 %v1584
        %1718 = vmatprep.subr.mxu0 0.0
        %1719 = vmatpush2.msra.mxu0 0.0
        %1720 = vmatprep.subr.mxu0 0.0
        %1721 = vmatpush2.msra.mxu0 0.0
        %1722 = vmatprep.subr.mxu0 0.0
        %1723 = vmatpush2.msra.mxu0 0.0
        %1724 = vmatprep.subr.mxu0 0.0
        %1725 = vmatpush2.msra.mxu0 0.0
        %1726 = vmatprep.subr.mxu0 0.0
        %1727 = vmatpush2.msra.mxu0 0.0
        %1728 = vmatprep.subr.mxu0 0.0
        %1729 = vmatpush2.msra.mxu0 0.0
        %1730 = vmatprep.subr.mxu0 0.0
        %1731 = vmatpush2.msra.mxu0 0.0
        %1732 = vmatprep.subr.mxu0 0.0
        %1733 = vmatpush2.msra.mxu0 0.0
        %1734 = vmatprep.subr.mxu0 0.0
        %1735 = vmatpush2.msra.mxu0 0.0
        %1736 = vmatprep.subr.mxu0 0.0
        %1737 = vmatpush2.msra.mxu0 0.0
        %1738 = vmatprep.subr.mxu0 0.0
        %1739 = vmatpush2.msra.mxu0 0.0
        %1740 = vmatprep.subr.mxu0 0.0
        %1741 = vmatpush2.msra.mxu0 0.0
        %1742 = vmatprep.subr.mxu0 0.0
        %1743 = vmatpush2.msra.mxu0 0.0
        %1744 = vmatprep.subr.mxu0 0.0
        %1745 = vmatpush2.msra.mxu0 0.0
        %1746 = vmatprep.subr.mxu0 0.0
        %1747 = vmatpush2.msra.mxu0 0.0
        %1748 = vmatprep.subr.mxu0 0.0
        %1749 = vmatpush2.msra.mxu0 0.0
        %1750 = vmatprep.mubr.f32.mxu0 0.0
        %1751 = vmatmul.mubr.f32.gmra.mxu0 %v1512
        %v1752 = vpop.f32.mrf.mxu0
        %v1753 = vadd.f32 %v1683, %v1752
        %v1754 = vpop.f32.mrf.mxu0
        %1755 = vdwg.mxu0
        %v1756 = vlaneseq
        %v1757 = vshrl.u32 %v1756, 7
        %v1758 = vsub.s32 2, %v1757
        %v1759 = vrot.slane %v488, %v1758
        %v1760 = vadd.f32 %v1753, %v1759
        %v1761 = vmax.f32 %v1760, 0.0
        %v1762 = vld [vmem:[#allocation2 + $0x500] sm:$0xff]
        %v1763 = vld [vmem:[#allocation2 + $0x508] sm:$0xff]
        %v1764 = vld [vmem:[#allocation2 + $0x510] sm:$0xff]
        %v1765 = vld [vmem:[#allocation2 + $0x518] sm:$0xff]
        %v1766 = vld [vmem:[#allocation2 + $0x520] sm:$0xff]
        %v1767 = vld [vmem:[#allocation2 + $0x528] sm:$0xff]
        %v1768 = vld [vmem:[#allocation2 + $0x530] sm:$0xff]
        %v1769 = vld [vmem:[#allocation2 + $0x538] sm:$0xff]
        %v1770 = vld [vmem:[#allocation2 + $0x540] sm:$0xff]
        %v1771 = vld [vmem:[#allocation2 + $0x548] sm:$0xff]
        %v1772 = vld [vmem:[#allocation2 + $0x550] sm:$0xff]
        %v1773 = vld [vmem:[#allocation2 + $0x558] sm:$0xff]
        %v1774 = vld [vmem:[#allocation2 + $0x560] sm:$0xff]
        %v1775 = vld [vmem:[#allocation2 + $0x568] sm:$0xff]
        %v1776 = vld [vmem:[#allocation2 + $0x570] sm:$0xff]
        %v1777 = vld [vmem:[#allocation2 + $0x578] sm:$0xff]
        %1778 = vmatprep.subr.mxu0 0.0
        %1779 = vmatpush1.msra.mxu0 %v1777
        %1780 = vmatprep.subr.mxu0 0.0
        %1781 = vmatpush1.msra.mxu0 %v1776
        %1782 = vmatprep.subr.mxu0 0.0
        %1783 = vmatpush1.msra.mxu0 %v1775
        %1784 = vmatprep.subr.mxu0 0.0
        %1785 = vmatpush1.msra.mxu0 %v1774
        %1786 = vmatprep.subr.mxu0 0.0
        %1787 = vmatpush1.msra.mxu0 %v1773
        %1788 = vmatprep.subr.mxu0 0.0
        %1789 = vmatpush1.msra.mxu0 %v1772
        %1790 = vmatprep.subr.mxu0 0.0
        %1791 = vmatpush1.msra.mxu0 %v1771
        %1792 = vmatprep.subr.mxu0 0.0
        %1793 = vmatpush1.msra.mxu0 %v1770
        %1794 = vmatprep.subr.mxu0 0.0
        %1795 = vmatpush1.msra.mxu0 %v1769
        %1796 = vmatprep.subr.mxu0 0.0
        %1797 = vmatpush1.msra.mxu0 %v1768
        %1798 = vmatprep.subr.mxu0 0.0
        %1799 = vmatpush1.msra.mxu0 %v1767
        %1800 = vmatprep.subr.mxu0 0.0
        %1801 = vmatpush1.msra.mxu0 %v1766
        %1802 = vmatprep.subr.mxu0 0.0
        %1803 = vmatpush1.msra.mxu0 %v1765
        %1804 = vmatprep.subr.mxu0 0.0
        %1805 = vmatpush1.msra.mxu0 %v1764
        %1806 = vmatprep.subr.mxu0 0.0
        %1807 = vmatpush1.msra.mxu0 %v1763
        %1808 = vmatprep.subr.mxu0 0.0
        %1809 = vmatpush1.msra.mxu0 %v1762
        %1810 = vmatprep.subr.mxu0 0.0
        %1811 = vmatpush2.msra.mxu0 0.0
        %1812 = vmatprep.subr.mxu0 0.0
        %1813 = vmatpush2.msra.mxu0 0.0
        %1814 = vmatprep.subr.mxu0 0.0
        %1815 = vmatpush2.msra.mxu0 0.0
        %1816 = vmatprep.subr.mxu0 0.0
        %1817 = vmatpush2.msra.mxu0 0.0
        %1818 = vmatprep.subr.mxu0 0.0
        %1819 = vmatpush2.msra.mxu0 0.0
        %1820 = vmatprep.subr.mxu0 0.0
        %1821 = vmatpush2.msra.mxu0 0.0
        %1822 = vmatprep.subr.mxu0 0.0
        %1823 = vmatpush2.msra.mxu0 0.0
        %1824 = vmatprep.subr.mxu0 0.0
        %1825 = vmatpush2.msra.mxu0 0.0
        %1826 = vmatprep.subr.mxu0 0.0
        %1827 = vmatpush2.msra.mxu0 0.0
        %1828 = vmatprep.subr.mxu0 0.0
        %1829 = vmatpush2.msra.mxu0 0.0
        %1830 = vmatprep.subr.mxu0 0.0
        %1831 = vmatpush2.msra.mxu0 0.0
        %1832 = vmatprep.subr.mxu0 0.0
        %1833 = vmatpush2.msra.mxu0 0.0
        %1834 = vmatprep.subr.mxu0 0.0
        %1835 = vmatpush2.msra.mxu0 0.0
        %1836 = vmatprep.subr.mxu0 0.0
        %1837 = vmatpush2.msra.mxu0 0.0
        %1838 = vmatprep.subr.mxu0 0.0
        %1839 = vmatpush2.msra.mxu0 0.0
        %1840 = vmatprep.subr.mxu0 0.0
        %1841 = vmatpush2.msra.mxu0 0.0
        %1842 = vmatprep.mubr.f32.mxu0 0.0
        %1843 = vmatmul.mubr.f32.gmra.mxu0 %v576
        %v1844 = vpop.f32.mrf.mxu0
        %v1845 = vadd.f32 0.0, %v1844
        %v1846 = vpop.f32.mrf.mxu0
        %1847 = vdwg.mxu0
        %v1848 = vld [vmem:[#allocation2 + $0x580] sm:$0xff]
        %v1849 = vld [vmem:[#allocation2 + $0x588] sm:$0xff]
        %v1850 = vld [vmem:[#allocation2 + $0x590] sm:$0xff]
        %v1851 = vld [vmem:[#allocation2 + $0x598] sm:$0xff]
        %v1852 = vld [vmem:[#allocation2 + $0x5a0] sm:$0xff]
        %v1853 = vld [vmem:[#allocation2 + $0x5a8] sm:$0xff]
        %v1854 = vld [vmem:[#allocation2 + $0x5b0] sm:$0xff]
        %v1855 = vld [vmem:[#allocation2 + $0x5b8] sm:$0xff]
        %v1856 = vld [vmem:[#allocation2 + $0x5c0] sm:$0xff]
        %v1857 = vld [vmem:[#allocation2 + $0x5c8] sm:$0xff]
        %v1858 = vld [vmem:[#allocation2 + $0x5d0] sm:$0xff]
        %v1859 = vld [vmem:[#allocation2 + $0x5d8] sm:$0xff]
        %v1860 = vld [vmem:[#allocation2 + $0x5e0] sm:$0xff]
        %v1861 = vld [vmem:[#allocation2 + $0x5e8] sm:$0xff]
        %v1862 = vld [vmem:[#allocation2 + $0x5f0] sm:$0xff]
        %v1863 = vld [vmem:[#allocation2 + $0x5f8] sm:$0xff]
        %v1864 = vld [vmem:[#allocation2 + $0x600] sm:$0xff]
        %v1865 = vld [vmem:[#allocation2 + $0x608] sm:$0xff]
        %v1866 = vld [vmem:[#allocation2 + $0x610] sm:$0xff]
        %v1867 = vld [vmem:[#allocation2 + $0x618] sm:$0xff]
        %v1868 = vld [vmem:[#allocation2 + $0x620] sm:$0xff]
        %v1869 = vld [vmem:[#allocation2 + $0x628] sm:$0xff]
        %v1870 = vld [vmem:[#allocation2 + $0x630] sm:$0xff]
        %v1871 = vld [vmem:[#allocation2 + $0x638] sm:$0xff]
        %v1872 = vld [vmem:[#allocation2 + $0x640] sm:$0xff]
        %v1873 = vld [vmem:[#allocation2 + $0x648] sm:$0xff]
        %v1874 = vld [vmem:[#allocation2 + $0x650] sm:$0xff]
        %v1875 = vld [vmem:[#allocation2 + $0x658] sm:$0xff]
        %v1876 = vld [vmem:[#allocation2 + $0x660] sm:$0xff]
        %v1877 = vld [vmem:[#allocation2 + $0x668] sm:$0xff]
        %v1878 = vld [vmem:[#allocation2 + $0x670] sm:$0xff]
        %v1879 = vld [vmem:[#allocation2 + $0x678] sm:$0xff]
        %1880 = vmatprep.subr.mxu0 0.0
        %1881 = vmatpush1.msra.mxu0 %v1879
        %1882 = vmatprep.subr.mxu0 0.0
        %1883 = vmatpush1.msra.mxu0 %v1878
        %1884 = vmatprep.subr.mxu0 0.0
        %1885 = vmatpush1.msra.mxu0 %v1877
        %1886 = vmatprep.subr.mxu0 0.0
        %1887 = vmatpush1.msra.mxu0 %v1876
        %1888 = vmatprep.subr.mxu0 0.0
        %1889 = vmatpush1.msra.mxu0 %v1875
        %1890 = vmatprep.subr.mxu0 0.0
        %1891 = vmatpush1.msra.mxu0 %v1874
        %1892 = vmatprep.subr.mxu0 0.0
        %1893 = vmatpush1.msra.mxu0 %v1873
        %1894 = vmatprep.subr.mxu0 0.0
        %1895 = vmatpush1.msra.mxu0 %v1872
        %1896 = vmatprep.subr.mxu0 0.0
        %1897 = vmatpush1.msra.mxu0 %v1871
        %1898 = vmatprep.subr.mxu0 0.0
        %1899 = vmatpush1.msra.mxu0 %v1870
        %1900 = vmatprep.subr.mxu0 0.0
        %1901 = vmatpush1.msra.mxu0 %v1869
        %1902 = vmatprep.subr.mxu0 0.0
        %1903 = vmatpush1.msra.mxu0 %v1868
        %1904 = vmatprep.subr.mxu0 0.0
        %1905 = vmatpush1.msra.mxu0 %v1867
        %1906 = vmatprep.subr.mxu0 0.0
        %1907 = vmatpush1.msra.mxu0 %v1866
        %1908 = vmatprep.subr.mxu0 0.0
        %1909 = vmatpush1.msra.mxu0 %v1865
        %1910 = vmatprep.subr.mxu0 0.0
        %1911 = vmatpush1.msra.mxu0 %v1864
        %1912 = vmatprep.subr.mxu0 0.0
        %1913 = vmatpush2.msra.mxu0 0.0
        %1914 = vmatprep.subr.mxu0 0.0
        %1915 = vmatpush2.msra.mxu0 0.0
        %1916 = vmatprep.subr.mxu0 0.0
        %1917 = vmatpush2.msra.mxu0 0.0
        %1918 = vmatprep.subr.mxu0 0.0
        %1919 = vmatpush2.msra.mxu0 0.0
        %1920 = vmatprep.subr.mxu0 0.0
        %1921 = vmatpush2.msra.mxu0 0.0
        %1922 = vmatprep.subr.mxu0 0.0
        %1923 = vmatpush2.msra.mxu0 0.0
        %1924 = vmatprep.subr.mxu0 0.0
        %1925 = vmatpush2.msra.mxu0 0.0
        %1926 = vmatprep.subr.mxu0 0.0
        %1927 = vmatpush2.msra.mxu0 0.0
        %1928 = vmatprep.subr.mxu0 0.0
        %1929 = vmatpush2.msra.mxu0 0.0
        %1930 = vmatprep.subr.mxu0 0.0
        %1931 = vmatpush2.msra.mxu0 0.0
        %1932 = vmatprep.subr.mxu0 0.0
        %1933 = vmatpush2.msra.mxu0 0.0
        %1934 = vmatprep.subr.mxu0 0.0
        %1935 = vmatpush2.msra.mxu0 0.0
        %1936 = vmatprep.subr.mxu0 0.0
        %1937 = vmatpush2.msra.mxu0 0.0
        %1938 = vmatprep.subr.mxu0 0.0
        %1939 = vmatpush2.msra.mxu0 0.0
        %1940 = vmatprep.subr.mxu0 0.0
        %1941 = vmatpush2.msra.mxu0 0.0
        %1942 = vmatprep.subr.mxu0 0.0
        %1943 = vmatpush2.msra.mxu0 0.0
        %1944 = vmatprep.mubr.f32.mxu0 0.0
        %1945 = vmatmul.mubr.f32.gmra.mxu0 %v1845
        %v1946 = vpop.f32.mrf.mxu0
        %v1947 = vadd.f32 0.0, %v1946
        %v1948 = vpop.f32.mrf.mxu0
        %1949 = vdwg.mxu0
        %1950 = vmatprep.subr.mxu0 0.0
        %1951 = vmatpush1.msra.mxu0 %v1863
        %1952 = vmatprep.subr.mxu0 0.0
        %1953 = vmatpush1.msra.mxu0 %v1862
        %1954 = vmatprep.subr.mxu0 0.0
        %1955 = vmatpush1.msra.mxu0 %v1861
        %1956 = vmatprep.subr.mxu0 0.0
        %1957 = vmatpush1.msra.mxu0 %v1860
        %1958 = vmatprep.subr.mxu0 0.0
        %1959 = vmatpush1.msra.mxu0 %v1859
        %1960 = vmatprep.subr.mxu0 0.0
        %1961 = vmatpush1.msra.mxu0 %v1858
        %1962 = vmatprep.subr.mxu0 0.0
        %1963 = vmatpush1.msra.mxu0 %v1857
        %1964 = vmatprep.subr.mxu0 0.0
        %1965 = vmatpush1.msra.mxu0 %v1856
        %1966 = vmatprep.subr.mxu0 0.0
        %1967 = vmatpush1.msra.mxu0 %v1855
        %1968 = vmatprep.subr.mxu0 0.0
        %1969 = vmatpush1.msra.mxu0 %v1854
        %1970 = vmatprep.subr.mxu0 0.0
        %1971 = vmatpush1.msra.mxu0 %v1853
        %1972 = vmatprep.subr.mxu0 0.0
        %1973 = vmatpush1.msra.mxu0 %v1852
        %1974 = vmatprep.subr.mxu0 0.0
        %1975 = vmatpush1.msra.mxu0 %v1851
        %1976 = vmatprep.subr.mxu0 0.0
        %1977 = vmatpush1.msra.mxu0 %v1850
        %1978 = vmatprep.subr.mxu0 0.0
        %1979 = vmatpush1.msra.mxu0 %v1849
        %1980 = vmatprep.subr.mxu0 0.0
        %1981 = vmatpush1.msra.mxu0 %v1848
        %1982 = vmatprep.subr.mxu0 0.0
        %1983 = vmatpush2.msra.mxu0 0.0
        %1984 = vmatprep.subr.mxu0 0.0
        %1985 = vmatpush2.msra.mxu0 0.0
        %1986 = vmatprep.subr.mxu0 0.0
        %1987 = vmatpush2.msra.mxu0 0.0
        %1988 = vmatprep.subr.mxu0 0.0
        %1989 = vmatpush2.msra.mxu0 0.0
        %1990 = vmatprep.subr.mxu0 0.0
        %1991 = vmatpush2.msra.mxu0 0.0
        %1992 = vmatprep.subr.mxu0 0.0
        %1993 = vmatpush2.msra.mxu0 0.0
        %1994 = vmatprep.subr.mxu0 0.0
        %1995 = vmatpush2.msra.mxu0 0.0
        %1996 = vmatprep.subr.mxu0 0.0
        %1997 = vmatpush2.msra.mxu0 0.0
        %1998 = vmatprep.subr.mxu0 0.0
        %1999 = vmatpush2.msra.mxu0 0.0
        %2000 = vmatprep.subr.mxu0 0.0
        %2001 = vmatpush2.msra.mxu0 0.0
        %2002 = vmatprep.subr.mxu0 0.0
        %2003 = vmatpush2.msra.mxu0 0.0
        %2004 = vmatprep.subr.mxu0 0.0
        %2005 = vmatpush2.msra.mxu0 0.0
        %2006 = vmatprep.subr.mxu0 0.0
        %2007 = vmatpush2.msra.mxu0 0.0
        %2008 = vmatprep.subr.mxu0 0.0
        %2009 = vmatpush2.msra.mxu0 0.0
        %2010 = vmatprep.subr.mxu0 0.0
        %2011 = vmatpush2.msra.mxu0 0.0
        %2012 = vmatprep.subr.mxu0 0.0
        %2013 = vmatpush2.msra.mxu0 0.0
        %2014 = vmatprep.mubr.f32.mxu0 0.0
        %2015 = vmatmul.mubr.f32.gmra.mxu0 %v1761
        %v2016 = vpop.f32.mrf.mxu0
        %v2017 = vadd.f32 %v1947, %v2016
        %v2018 = vpop.f32.mrf.mxu0
        %2019 = vdwg.mxu0
        %v2020 = vlaneseq
        %v2021 = vshrl.u32 %v2020, 7
        %v2022 = vsub.s32 3, %v2021
        %v2023 = vrot.slane %v488, %v2022
        %v2024 = vadd.f32 %v2017, %v2023
        %v2025 = vxor.u32 %v2024, 2147483648
        %v2026 = vmul.f32 %v2025, 1.442695
        %v2027 = vpow.pop %v2026
        %v2028 = vadd.f32 %v2027, 1.0
        %v2029 = vrcp.pop %v2028
        %v2030 = vmul.f32 1.0, %v2029
        %v2031 = vld [vmem:[#allocation2 + $0x680] sm:$0xff]
        %v2032 = vld [vmem:[#allocation2 + $0x688] sm:$0xff]
        %v2033 = vld [vmem:[#allocation2 + $0x690] sm:$0xff]
        %v2034 = vld [vmem:[#allocation2 + $0x698] sm:$0xff]
        %v2035 = vld [vmem:[#allocation2 + $0x6a0] sm:$0xff]
        %v2036 = vld [vmem:[#allocation2 + $0x6a8] sm:$0xff]
        %v2037 = vld [vmem:[#allocation2 + $0x6b0] sm:$0xff]
        %v2038 = vld [vmem:[#allocation2 + $0x6b8] sm:$0xff]
        %v2039 = vld [vmem:[#allocation2 + $0x6c0] sm:$0xff]
        %v2040 = vld [vmem:[#allocation2 + $0x6c8] sm:$0xff]
        %v2041 = vld [vmem:[#allocation2 + $0x6d0] sm:$0xff]
        %v2042 = vld [vmem:[#allocation2 + $0x6d8] sm:$0xff]
        %v2043 = vld [vmem:[#allocation2 + $0x6e0] sm:$0xff]
        %v2044 = vld [vmem:[#allocation2 + $0x6e8] sm:$0xff]
        %v2045 = vld [vmem:[#allocation2 + $0x6f0] sm:$0xff]
        %v2046 = vld [vmem:[#allocation2 + $0x6f8] sm:$0xff]
        %v2047 = vld [vmem:[#allocation2 + $0x700] sm:$0xff]
        %v2048 = vld [vmem:[#allocation2 + $0x708] sm:$0xff]
        %v2049 = vld [vmem:[#allocation2 + $0x710] sm:$0xff]
        %v2050 = vld [vmem:[#allocation2 + $0x718] sm:$0xff]
        %v2051 = vld [vmem:[#allocation2 + $0x720] sm:$0xff]
        %v2052 = vld [vmem:[#allocation2 + $0x728] sm:$0xff]
        %v2053 = vld [vmem:[#allocation2 + $0x730] sm:$0xff]
        %v2054 = vld [vmem:[#allocation2 + $0x738] sm:$0xff]
        %v2055 = vld [vmem:[#allocation2 + $0x740] sm:$0xff]
        %v2056 = vld [vmem:[#allocation2 + $0x748] sm:$0xff]
        %v2057 = vld [vmem:[#allocation2 + $0x750] sm:$0xff]
        %v2058 = vld [vmem:[#allocation2 + $0x758] sm:$0xff]
        %v2059 = vld [vmem:[#allocation2 + $0x760] sm:$0xff]
        %v2060 = vld [vmem:[#allocation2 + $0x768] sm:$0xff]
        %v2061 = vld [vmem:[#allocation2 + $0x770] sm:$0xff]
        %v2062 = vld [vmem:[#allocation2 + $0x778] sm:$0xff]
        %2063 = vmatprep.subr.mxu0 0.0
        %2064 = vmatpush1.msra.mxu0 %v2062
        %2065 = vmatprep.subr.mxu0 0.0
        %2066 = vmatpush1.msra.mxu0 %v2061
        %2067 = vmatprep.subr.mxu0 0.0
        %2068 = vmatpush1.msra.mxu0 %v2060
        %2069 = vmatprep.subr.mxu0 0.0
        %2070 = vmatpush1.msra.mxu0 %v2059
        %2071 = vmatprep.subr.mxu0 0.0
        %2072 = vmatpush1.msra.mxu0 %v2058
        %2073 = vmatprep.subr.mxu0 0.0
        %2074 = vmatpush1.msra.mxu0 %v2057
        %2075 = vmatprep.subr.mxu0 0.0
        %2076 = vmatpush1.msra.mxu0 %v2056
        %2077 = vmatprep.subr.mxu0 0.0
        %2078 = vmatpush1.msra.mxu0 %v2055
        %2079 = vmatprep.subr.mxu0 0.0
        %2080 = vmatpush1.msra.mxu0 %v2054
        %2081 = vmatprep.subr.mxu0 0.0
        %2082 = vmatpush1.msra.mxu0 %v2053
        %2083 = vmatprep.subr.mxu0 0.0
        %2084 = vmatpush1.msra.mxu0 %v2052
        %2085 = vmatprep.subr.mxu0 0.0
        %2086 = vmatpush1.msra.mxu0 %v2051
        %2087 = vmatprep.subr.mxu0 0.0
        %2088 = vmatpush1.msra.mxu0 %v2050
        %2089 = vmatprep.subr.mxu0 0.0
        %2090 = vmatpush1.msra.mxu0 %v2049
        %2091 = vmatprep.subr.mxu0 0.0
        %2092 = vmatpush1.msra.mxu0 %v2048
        %2093 = vmatprep.subr.mxu0 0.0
        %2094 = vmatpush1.msra.mxu0 %v2047
        %2095 = vmatprep.subr.mxu0 0.0
        %2096 = vmatpush2.msra.mxu0 0.0
        %2097 = vmatprep.subr.mxu0 0.0
        %2098 = vmatpush2.msra.mxu0 0.0
        %2099 = vmatprep.subr.mxu0 0.0
        %2100 = vmatpush2.msra.mxu0 0.0
        %2101 = vmatprep.subr.mxu0 0.0
        %2102 = vmatpush2.msra.mxu0 0.0
        %2103 = vmatprep.subr.mxu0 0.0
        %2104 = vmatpush2.msra.mxu0 0.0
        %2105 = vmatprep.subr.mxu0 0.0
        %2106 = vmatpush2.msra.mxu0 0.0
        %2107 = vmatprep.subr.mxu0 0.0
        %2108 = vmatpush2.msra.mxu0 0.0
        %2109 = vmatprep.subr.mxu0 0.0
        %2110 = vmatpush2.msra.mxu0 0.0
        %2111 = vmatprep.subr.mxu0 0.0
        %2112 = vmatpush2.msra.mxu0 0.0
        %2113 = vmatprep.subr.mxu0 0.0
        %2114 = vmatpush2.msra.mxu0 0.0
        %2115 = vmatprep.subr.mxu0 0.0
        %2116 = vmatpush2.msra.mxu0 0.0
        %2117 = vmatprep.subr.mxu0 0.0
        %2118 = vmatpush2.msra.mxu0 0.0
        %2119 = vmatprep.subr.mxu0 0.0
        %2120 = vmatpush2.msra.mxu0 0.0
        %2121 = vmatprep.subr.mxu0 0.0
        %2122 = vmatpush2.msra.mxu0 0.0
        %2123 = vmatprep.subr.mxu0 0.0
        %2124 = vmatpush2.msra.mxu0 0.0
        %2125 = vmatprep.subr.mxu0 0.0
        %2126 = vmatpush2.msra.mxu0 0.0
        %2127 = vmatprep.mubr.f32.mxu0 0.0
        %2128 = vmatmul.mubr.f32.gmra.mxu0 %v1845
        %v2129 = vpop.f32.mrf.mxu0
        %v2130 = vadd.f32 0.0, %v2129
        %v2131 = vpop.f32.mrf.mxu0
        %2132 = vdwg.mxu0
        %2133 = vmatprep.subr.mxu0 0.0
        %2134 = vmatpush1.msra.mxu0 %v2046
        %2135 = vmatprep.subr.mxu0 0.0
        %2136 = vmatpush1.msra.mxu0 %v2045
        %2137 = vmatprep.subr.mxu0 0.0
        %2138 = vmatpush1.msra.mxu0 %v2044
        %2139 = vmatprep.subr.mxu0 0.0
        %2140 = vmatpush1.msra.mxu0 %v2043
        %2141 = vmatprep.subr.mxu0 0.0
        %2142 = vmatpush1.msra.mxu0 %v2042
        %2143 = vmatprep.subr.mxu0 0.0
        %2144 = vmatpush1.msra.mxu0 %v2041
        %2145 = vmatprep.subr.mxu0 0.0
        %2146 = vmatpush1.msra.mxu0 %v2040
        %2147 = vmatprep.subr.mxu0 0.0
        %2148 = vmatpush1.msra.mxu0 %v2039
        %2149 = vmatprep.subr.mxu0 0.0
        %2150 = vmatpush1.msra.mxu0 %v2038
        %2151 = vmatprep.subr.mxu0 0.0
        %2152 = vmatpush1.msra.mxu0 %v2037
        %2153 = vmatprep.subr.mxu0 0.0
        %2154 = vmatpush1.msra.mxu0 %v2036
        %2155 = vmatprep.subr.mxu0 0.0
        %2156 = vmatpush1.msra.mxu0 %v2035
        %2157 = vmatprep.subr.mxu0 0.0
        %2158 = vmatpush1.msra.mxu0 %v2034
        %2159 = vmatprep.subr.mxu0 0.0
        %2160 = vmatpush1.msra.mxu0 %v2033
        %2161 = vmatprep.subr.mxu0 0.0
        %2162 = vmatpush1.msra.mxu0 %v2032
        %2163 = vmatprep.subr.mxu0 0.0
        %2164 = vmatpush1.msra.mxu0 %v2031
        %2165 = vmatprep.subr.mxu0 0.0
        %2166 = vmatpush2.msra.mxu0 0.0
        %2167 = vmatprep.subr.mxu0 0.0
        %2168 = vmatpush2.msra.mxu0 0.0
        %2169 = vmatprep.subr.mxu0 0.0
        %2170 = vmatpush2.msra.mxu0 0.0
        %2171 = vmatprep.subr.mxu0 0.0
        %2172 = vmatpush2.msra.mxu0 0.0
        %2173 = vmatprep.subr.mxu0 0.0
        %2174 = vmatpush2.msra.mxu0 0.0
        %2175 = vmatprep.subr.mxu0 0.0
        %2176 = vmatpush2.msra.mxu0 0.0
        %2177 = vmatprep.subr.mxu0 0.0
        %2178 = vmatpush2.msra.mxu0 0.0
        %2179 = vmatprep.subr.mxu0 0.0
        %2180 = vmatpush2.msra.mxu0 0.0
        %2181 = vmatprep.subr.mxu0 0.0
        %2182 = vmatpush2.msra.mxu0 0.0
        %2183 = vmatprep.subr.mxu0 0.0
        %2184 = vmatpush2.msra.mxu0 0.0
        %2185 = vmatprep.subr.mxu0 0.0
        %2186 = vmatpush2.msra.mxu0 0.0
        %2187 = vmatprep.subr.mxu0 0.0
        %2188 = vmatpush2.msra.mxu0 0.0
        %2189 = vmatprep.subr.mxu0 0.0
        %2190 = vmatpush2.msra.mxu0 0.0
        %2191 = vmatprep.subr.mxu0 0.0
        %2192 = vmatpush2.msra.mxu0 0.0
        %2193 = vmatprep.subr.mxu0 0.0
        %2194 = vmatpush2.msra.mxu0 0.0
        %2195 = vmatprep.subr.mxu0 0.0
        %2196 = vmatpush2.msra.mxu0 0.0
        %2197 = vmatprep.mubr.f32.mxu0 0.0
        %2198 = vmatmul.mubr.f32.gmra.mxu0 %v1761
        %v2199 = vpop.f32.mrf.mxu0
        %v2200 = vadd.f32 %v2130, %v2199
        %v2201 = vpop.f32.mrf.mxu0
        %2202 = vdwg.mxu0
        %v2203 = vlaneseq
        %v2204 = vshrl.u32 %v2203, 7
        %v2205 = vsub.s32 4, %v2204
        %v2206 = vrot.slane %v488, %v2205
        %v2207 = vadd.f32 %v2200, %v2206
        %v2208 = vxor.u32 %v2207, 2147483648
        %v2209 = vmul.f32 %v2208, 1.442695
        %v2210 = vpow.pop %v2209
        %v2211 = vadd.f32 %v2210, 1.0
        %v2212 = vrcp.pop %v2211
        %v2213 = vmul.f32 1.0, %v2212
        %v2214 = vld [vmem:[#allocation2 + $0x780] sm:$0xff]
        %v2215 = vld [vmem:[#allocation2 + $0x788] sm:$0xff]
        %v2216 = vld [vmem:[#allocation2 + $0x790] sm:$0xff]
        %v2217 = vld [vmem:[#allocation2 + $0x798] sm:$0xff]
        %v2218 = vld [vmem:[#allocation2 + $0x7a0] sm:$0xff]
        %v2219 = vld [vmem:[#allocation2 + $0x7a8] sm:$0xff]
        %v2220 = vld [vmem:[#allocation2 + $0x7b0] sm:$0xff]
        %v2221 = vld [vmem:[#allocation2 + $0x7b8] sm:$0xff]
        %v2222 = vld [vmem:[#allocation2 + $0x7c0] sm:$0xff]
        %v2223 = vld [vmem:[#allocation2 + $0x7c8] sm:$0xff]
        %v2224 = vld [vmem:[#allocation2 + $0x7d0] sm:$0xff]
        %v2225 = vld [vmem:[#allocation2 + $0x7d8] sm:$0xff]
        %v2226 = vld [vmem:[#allocation2 + $0x7e0] sm:$0xff]
        %v2227 = vld [vmem:[#allocation2 + $0x7e8] sm:$0xff]
        %v2228 = vld [vmem:[#allocation2 + $0x7f0] sm:$0xff]
        %v2229 = vld [vmem:[#allocation2 + $0x7f8] sm:$0xff]
        %v2230 = vlaneseq
        %v2231 = vshrl.u32 %v2230, 7
        %v2232 = vsub.s32 5, %v2231
        %v2233 = vrot.slane %v488, %v2232
        %2234 = vmatprep.subr.mxu0 0.0
        %2235 = vmatpush1.msra.mxu0 %v2229
        %2236 = vmatprep.subr.mxu0 0.0
        %2237 = vmatpush1.msra.mxu0 %v2228
        %2238 = vmatprep.subr.mxu0 0.0
        %2239 = vmatpush1.msra.mxu0 %v2227
        %2240 = vmatprep.subr.mxu0 0.0
        %2241 = vmatpush1.msra.mxu0 %v2226
        %2242 = vmatprep.subr.mxu0 0.0
        %2243 = vmatpush1.msra.mxu0 %v2225
        %2244 = vmatprep.subr.mxu0 0.0
        %2245 = vmatpush1.msra.mxu0 %v2224
        %2246 = vmatprep.subr.mxu0 0.0
        %2247 = vmatpush1.msra.mxu0 %v2223
        %2248 = vmatprep.subr.mxu0 0.0
        %2249 = vmatpush1.msra.mxu0 %v2222
        %2250 = vmatprep.subr.mxu0 0.0
        %2251 = vmatpush1.msra.mxu0 %v2221
        %2252 = vmatprep.subr.mxu0 0.0
        %2253 = vmatpush1.msra.mxu0 %v2220
        %2254 = vmatprep.subr.mxu0 0.0
        %2255 = vmatpush1.msra.mxu0 %v2219
        %2256 = vmatprep.subr.mxu0 0.0
        %2257 = vmatpush1.msra.mxu0 %v2218
        %2258 = vmatprep.subr.mxu0 0.0
        %2259 = vmatpush1.msra.mxu0 %v2217
        %2260 = vmatprep.subr.mxu0 0.0
        %2261 = vmatpush1.msra.mxu0 %v2216
        %2262 = vmatprep.subr.mxu0 0.0
        %2263 = vmatpush1.msra.mxu0 %v2215
        %2264 = vmatprep.subr.mxu0 0.0
        %2265 = vmatpush1.msra.mxu0 %v2214
        %2266 = vmatprep.subr.mxu0 0.0
        %2267 = vmatpush2.msra.mxu0 0.0
        %2268 = vmatprep.subr.mxu0 0.0
        %2269 = vmatpush2.msra.mxu0 0.0
        %2270 = vmatprep.subr.mxu0 0.0
        %2271 = vmatpush2.msra.mxu0 0.0
        %2272 = vmatprep.subr.mxu0 0.0
        %2273 = vmatpush2.msra.mxu0 0.0
        %2274 = vmatprep.subr.mxu0 0.0
        %2275 = vmatpush2.msra.mxu0 0.0
        %2276 = vmatprep.subr.mxu0 0.0
        %2277 = vmatpush2.msra.mxu0 0.0
        %2278 = vmatprep.subr.mxu0 0.0
        %2279 = vmatpush2.msra.mxu0 0.0
        %2280 = vmatprep.subr.mxu0 0.0
        %2281 = vmatpush2.msra.mxu0 0.0
        %2282 = vmatprep.subr.mxu0 0.0
        %2283 = vmatpush2.msra.mxu0 0.0
        %2284 = vmatprep.subr.mxu0 0.0
        %2285 = vmatpush2.msra.mxu0 0.0
        %2286 = vmatprep.subr.mxu0 0.0
        %2287 = vmatpush2.msra.mxu0 0.0
        %2288 = vmatprep.subr.mxu0 0.0
        %2289 = vmatpush2.msra.mxu0 0.0
        %2290 = vmatprep.subr.mxu0 0.0
        %2291 = vmatpush2.msra.mxu0 0.0
        %2292 = vmatprep.subr.mxu0 0.0
        %2293 = vmatpush2.msra.mxu0 0.0
        %2294 = vmatprep.subr.mxu0 0.0
        %2295 = vmatpush2.msra.mxu0 0.0
        %2296 = vmatprep.subr.mxu0 0.0
        %2297 = vmatpush2.msra.mxu0 0.0
        %2298 = vmatprep.mubr.f32.mxu0 0.0
        %2299 = vmatmul.mubr.f32.gmra.mxu0 %v1761
        %v2300 = vpop.f32.mrf.mxu0
        %v2301 = vadd.f32 %v2233, %v2300
        %v2302 = vpop.f32.mrf.mxu0
        %2303 = vdwg.mxu0
        %v2304 = vld [vmem:[#allocation2 + $0x800] sm:$0xff]
        %v2305 = vld [vmem:[#allocation2 + $0x808] sm:$0xff]
        %v2306 = vld [vmem:[#allocation2 + $0x810] sm:$0xff]
        %v2307 = vld [vmem:[#allocation2 + $0x818] sm:$0xff]
        %v2308 = vld [vmem:[#allocation2 + $0x820] sm:$0xff]
        %v2309 = vld [vmem:[#allocation2 + $0x828] sm:$0xff]
        %v2310 = vld [vmem:[#allocation2 + $0x830] sm:$0xff]
        %v2311 = vld [vmem:[#allocation2 + $0x838] sm:$0xff]
        %v2312 = vld [vmem:[#allocation2 + $0x840] sm:$0xff]
        %v2313 = vld [vmem:[#allocation2 + $0x848] sm:$0xff]
        %v2314 = vld [vmem:[#allocation2 + $0x850] sm:$0xff]
        %v2315 = vld [vmem:[#allocation2 + $0x858] sm:$0xff]
        %v2316 = vld [vmem:[#allocation2 + $0x860] sm:$0xff]
        %v2317 = vld [vmem:[#allocation2 + $0x868] sm:$0xff]
        %v2318 = vld [vmem:[#allocation2 + $0x870] sm:$0xff]
        %v2319 = vld [vmem:[#allocation2 + $0x878] sm:$0xff]
        %v2320 = vlaneseq
        %v2321 = vshrl.u32 %v2320, 7
        %v2322 = vsub.s32 6, %v2321
        %v2323 = vrot.slane %v488, %v2322
        %2324 = vmatprep.subr.mxu0 0.0
        %2325 = vmatpush1.msra.mxu0 %v2319
        %2326 = vmatprep.subr.mxu0 0.0
        %2327 = vmatpush1.msra.mxu0 %v2318
        %2328 = vmatprep.subr.mxu0 0.0
        %2329 = vmatpush1.msra.mxu0 %v2317
        %2330 = vmatprep.subr.mxu0 0.0
        %2331 = vmatpush1.msra.mxu0 %v2316
        %2332 = vmatprep.subr.mxu0 0.0
        %2333 = vmatpush1.msra.mxu0 %v2315
        %2334 = vmatprep.subr.mxu0 0.0
        %2335 = vmatpush1.msra.mxu0 %v2314
        %2336 = vmatprep.subr.mxu0 0.0
        %2337 = vmatpush1.msra.mxu0 %v2313
        %2338 = vmatprep.subr.mxu0 0.0
        %2339 = vmatpush1.msra.mxu0 %v2312
        %2340 = vmatprep.subr.mxu0 0.0
        %2341 = vmatpush1.msra.mxu0 %v2311
        %2342 = vmatprep.subr.mxu0 0.0
        %2343 = vmatpush1.msra.mxu0 %v2310
        %2344 = vmatprep.subr.mxu0 0.0
        %2345 = vmatpush1.msra.mxu0 %v2309
        %2346 = vmatprep.subr.mxu0 0.0
        %2347 = vmatpush1.msra.mxu0 %v2308
        %2348 = vmatprep.subr.mxu0 0.0
        %2349 = vmatpush1.msra.mxu0 %v2307
        %2350 = vmatprep.subr.mxu0 0.0
        %2351 = vmatpush1.msra.mxu0 %v2306
        %2352 = vmatprep.subr.mxu0 0.0
        %2353 = vmatpush1.msra.mxu0 %v2305
        %2354 = vmatprep.subr.mxu0 0.0
        %2355 = vmatpush1.msra.mxu0 %v2304
        %2356 = vmatprep.subr.mxu0 0.0
        %2357 = vmatpush2.msra.mxu0 0.0
        %2358 = vmatprep.subr.mxu0 0.0
        %2359 = vmatpush2.msra.mxu0 0.0
        %2360 = vmatprep.subr.mxu0 0.0
        %2361 = vmatpush2.msra.mxu0 0.0
        %2362 = vmatprep.subr.mxu0 0.0
        %2363 = vmatpush2.msra.mxu0 0.0
        %2364 = vmatprep.subr.mxu0 0.0
        %2365 = vmatpush2.msra.mxu0 0.0
        %2366 = vmatprep.subr.mxu0 0.0
        %2367 = vmatpush2.msra.mxu0 0.0
        %2368 = vmatprep.subr.mxu0 0.0
        %2369 = vmatpush2.msra.mxu0 0.0
        %2370 = vmatprep.subr.mxu0 0.0
        %2371 = vmatpush2.msra.mxu0 0.0
        %2372 = vmatprep.subr.mxu0 0.0
        %2373 = vmatpush2.msra.mxu0 0.0
        %2374 = vmatprep.subr.mxu0 0.0
        %2375 = vmatpush2.msra.mxu0 0.0
        %2376 = vmatprep.subr.mxu0 0.0
        %2377 = vmatpush2.msra.mxu0 0.0
        %2378 = vmatprep.subr.mxu0 0.0
        %2379 = vmatpush2.msra.mxu0 0.0
        %2380 = vmatprep.subr.mxu0 0.0
        %2381 = vmatpush2.msra.mxu0 0.0
        %2382 = vmatprep.subr.mxu0 0.0
        %2383 = vmatpush2.msra.mxu0 0.0
        %2384 = vmatprep.subr.mxu0 0.0
        %2385 = vmatpush2.msra.mxu0 0.0
        %2386 = vmatprep.subr.mxu0 0.0
        %2387 = vmatpush2.msra.mxu0 0.0
        %2388 = vmatprep.mubr.f32.mxu0 0.0
        %2389 = vmatmul.mubr.f32.gmra.mxu0 %v1845
        %v2390 = vpop.f32.mrf.mxu0
        %v2391 = vadd.f32 %v2323, %v2390
        %v2392 = vpop.f32.mrf.mxu0
        %2393 = vdwg.mxu0
        %v2394 = vmul.f32 %v2030, %v2391
        %v2395 = vadd.f32 %v2301, %v2394
        %v2396 = vtanh.pop %v2395
        %v2397 = vsub.f32 1.0, %v2213
        %v2398 = vmul.f32 %v2397, %v2396
        %v2399 = vmul.f32 %v2213, %v1845
        %v2400 = vadd.f32 %v2398, %v2399
        %v2401 = vld [vmem:[#allocation2 + $0x880] sm:$0xff]
        %v2402 = vld [vmem:[#allocation2 + $0x888] sm:$0xff]
        %v2403 = vld [vmem:[#allocation2 + $0x890] sm:$0xff]
        %v2404 = vld [vmem:[#allocation2 + $0x898] sm:$0xff]
        %v2405 = vld [vmem:[#allocation2 + $0x8a0] sm:$0xff]
        %v2406 = vld [vmem:[#allocation2 + $0x8a8] sm:$0xff]
        %v2407 = vld [vmem:[#allocation2 + $0x8b0] sm:$0xff]
        %v2408 = vld [vmem:[#allocation2 + $0x8b8] sm:$0xff]
        %v2409 = vld [vmem:[#allocation2 + $0x8c0] sm:$0xff]
        %v2410 = vld [vmem:[#allocation2 + $0x8c8] sm:$0xff]
        %v2411 = vld [vmem:[#allocation2 + $0x8d0] sm:$0xff]
        %v2412 = vld [vmem:[#allocation2 + $0x8d8] sm:$0xff]
        %v2413 = vld [vmem:[#allocation2 + $0x8e0] sm:$0xff]
        %v2414 = vld [vmem:[#allocation2 + $0x8e8] sm:$0xff]
        %v2415 = vld [vmem:[#allocation2 + $0x8f0] sm:$0xff]
        %v2416 = vld [vmem:[#allocation2 + $0x8f8] sm:$0xff]
        %v2417 = vmax.f32 %v666, 0.0
        %v2418 = vmax.f32 %v671, 0.0
        %v2419 = vld [vmem:[#allocation2 + $0x900] sm:$0xff]
        %v2420 = vld [vmem:[#allocation2 + $0x908] sm:$0xff]
        %v2421 = vld [vmem:[#allocation2 + $0x910] sm:$0xff]
        %v2422 = vld [vmem:[#allocation2 + $0x918] sm:$0xff]
        %v2423 = vld [vmem:[#allocation2 + $0x920] sm:$0xff]
        %v2424 = vld [vmem:[#allocation2 + $0x928] sm:$0xff]
        %v2425 = vld [vmem:[#allocation2 + $0x930] sm:$0xff]
        %v2426 = vld [vmem:[#allocation2 + $0x938] sm:$0xff]
        %v2427 = vld [vmem:[#allocation2 + $0x940] sm:$0xff]
        %v2428 = vld [vmem:[#allocation2 + $0x948] sm:$0xff]
        %v2429 = vld [vmem:[#allocation2 + $0x950] sm:$0xff]
        %v2430 = vld [vmem:[#allocation2 + $0x958] sm:$0xff]
        %v2431 = vld [vmem:[#allocation2 + $0x960] sm:$0xff]
        %v2432 = vld [vmem:[#allocation2 + $0x968] sm:$0xff]
        %v2433 = vld [vmem:[#allocation2 + $0x970] sm:$0xff]
        %v2434 = vld [vmem:[#allocation2 + $0x978] sm:$0xff]
        %2435 = vmatprep.subr.mxu0 0.0
        %2436 = vmatpush1.msra.mxu0 %v2434
        %2437 = vmatprep.subr.mxu0 0.0
        %2438 = vmatpush1.msra.mxu0 %v2433
        %2439 = vmatprep.subr.mxu0 0.0
        %2440 = vmatpush1.msra.mxu0 %v2432
        %2441 = vmatprep.subr.mxu0 0.0
        %2442 = vmatpush1.msra.mxu0 %v2431
        %2443 = vmatprep.subr.mxu0 0.0
        %2444 = vmatpush1.msra.mxu0 %v2430
        %2445 = vmatprep.subr.mxu0 0.0
        %2446 = vmatpush1.msra.mxu0 %v2429
        %2447 = vmatprep.subr.mxu0 0.0
        %2448 = vmatpush1.msra.mxu0 %v2428
        %2449 = vmatprep.subr.mxu0 0.0
        %2450 = vmatpush1.msra.mxu0 %v2427
        %2451 = vmatprep.subr.mxu0 0.0
        %2452 = vmatpush1.msra.mxu0 %v2426
        %2453 = vmatprep.subr.mxu0 0.0
        %2454 = vmatpush1.msra.mxu0 %v2425
        %2455 = vmatprep.subr.mxu0 0.0
        %2456 = vmatpush1.msra.mxu0 %v2424
        %2457 = vmatprep.subr.mxu0 0.0
        %2458 = vmatpush1.msra.mxu0 %v2423
        %2459 = vmatprep.subr.mxu0 0.0
        %2460 = vmatpush1.msra.mxu0 %v2422
        %2461 = vmatprep.subr.mxu0 0.0
        %2462 = vmatpush1.msra.mxu0 %v2421
        %2463 = vmatprep.subr.mxu0 0.0
        %2464 = vmatpush1.msra.mxu0 %v2420
        %2465 = vmatprep.subr.mxu0 0.0
        %2466 = vmatpush1.msra.mxu0 %v2419
        %2467 = vmatprep.subr.mxu0 0.0
        %2468 = vmatpush2.msra.mxu0 0.0
        %2469 = vmatprep.subr.mxu0 0.0
        %2470 = vmatpush2.msra.mxu0 0.0
        %2471 = vmatprep.subr.mxu0 0.0
        %2472 = vmatpush2.msra.mxu0 0.0
        %2473 = vmatprep.subr.mxu0 0.0
        %2474 = vmatpush2.msra.mxu0 0.0
        %2475 = vmatprep.subr.mxu0 0.0
        %2476 = vmatpush2.msra.mxu0 0.0
        %2477 = vmatprep.subr.mxu0 0.0
        %2478 = vmatpush2.msra.mxu0 0.0
        %2479 = vmatprep.subr.mxu0 0.0
        %2480 = vmatpush2.msra.mxu0 0.0
        %2481 = vmatprep.subr.mxu0 0.0
        %2482 = vmatpush2.msra.mxu0 0.0
        %2483 = vmatprep.subr.mxu0 0.0
        %2484 = vmatpush2.msra.mxu0 0.0
        %2485 = vmatprep.subr.mxu0 0.0
        %2486 = vmatpush2.msra.mxu0 0.0
        %2487 = vmatprep.subr.mxu0 0.0
        %2488 = vmatpush2.msra.mxu0 0.0
        %2489 = vmatprep.subr.mxu0 0.0
        %2490 = vmatpush2.msra.mxu0 0.0
        %2491 = vmatprep.subr.mxu0 0.0
        %2492 = vmatpush2.msra.mxu0 0.0
        %2493 = vmatprep.subr.mxu0 0.0
        %2494 = vmatpush2.msra.mxu0 0.0
        %2495 = vmatprep.subr.mxu0 0.0
        %2496 = vmatpush2.msra.mxu0 0.0
        %2497 = vmatprep.subr.mxu0 0.0
        %2498 = vmatpush2.msra.mxu0 0.0
        %2499 = vmatprep.mubr.f32.mxu0 0.0
        %2500 = vmatmul.mubr.f32.gmra.mxu0 %v2417
        %v2501 = vpop.f32.mrf.mxu0
        %v2502 = vadd.f32 0.0, %v2501
        %v2503 = vpop.f32.mrf.mxu0
        %2504 = vmatprep.mubr.f32.mxu0 0.0
        %2505 = vmatmul.mubr.f32.gmra.mxu0 %v2418
        %v2506 = vpop.f32.mrf.mxu0
        %v2507 = vadd.f32 0.0, %v2506
        %v2508 = vpop.f32.mrf.mxu0
        %2509 = vdwg.mxu0
        %2510 = vmatprep.subr.mxu0 0.0
        %2511 = vmatpush1.msra.mxu0 %v2416
        %2512 = vmatprep.subr.mxu0 0.0
        %2513 = vmatpush1.msra.mxu0 %v2415
        %2514 = vmatprep.subr.mxu0 0.0
        %2515 = vmatpush1.msra.mxu0 %v2414
        %2516 = vmatprep.subr.mxu0 0.0
        %2517 = vmatpush1.msra.mxu0 %v2413
        %2518 = vmatprep.subr.mxu0 0.0
        %2519 = vmatpush1.msra.mxu0 %v2412
        %2520 = vmatprep.subr.mxu0 0.0
        %2521 = vmatpush1.msra.mxu0 %v2411
        %2522 = vmatprep.subr.mxu0 0.0
        %2523 = vmatpush1.msra.mxu0 %v2410
        %2524 = vmatprep.subr.mxu0 0.0
        %2525 = vmatpush1.msra.mxu0 %v2409
        %2526 = vmatprep.subr.mxu0 0.0
        %2527 = vmatpush1.msra.mxu0 %v2408
        %2528 = vmatprep.subr.mxu0 0.0
        %2529 = vmatpush1.msra.mxu0 %v2407
        %2530 = vmatprep.subr.mxu0 0.0
        %2531 = vmatpush1.msra.mxu0 %v2406
        %2532 = vmatprep.subr.mxu0 0.0
        %2533 = vmatpush1.msra.mxu0 %v2405
        %2534 = vmatprep.subr.mxu0 0.0
        %2535 = vmatpush1.msra.mxu0 %v2404
        %2536 = vmatprep.subr.mxu0 0.0
        %2537 = vmatpush1.msra.mxu0 %v2403
        %2538 = vmatprep.subr.mxu0 0.0
        %2539 = vmatpush1.msra.mxu0 %v2402
        %2540 = vmatprep.subr.mxu0 0.0
        %2541 = vmatpush1.msra.mxu0 %v2401
        %2542 = vmatprep.subr.mxu0 0.0
        %2543 = vmatpush2.msra.mxu0 0.0
        %2544 = vmatprep.subr.mxu0 0.0
        %2545 = vmatpush2.msra.mxu0 0.0
        %2546 = vmatprep.subr.mxu0 0.0
        %2547 = vmatpush2.msra.mxu0 0.0
        %2548 = vmatprep.subr.mxu0 0.0
        %2549 = vmatpush2.msra.mxu0 0.0
        %2550 = vmatprep.subr.mxu0 0.0
        %2551 = vmatpush2.msra.mxu0 0.0
        %2552 = vmatprep.subr.mxu0 0.0
        %2553 = vmatpush2.msra.mxu0 0.0
        %2554 = vmatprep.subr.mxu0 0.0
        %2555 = vmatpush2.msra.mxu0 0.0
        %2556 = vmatprep.subr.mxu0 0.0
        %2557 = vmatpush2.msra.mxu0 0.0
        %2558 = vmatprep.subr.mxu0 0.0
        %2559 = vmatpush2.msra.mxu0 0.0
        %2560 = vmatprep.subr.mxu0 0.0
        %2561 = vmatpush2.msra.mxu0 0.0
        %2562 = vmatprep.subr.mxu0 0.0
        %2563 = vmatpush2.msra.mxu0 0.0
        %2564 = vmatprep.subr.mxu0 0.0
        %2565 = vmatpush2.msra.mxu0 0.0
        %2566 = vmatprep.subr.mxu0 0.0
        %2567 = vmatpush2.msra.mxu0 0.0
        %2568 = vmatprep.subr.mxu0 0.0
        %2569 = vmatpush2.msra.mxu0 0.0
        %2570 = vmatprep.subr.mxu0 0.0
        %2571 = vmatpush2.msra.mxu0 0.0
        %2572 = vmatprep.subr.mxu0 0.0
        %2573 = vmatpush2.msra.mxu0 0.0
        %2574 = vmatprep.mubr.f32.mxu0 0.0
        %2575 = vmatmul.mubr.f32.gmra.mxu0 %v774
        %v2576 = vpop.f32.mrf.mxu0
        %v2577 = vadd.f32 %v2502, %v2576
        %v2578 = vpop.f32.mrf.mxu0
        %2579 = vmatprep.mubr.f32.mxu0 0.0
        %2580 = vmatmul.mubr.f32.gmra.mxu0 %v775
        %v2581 = vpop.f32.mrf.mxu0
        %v2582 = vadd.f32 %v2507, %v2581
        %v2583 = vpop.f32.mrf.mxu0
        %2584 = vdwg.mxu0
        %v2585 = vlaneseq
        %v2586 = vshrl.u32 %v2585, 7
        %v2587 = vsub.s32 7, %v2586
        %v2588 = vrot.slane %v488, %v2587
        %v2589 = vadd.f32 %v2577, %v2588
        %v2590 = vadd.f32 %v2582, %v2588
        %v2591 = vmax.f32 %v2589, 0.0
        %v2592 = vmax.f32 %v2590, 0.0
        %v2593 = vld [vmem:[#allocation2 + $0x1108] sm:$0xff]
        %v2594 = vld [vmem:[#allocation2 + $0x988] sm:$0xff]
        %v2595 = vld [vmem:[#allocation2 + $0x990] sm:$0xff]
        %v2596 = vld [vmem:[#allocation2 + $0x998] sm:$0xff]
        %v2597 = vld [vmem:[#allocation2 + $0x9a0] sm:$0xff]
        %v2598 = vld [vmem:[#allocation2 + $0x9a8] sm:$0xff]
        %v2599 = vld [vmem:[#allocation2 + $0x9b0] sm:$0xff]
        %v2600 = vld [vmem:[#allocation2 + $0x9b8] sm:$0xff]
        %v2601 = vld [vmem:[#allocation2 + $0x9c0] sm:$0xff]
        %v2602 = vld [vmem:[#allocation2 + $0x9c8] sm:$0xff]
        %v2603 = vld [vmem:[#allocation2 + $0x9d0] sm:$0xff]
        %v2604 = vld [vmem:[#allocation2 + $0x9d8] sm:$0xff]
        %v2605 = vld [vmem:[#allocation2 + $0x9e0] sm:$0xff]
        %v2606 = vld [vmem:[#allocation2 + $0x9e8] sm:$0xff]
        %v2607 = vld [vmem:[#allocation2 + $0x9f0] sm:$0xff]
        %v2608 = vld [vmem:[#allocation2 + $0x9f8] sm:$0xff]
        %v2609 = vld [vmem:[#allocation2 + $0xa00] sm:$0xff]
        %v2610 = vlaneseq
        %v2611 = vshrl.u32 %v2610, 7
        %v2612 = vsub.s32 0, %v2611
        %v2613 = vrot.slane %v2593, %v2612
        %2614 = vmatprep.subr.mxu0 0.0
        %2615 = vmatpush1.msra.mxu0 %v2609
        %2616 = vmatprep.subr.mxu0 0.0
        %2617 = vmatpush1.msra.mxu0 %v2608
        %2618 = vmatprep.subr.mxu0 0.0
        %2619 = vmatpush1.msra.mxu0 %v2607
        %2620 = vmatprep.subr.mxu0 0.0
        %2621 = vmatpush1.msra.mxu0 %v2606
        %2622 = vmatprep.subr.mxu0 0.0
        %2623 = vmatpush1.msra.mxu0 %v2605
        %2624 = vmatprep.subr.mxu0 0.0
        %2625 = vmatpush1.msra.mxu0 %v2604
        %2626 = vmatprep.subr.mxu0 0.0
        %2627 = vmatpush1.msra.mxu0 %v2603
        %2628 = vmatprep.subr.mxu0 0.0
        %2629 = vmatpush1.msra.mxu0 %v2602
        %2630 = vmatprep.subr.mxu0 0.0
        %2631 = vmatpush1.msra.mxu0 %v2601
        %2632 = vmatprep.subr.mxu0 0.0
        %2633 = vmatpush1.msra.mxu0 %v2600
        %2634 = vmatprep.subr.mxu0 0.0
        %2635 = vmatpush1.msra.mxu0 %v2599
        %2636 = vmatprep.subr.mxu0 0.0
        %2637 = vmatpush1.msra.mxu0 %v2598
        %2638 = vmatprep.subr.mxu0 0.0
        %2639 = vmatpush1.msra.mxu0 %v2597
        %2640 = vmatprep.subr.mxu0 0.0
        %2641 = vmatpush1.msra.mxu0 %v2596
        %2642 = vmatprep.subr.mxu0 0.0
        %2643 = vmatpush1.msra.mxu0 %v2595
        %2644 = vmatprep.subr.mxu0 0.0
        %2645 = vmatpush1.msra.mxu0 %v2594
        %2646 = vmatprep.subr.mxu0 0.0
        %2647 = vmatpush2.msra.mxu0 0.0
        %2648 = vmatprep.subr.mxu0 0.0
        %2649 = vmatpush2.msra.mxu0 0.0
        %2650 = vmatprep.subr.mxu0 0.0
        %2651 = vmatpush2.msra.mxu0 0.0
        %2652 = vmatprep.subr.mxu0 0.0
        %2653 = vmatpush2.msra.mxu0 0.0
        %2654 = vmatprep.subr.mxu0 0.0
        %2655 = vmatpush2.msra.mxu0 0.0
        %2656 = vmatprep.subr.mxu0 0.0
        %2657 = vmatpush2.msra.mxu0 0.0
        %2658 = vmatprep.subr.mxu0 0.0
        %2659 = vmatpush2.msra.mxu0 0.0
        %2660 = vmatprep.subr.mxu0 0.0
        %2661 = vmatpush2.msra.mxu0 0.0
        %2662 = vmatprep.subr.mxu0 0.0
        %2663 = vmatpush2.msra.mxu0 0.0
        %2664 = vmatprep.subr.mxu0 0.0
        %2665 = vmatpush2.msra.mxu0 0.0
        %2666 = vmatprep.subr.mxu0 0.0
        %2667 = vmatpush2.msra.mxu0 0.0
        %2668 = vmatprep.subr.mxu0 0.0
        %2669 = vmatpush2.msra.mxu0 0.0
        %2670 = vmatprep.subr.mxu0 0.0
        %2671 = vmatpush2.msra.mxu0 0.0
        %2672 = vmatprep.subr.mxu0 0.0
        %2673 = vmatpush2.msra.mxu0 0.0
        %2674 = vmatprep.subr.mxu0 0.0
        %2675 = vmatpush2.msra.mxu0 0.0
        %2676 = vmatprep.subr.mxu0 0.0
        %2677 = vmatpush2.msra.mxu0 0.0
        %2678 = vmatprep.mubr.f32.mxu0 0.0
        %2679 = vmatmul.mubr.f32.gmra.mxu0 %v2400
        %v2680 = vpop.f32.mrf.mxu0
        %v2681 = vadd.f32 %v2613, %v2680
        %v2682 = vpop.f32.mrf.mxu0
        %2683 = vdwg.mxu0
        %v2684 = vld [vmem:[#allocation2 + $0xa08] sm:$0xff]
        %v2685 = vld [vmem:[#allocation2 + $0xa10] sm:$0xff]
        %v2686 = vld [vmem:[#allocation2 + $0xa18] sm:$0xff]
        %v2687 = vld [vmem:[#allocation2 + $0xa20] sm:$0xff]
        %v2688 = vld [vmem:[#allocation2 + $0xa28] sm:$0xff]
        %v2689 = vld [vmem:[#allocation2 + $0xa30] sm:$0xff]
        %v2690 = vld [vmem:[#allocation2 + $0xa38] sm:$0xff]
        %v2691 = vld [vmem:[#allocation2 + $0xa40] sm:$0xff]
        %v2692 = vld [vmem:[#allocation2 + $0xa48] sm:$0xff]
        %v2693 = vld [vmem:[#allocation2 + $0xa50] sm:$0xff]
        %v2694 = vld [vmem:[#allocation2 + $0xa58] sm:$0xff]
        %v2695 = vld [vmem:[#allocation2 + $0xa60] sm:$0xff]
        %v2696 = vld [vmem:[#allocation2 + $0xa68] sm:$0xff]
        %v2697 = vld [vmem:[#allocation2 + $0xa70] sm:$0xff]
        %v2698 = vld [vmem:[#allocation2 + $0xa78] sm:$0xff]
        %v2699 = vld [vmem:[#allocation2 + $0xa80] sm:$0xff]
        %v2700 = vlaneseq
        %v2701 = vshrl.u32 %v2700, 7
        %v2702 = vsub.s32 1, %v2701
        %v2703 = vrot.slane %v2593, %v2702
        %2704 = vmatprep.subr.mxu0 0.0
        %2705 = vmatpush1.msra.mxu0 %v2699
        %2706 = vmatprep.subr.mxu0 0.0
        %2707 = vmatpush1.msra.mxu0 %v2698
        %2708 = vmatprep.subr.mxu0 0.0
        %2709 = vmatpush1.msra.mxu0 %v2697
        %2710 = vmatprep.subr.mxu0 0.0
        %2711 = vmatpush1.msra.mxu0 %v2696
        %2712 = vmatprep.subr.mxu0 0.0
        %2713 = vmatpush1.msra.mxu0 %v2695
        %2714 = vmatprep.subr.mxu0 0.0
        %2715 = vmatpush1.msra.mxu0 %v2694
        %2716 = vmatprep.subr.mxu0 0.0
        %2717 = vmatpush1.msra.mxu0 %v2693
        %2718 = vmatprep.subr.mxu0 0.0
        %2719 = vmatpush1.msra.mxu0 %v2692
        %2720 = vmatprep.subr.mxu0 0.0
        %2721 = vmatpush1.msra.mxu0 %v2691
        %2722 = vmatprep.subr.mxu0 0.0
        %2723 = vmatpush1.msra.mxu0 %v2690
        %2724 = vmatprep.subr.mxu0 0.0
        %2725 = vmatpush1.msra.mxu0 %v2689
        %2726 = vmatprep.subr.mxu0 0.0
        %2727 = vmatpush1.msra.mxu0 %v2688
        %2728 = vmatprep.subr.mxu0 0.0
        %2729 = vmatpush1.msra.mxu0 %v2687
        %2730 = vmatprep.subr.mxu0 0.0
        %2731 = vmatpush1.msra.mxu0 %v2686
        %2732 = vmatprep.subr.mxu0 0.0
        %2733 = vmatpush1.msra.mxu0 %v2685
        %2734 = vmatprep.subr.mxu0 0.0
        %2735 = vmatpush1.msra.mxu0 %v2684
        %2736 = vmatprep.subr.mxu0 0.0
        %2737 = vmatpush2.msra.mxu0 0.0
        %2738 = vmatprep.subr.mxu0 0.0
        %2739 = vmatpush2.msra.mxu0 0.0
        %2740 = vmatprep.subr.mxu0 0.0
        %2741 = vmatpush2.msra.mxu0 0.0
        %2742 = vmatprep.subr.mxu0 0.0
        %2743 = vmatpush2.msra.mxu0 0.0
        %2744 = vmatprep.subr.mxu0 0.0
        %2745 = vmatpush2.msra.mxu0 0.0
        %2746 = vmatprep.subr.mxu0 0.0
        %2747 = vmatpush2.msra.mxu0 0.0
        %2748 = vmatprep.subr.mxu0 0.0
        %2749 = vmatpush2.msra.mxu0 0.0
        %2750 = vmatprep.subr.mxu0 0.0
        %2751 = vmatpush2.msra.mxu0 0.0
        %2752 = vmatprep.subr.mxu0 0.0
        %2753 = vmatpush2.msra.mxu0 0.0
        %2754 = vmatprep.subr.mxu0 0.0
        %2755 = vmatpush2.msra.mxu0 0.0
        %2756 = vmatprep.subr.mxu0 0.0
        %2757 = vmatpush2.msra.mxu0 0.0
        %2758 = vmatprep.subr.mxu0 0.0
        %2759 = vmatpush2.msra.mxu0 0.0
        %2760 = vmatprep.subr.mxu0 0.0
        %2761 = vmatpush2.msra.mxu0 0.0
        %2762 = vmatprep.subr.mxu0 0.0
        %2763 = vmatpush2.msra.mxu0 0.0
        %2764 = vmatprep.subr.mxu0 0.0
        %2765 = vmatpush2.msra.mxu0 0.0
        %2766 = vmatprep.subr.mxu0 0.0
        %2767 = vmatpush2.msra.mxu0 0.0
        %2768 = vmatprep.mubr.f32.mxu0 0.0
        %2769 = vmatmul.mubr.f32.gmra.mxu0 %v2591
        %v2770 = vpop.f32.mrf.mxu0
        %v2771 = vadd.f32 %v2703, %v2770
        %v2772 = vpop.f32.mrf.mxu0
        %2773 = vmatprep.mubr.f32.mxu0 0.0
        %2774 = vmatmul.mubr.f32.gmra.mxu0 %v2592
        %v2775 = vpop.f32.mrf.mxu0
        %v2776 = vadd.f32 %v2703, %v2775
        %v2777 = vpop.f32.mrf.mxu0
        %2778 = vdwg.mxu0
        %v2779 = vmax.f32 %v2681, 0.0
        %v2780 = vsel %vm487, %v2681, %v2779
        %2781 = vmatprep.subr.mxu0 0.0
        %2782 = vmatpush1.msra.mxu0 0.0
        %2783 = vmatprep.subr.mxu0 0.0
        %2784 = vmatpush1.msra.mxu0 0.0
        %2785 = vmatprep.subr.mxu0 0.0
        %2786 = vmatpush1.msra.mxu0 0.0
        %2787 = vmatprep.subr.mxu0 0.0
        %2788 = vmatpush1.msra.mxu0 0.0
        %2789 = vmatprep.subr.mxu0 0.0
        %2790 = vmatpush1.msra.mxu0 0.0
        %2791 = vmatprep.subr.mxu0 0.0
        %2792 = vmatpush1.msra.mxu0 0.0
        %2793 = vmatprep.subr.mxu0 0.0
        %2794 = vmatpush1.msra.mxu0 0.0
        %2795 = vmatprep.subr.mxu0 0.0
        %2796 = vmatpush1.msra.mxu0 0.0
        %2797 = vmatprep.subr.mxu0 0.0
        %2798 = vmatpush1.msra.mxu0 0.0
        %2799 = vmatprep.subr.mxu0 0.0
        %2800 = vmatpush1.msra.mxu0 0.0
        %2801 = vmatprep.subr.mxu0 0.0
        %2802 = vmatpush1.msra.mxu0 0.0
        %2803 = vmatprep.subr.mxu0 0.0
        %2804 = vmatpush1.msra.mxu0 0.0
        %2805 = vmatprep.subr.mxu0 0.0
        %2806 = vmatpush1.msra.mxu0 0.0
        %2807 = vmatprep.subr.mxu0 0.0
        %2808 = vmatpush1.msra.mxu0 0.0
        %2809 = vmatprep.subr.mxu0 0.0
        %2810 = vmatpush1.msra.mxu0 0.0
        %2811 = vmatprep.subr.mxu0 0.0
        %2812 = vmatpush1.msra.mxu0 %v2780
        %2813 = vmatprep.subr.mxu0 0.0
        %2814 = vmatpush2.msra.mxu0 0.0
        %2815 = vmatprep.subr.mxu0 0.0
        %2816 = vmatpush2.msra.mxu0 0.0
        %2817 = vmatprep.subr.mxu0 0.0
        %2818 = vmatpush2.msra.mxu0 0.0
        %2819 = vmatprep.subr.mxu0 0.0
        %2820 = vmatpush2.msra.mxu0 0.0
        %2821 = vmatprep.subr.mxu0 0.0
        %2822 = vmatpush2.msra.mxu0 0.0
        %2823 = vmatprep.subr.mxu0 0.0
        %2824 = vmatpush2.msra.mxu0 0.0
        %2825 = vmatprep.subr.mxu0 0.0
        %2826 = vmatpush2.msra.mxu0 0.0
        %2827 = vmatprep.subr.mxu0 0.0
        %2828 = vmatpush2.msra.mxu0 0.0
        %2829 = vmatprep.subr.mxu0 0.0
        %2830 = vmatpush2.msra.mxu0 0.0
        %2831 = vmatprep.subr.mxu0 0.0
        %2832 = vmatpush2.msra.mxu0 0.0
        %2833 = vmatprep.subr.mxu0 0.0
        %2834 = vmatpush2.msra.mxu0 0.0
        %2835 = vmatprep.subr.mxu0 0.0
        %2836 = vmatpush2.msra.mxu0 0.0
        %2837 = vmatprep.subr.mxu0 0.0
        %2838 = vmatpush2.msra.mxu0 0.0
        %2839 = vmatprep.subr.mxu0 0.0
        %2840 = vmatpush2.msra.mxu0 0.0
        %2841 = vmatprep.subr.mxu0 0.0
        %2842 = vmatpush2.msra.mxu0 0.0
        %2843 = vmatprep.subr.mxu0 0.0
        %2844 = vmatpush2.msra.mxu0 0.0
        %2845 = vmatprep.mubr.f32.mxu0 0.0
        %2846 = vmatmul.mubr.f32.gmra.mxu0 %v678
        %v2847 = vpop.f32.mrf.mxu0
        %v2848 = vadd.f32 0.0, %v2847
        %v2849 = vpop.f32.mrf.mxu0
        %2850 = vmatprep.mubr.f32.mxu0 0.0
        %2851 = vmatmul.mubr.f32.gmra.mxu0 %v681
        %v2852 = vpop.f32.mrf.mxu0
        %v2853 = vadd.f32 0.0, %v2852
        %v2854 = vpop.f32.mrf.mxu0
        %2855 = vmatprep.mubr.f32.mxu0 0.0
        %2856 = vmatmul.mubr.f32.gmra.mxu0 %v684
        %v2857 = vpop.f32.mrf.mxu0
        %v2858 = vadd.f32 0.0, %v2857
        %v2859 = vpop.f32.mrf.mxu0
        %2860 = vmatprep.mubr.f32.mxu0 0.0
        %2861 = vmatmul.mubr.f32.gmra.mxu0 %v687
        %v2862 = vpop.f32.mrf.mxu0
        %v2863 = vadd.f32 0.0, %v2862
        %v2864 = vpop.f32.mrf.mxu0
        %2865 = vdwg.mxu0
        %v2866 = vadd.f32 %v2848, %v2858
        %v2867 = vadd.f32 %v2853, %v2863
        %v2868 = vld [vmem:[#allocation2 + $0xa88] sm:$0xff]
        %v2869 = vld [vmem:[#allocation2 + $0xa90] sm:$0xff]
        %v2870 = vld [vmem:[#allocation2 + $0xa98] sm:$0xff]
        %v2871 = vld [vmem:[#allocation2 + $0xaa0] sm:$0xff]
        %v2872 = vld [vmem:[#allocation2 + $0xaa8] sm:$0xff]
        %v2873 = vld [vmem:[#allocation2 + $0xab0] sm:$0xff]
        %v2874 = vld [vmem:[#allocation2 + $0xab8] sm:$0xff]
        %v2875 = vld [vmem:[#allocation2 + $0xac0] sm:$0xff]
        %v2876 = vld [vmem:[#allocation2 + $0xac8] sm:$0xff]
        %v2877 = vld [vmem:[#allocation2 + $0xad0] sm:$0xff]
        %v2878 = vld [vmem:[#allocation2 + $0xad8] sm:$0xff]
        %v2879 = vld [vmem:[#allocation2 + $0xae0] sm:$0xff]
        %v2880 = vld [vmem:[#allocation2 + $0xae8] sm:$0xff]
        %v2881 = vld [vmem:[#allocation2 + $0xaf0] sm:$0xff]
        %v2882 = vld [vmem:[#allocation2 + $0xaf8] sm:$0xff]
        %v2883 = vld [vmem:[#allocation2 + $0xb00] sm:$0xff]
        %v2884 = vadd.f32 %v2848, %v2771
        %v2885 = vadd.f32 %v2853, %v2776
        %v2886 = vld [vmem:[#allocation2 + $0xb08] sm:$0xff]
        %v2887 = vld [vmem:[#allocation2 + $0xb10] sm:$0xff]
        %v2888 = vld [vmem:[#allocation2 + $0xb18] sm:$0xff]
        %v2889 = vld [vmem:[#allocation2 + $0xb20] sm:$0xff]
        %v2890 = vld [vmem:[#allocation2 + $0xb28] sm:$0xff]
        %v2891 = vld [vmem:[#allocation2 + $0xb30] sm:$0xff]
        %v2892 = vld [vmem:[#allocation2 + $0xb38] sm:$0xff]
        %v2893 = vld [vmem:[#allocation2 + $0xb40] sm:$0xff]
        %v2894 = vld [vmem:[#allocation2 + $0xb48] sm:$0xff]
        %v2895 = vld [vmem:[#allocation2 + $0xb50] sm:$0xff]
        %v2896 = vld [vmem:[#allocation2 + $0xb58] sm:$0xff]
        %v2897 = vld [vmem:[#allocation2 + $0xb60] sm:$0xff]
        %v2898 = vld [vmem:[#allocation2 + $0xb68] sm:$0xff]
        %v2899 = vld [vmem:[#allocation2 + $0xb70] sm:$0xff]
        %v2900 = vld [vmem:[#allocation2 + $0xb78] sm:$0xff]
        %v2901 = vld [vmem:[#allocation2 + $0xb80] sm:$0xff]
        %2902 = vmatprep.subr.mxu0 0.0
        %2903 = vmatpush1.msra.mxu0 %v2901
        %2904 = vmatprep.subr.mxu0 0.0
        %2905 = vmatpush1.msra.mxu0 %v2900
        %2906 = vmatprep.subr.mxu0 0.0
        %2907 = vmatpush1.msra.mxu0 %v2899
        %2908 = vmatprep.subr.mxu0 0.0
        %2909 = vmatpush1.msra.mxu0 %v2898
        %2910 = vmatprep.subr.mxu0 0.0
        %2911 = vmatpush1.msra.mxu0 %v2897
        %2912 = vmatprep.subr.mxu0 0.0
        %2913 = vmatpush1.msra.mxu0 %v2896
        %2914 = vmatprep.subr.mxu0 0.0
        %2915 = vmatpush1.msra.mxu0 %v2895
        %2916 = vmatprep.subr.mxu0 0.0
        %2917 = vmatpush1.msra.mxu0 %v2894
        %2918 = vmatprep.subr.mxu0 0.0
        %2919 = vmatpush1.msra.mxu0 %v2893
        %2920 = vmatprep.subr.mxu0 0.0
        %2921 = vmatpush1.msra.mxu0 %v2892
        %2922 = vmatprep.subr.mxu0 0.0
        %2923 = vmatpush1.msra.mxu0 %v2891
        %2924 = vmatprep.subr.mxu0 0.0
        %2925 = vmatpush1.msra.mxu0 %v2890
        %2926 = vmatprep.subr.mxu0 0.0
        %2927 = vmatpush1.msra.mxu0 %v2889
        %2928 = vmatprep.subr.mxu0 0.0
        %2929 = vmatpush1.msra.mxu0 %v2888
        %2930 = vmatprep.subr.mxu0 0.0
        %2931 = vmatpush1.msra.mxu0 %v2887
        %2932 = vmatprep.subr.mxu0 0.0
        %2933 = vmatpush1.msra.mxu0 %v2886
        %2934 = vmatprep.subr.mxu0 0.0
        %2935 = vmatpush2.msra.mxu0 0.0
        %2936 = vmatprep.subr.mxu0 0.0
        %2937 = vmatpush2.msra.mxu0 0.0
        %2938 = vmatprep.subr.mxu0 0.0
        %2939 = vmatpush2.msra.mxu0 0.0
        %2940 = vmatprep.subr.mxu0 0.0
        %2941 = vmatpush2.msra.mxu0 0.0
        %2942 = vmatprep.subr.mxu0 0.0
        %2943 = vmatpush2.msra.mxu0 0.0
        %2944 = vmatprep.subr.mxu0 0.0
        %2945 = vmatpush2.msra.mxu0 0.0
        %2946 = vmatprep.subr.mxu0 0.0
        %2947 = vmatpush2.msra.mxu0 0.0
        %2948 = vmatprep.subr.mxu0 0.0
        %2949 = vmatpush2.msra.mxu0 0.0
        %2950 = vmatprep.subr.mxu0 0.0
        %2951 = vmatpush2.msra.mxu0 0.0
        %2952 = vmatprep.subr.mxu0 0.0
        %2953 = vmatpush2.msra.mxu0 0.0
        %2954 = vmatprep.subr.mxu0 0.0
        %2955 = vmatpush2.msra.mxu0 0.0
        %2956 = vmatprep.subr.mxu0 0.0
        %2957 = vmatpush2.msra.mxu0 0.0
        %2958 = vmatprep.subr.mxu0 0.0
        %2959 = vmatpush2.msra.mxu0 0.0
        %2960 = vmatprep.subr.mxu0 0.0
        %2961 = vmatpush2.msra.mxu0 0.0
        %2962 = vmatprep.subr.mxu0 0.0
        %2963 = vmatpush2.msra.mxu0 0.0
        %2964 = vmatprep.subr.mxu0 0.0
        %2965 = vmatpush2.msra.mxu0 0.0
        %2966 = vmatprep.mubr.f32.mxu0 0.0
        %2967 = vmatmul.mubr.f32.gmra.mxu0 %v2884
        %v2968 = vpop.f32.mrf.mxu0
        %v2969 = vadd.f32 0.0, %v2968
        %v2970 = vpop.f32.mrf.mxu0
        %2971 = vmatprep.mubr.f32.mxu0 0.0
        %2972 = vmatmul.mubr.f32.gmra.mxu0 %v2885
        %v2973 = vpop.f32.mrf.mxu0
        %v2974 = vadd.f32 0.0, %v2973
        %v2975 = vpop.f32.mrf.mxu0
        %2976 = vdwg.mxu0
        %2977 = vmatprep.subr.mxu0 0.0
        %2978 = vmatpush1.msra.mxu0 %v2883
        %2979 = vmatprep.subr.mxu0 0.0
        %2980 = vmatpush1.msra.mxu0 %v2882
        %2981 = vmatprep.subr.mxu0 0.0
        %2982 = vmatpush1.msra.mxu0 %v2881
        %2983 = vmatprep.subr.mxu0 0.0
        %2984 = vmatpush1.msra.mxu0 %v2880
        %2985 = vmatprep.subr.mxu0 0.0
        %2986 = vmatpush1.msra.mxu0 %v2879
        %2987 = vmatprep.subr.mxu0 0.0
        %2988 = vmatpush1.msra.mxu0 %v2878
        %2989 = vmatprep.subr.mxu0 0.0
        %2990 = vmatpush1.msra.mxu0 %v2877
        %2991 = vmatprep.subr.mxu0 0.0
        %2992 = vmatpush1.msra.mxu0 %v2876
        %2993 = vmatprep.subr.mxu0 0.0
        %2994 = vmatpush1.msra.mxu0 %v2875
        %2995 = vmatprep.subr.mxu0 0.0
        %2996 = vmatpush1.msra.mxu0 %v2874
        %2997 = vmatprep.subr.mxu0 0.0
        %2998 = vmatpush1.msra.mxu0 %v2873
        %2999 = vmatprep.subr.mxu0 0.0
        %3000 = vmatpush1.msra.mxu0 %v2872
        %3001 = vmatprep.subr.mxu0 0.0
        %3002 = vmatpush1.msra.mxu0 %v2871
        %3003 = vmatprep.subr.mxu0 0.0
        %3004 = vmatpush1.msra.mxu0 %v2870
        %3005 = vmatprep.subr.mxu0 0.0
        %3006 = vmatpush1.msra.mxu0 %v2869
        %3007 = vmatprep.subr.mxu0 0.0
        %3008 = vmatpush1.msra.mxu0 %v2868
        %3009 = vmatprep.subr.mxu0 0.0
        %3010 = vmatpush2.msra.mxu0 0.0
        %3011 = vmatprep.subr.mxu0 0.0
        %3012 = vmatpush2.msra.mxu0 0.0
        %3013 = vmatprep.subr.mxu0 0.0
        %3014 = vmatpush2.msra.mxu0 0.0
        %3015 = vmatprep.subr.mxu0 0.0
        %3016 = vmatpush2.msra.mxu0 0.0
        %3017 = vmatprep.subr.mxu0 0.0
        %3018 = vmatpush2.msra.mxu0 0.0
        %3019 = vmatprep.subr.mxu0 0.0
        %3020 = vmatpush2.msra.mxu0 0.0
        %3021 = vmatprep.subr.mxu0 0.0
        %3022 = vmatpush2.msra.mxu0 0.0
        %3023 = vmatprep.subr.mxu0 0.0
        %3024 = vmatpush2.msra.mxu0 0.0
        %3025 = vmatprep.subr.mxu0 0.0
        %3026 = vmatpush2.msra.mxu0 0.0
        %3027 = vmatprep.subr.mxu0 0.0
        %3028 = vmatpush2.msra.mxu0 0.0
        %3029 = vmatprep.subr.mxu0 0.0
        %3030 = vmatpush2.msra.mxu0 0.0
        %3031 = vmatprep.subr.mxu0 0.0
        %3032 = vmatpush2.msra.mxu0 0.0
        %3033 = vmatprep.subr.mxu0 0.0
        %3034 = vmatpush2.msra.mxu0 0.0
        %3035 = vmatprep.subr.mxu0 0.0
        %3036 = vmatpush2.msra.mxu0 0.0
        %3037 = vmatprep.subr.mxu0 0.0
        %3038 = vmatpush2.msra.mxu0 0.0
        %3039 = vmatprep.subr.mxu0 0.0
        %3040 = vmatpush2.msra.mxu0 0.0
        %3041 = vmatprep.mubr.f32.mxu0 0.0
        %3042 = vmatmul.mubr.f32.gmra.mxu0 %v2866
        %v3043 = vpop.f32.mrf.mxu0
        %v3044 = vadd.f32 %v2969, %v3043
        %v3045 = vpop.f32.mrf.mxu0
        %3046 = vmatprep.mubr.f32.mxu0 0.0
        %3047 = vmatmul.mubr.f32.gmra.mxu0 %v2867
        %v3048 = vpop.f32.mrf.mxu0
        %v3049 = vadd.f32 %v2974, %v3048
        %v3050 = vpop.f32.mrf.mxu0
        %3051 = vdwg.mxu0
        %vm3052 = vcmp.ge.f32.partialorder %v3044, 0.0
        %vm3053 = vcmp.ge.f32.partialorder %v3049, 0.0
        %v3054 = vmul.f32 %v3044, 0.2
        %v3055 = vmul.f32 %v3049, 0.2
        %v3056 = vsel %vm3052, %v3044, %v3054
        %v3057 = vsel %vm3053, %v3049, %v3055
        %3058 = vmatprep.subr.mxu0 0.0
        %3059 = vmatpush1.msra.mxu0 %v436
        %3060 = vmatprep.subr.mxu0 0.0
        %3061 = vmatpush1.msra.mxu0 %v435
        %3062 = vmatprep.subr.mxu0 0.0
        %3063 = vmatpush1.msra.mxu0 %v434
        %3064 = vmatprep.subr.mxu0 0.0
        %3065 = vmatpush1.msra.mxu0 %v433
        %3066 = vmatprep.subr.mxu0 0.0
        %3067 = vmatpush1.msra.mxu0 %v432
        %3068 = vmatprep.subr.mxu0 0.0
        %3069 = vmatpush1.msra.mxu0 %v431
        %3070 = vmatprep.subr.mxu0 0.0
        %3071 = vmatpush1.msra.mxu0 %v430
        %3072 = vmatprep.subr.mxu0 0.0
        %3073 = vmatpush1.msra.mxu0 %v429
        %3074 = vmatprep.subr.mxu0 0.0
        %3075 = vmatpush1.msra.mxu0 %v428
        %3076 = vmatprep.subr.mxu0 0.0
        %3077 = vmatpush1.msra.mxu0 %v427
        %3078 = vmatprep.subr.mxu0 0.0
        %3079 = vmatpush1.msra.mxu0 %v426
        %3080 = vmatprep.subr.mxu0 0.0
        %3081 = vmatpush1.msra.mxu0 %v425
        %3082 = vmatprep.subr.mxu0 0.0
        %3083 = vmatpush1.msra.mxu0 %v424
        %3084 = vmatprep.subr.mxu0 0.0
        %3085 = vmatpush1.msra.mxu0 %v423
        %3086 = vmatprep.subr.mxu0 0.0
        %3087 = vmatpush1.msra.mxu0 %v422
        %3088 = vmatprep.subr.mxu0 0.0
        %3089 = vmatpush1.msra.mxu0 %v421
        %3090 = vmatprep.subr.mxu0 0.0
        %3091 = vmatpush2.msra.mxu0 0.0
        %3092 = vmatprep.subr.mxu0 0.0
        %3093 = vmatpush2.msra.mxu0 0.0
        %3094 = vmatprep.subr.mxu0 0.0
        %3095 = vmatpush2.msra.mxu0 0.0
        %3096 = vmatprep.subr.mxu0 0.0
        %3097 = vmatpush2.msra.mxu0 0.0
        %3098 = vmatprep.subr.mxu0 0.0
        %3099 = vmatpush2.msra.mxu0 0.0
        %3100 = vmatprep.subr.mxu0 0.0
        %3101 = vmatpush2.msra.mxu0 0.0
        %3102 = vmatprep.subr.mxu0 0.0
        %3103 = vmatpush2.msra.mxu0 0.0
        %3104 = vmatprep.subr.mxu0 0.0
        %3105 = vmatpush2.msra.mxu0 0.0
        %3106 = vmatprep.subr.mxu0 0.0
        %3107 = vmatpush2.msra.mxu0 0.0
        %3108 = vmatprep.subr.mxu0 0.0
        %3109 = vmatpush2.msra.mxu0 0.0
        %3110 = vmatprep.subr.mxu0 0.0
        %3111 = vmatpush2.msra.mxu0 0.0
        %3112 = vmatprep.subr.mxu0 0.0
        %3113 = vmatpush2.msra.mxu0 0.0
        %3114 = vmatprep.subr.mxu0 0.0
        %3115 = vmatpush2.msra.mxu0 0.0
        %3116 = vmatprep.subr.mxu0 0.0
        %3117 = vmatpush2.msra.mxu0 0.0
        %3118 = vmatprep.subr.mxu0 0.0
        %3119 = vmatpush2.msra.mxu0 0.0
        %3120 = vmatprep.subr.mxu0 0.0
        %3121 = vmatpush2.msra.mxu0 0.0
        %3122 = vmatprep.mubr.f32.mxu0 0.0
        %3123 = vmatmul.mubr.f32.gmra.mxu0 %v3056
        %v3124 = vpop.f32.mrf.mxu0
        %v3125 = vadd.f32 0.0, %v3124
        %v3126 = vpop.f32.mrf.mxu0
        %3127 = vmatprep.mubr.f32.mxu0 0.0
        %3128 = vmatmul.mubr.f32.gmra.mxu0 %v3057
        %v3129 = vpop.f32.mrf.mxu0
        %v3130 = vadd.f32 0.0, %v3129
        %v3131 = vpop.f32.mrf.mxu0
        %3132 = vdwg.mxu0
        %v3133 = vsel %vm1041, %v3125, -1e+30
        %v3134 = vsel %vm1042, %v3130, -1e+30
        %v3135 = vmax.f32 %v3133, %v3134
        %v3136 = vrot.slane %v3135, 4
        %v3137 = vmax.f32 %v3135, %v3136
        %v3138 = vrot.slane %v3137, 2
        %v3139 = vmax.f32 %v3137, %v3138
        %v3140 = vrot.slane %v3139, 1
        %v3141 = vmax.f32 %v3139, %v3140
        %v3142 = vmul.f32 %v419, %v3141
        %v3143 = vmul.f32 %v420, %v3141
        %3144 = vmatprep.subr.mxu0 0.0
        %3145 = vmatpush1.msra.mxu0 %v452
        %3146 = vmatprep.subr.mxu0 0.0
        %3147 = vmatpush1.msra.mxu0 %v451
        %3148 = vmatprep.subr.mxu0 0.0
        %3149 = vmatpush1.msra.mxu0 %v450
        %3150 = vmatprep.subr.mxu0 0.0
        %3151 = vmatpush1.msra.mxu0 %v449
        %3152 = vmatprep.subr.mxu0 0.0
        %3153 = vmatpush1.msra.mxu0 %v448
        %3154 = vmatprep.subr.mxu0 0.0
        %3155 = vmatpush1.msra.mxu0 %v447
        %3156 = vmatprep.subr.mxu0 0.0
        %3157 = vmatpush1.msra.mxu0 %v446
        %3158 = vmatprep.subr.mxu0 0.0
        %3159 = vmatpush1.msra.mxu0 %v445
        %3160 = vmatprep.subr.mxu0 0.0
        %3161 = vmatpush1.msra.mxu0 %v444
        %3162 = vmatprep.subr.mxu0 0.0
        %3163 = vmatpush1.msra.mxu0 %v443
        %3164 = vmatprep.subr.mxu0 0.0
        %3165 = vmatpush1.msra.mxu0 %v442
        %3166 = vmatprep.subr.mxu0 0.0
        %3167 = vmatpush1.msra.mxu0 %v441
        %3168 = vmatprep.subr.mxu0 0.0
        %3169 = vmatpush1.msra.mxu0 %v440
        %3170 = vmatprep.subr.mxu0 0.0
        %3171 = vmatpush1.msra.mxu0 %v439
        %3172 = vmatprep.subr.mxu0 0.0
        %3173 = vmatpush1.msra.mxu0 %v438
        %3174 = vmatprep.subr.mxu0 0.0
        %3175 = vmatpush1.msra.mxu0 %v437
        %3176 = vmatprep.subr.mxu0 0.0
        %3177 = vmatpush2.msra.mxu0 0.0
        %3178 = vmatprep.subr.mxu0 0.0
        %3179 = vmatpush2.msra.mxu0 0.0
        %3180 = vmatprep.subr.mxu0 0.0
        %3181 = vmatpush2.msra.mxu0 0.0
        %3182 = vmatprep.subr.mxu0 0.0
        %3183 = vmatpush2.msra.mxu0 0.0
        %3184 = vmatprep.subr.mxu0 0.0
        %3185 = vmatpush2.msra.mxu0 0.0
        %3186 = vmatprep.subr.mxu0 0.0
        %3187 = vmatpush2.msra.mxu0 0.0
        %3188 = vmatprep.subr.mxu0 0.0
        %3189 = vmatpush2.msra.mxu0 0.0
        %3190 = vmatprep.subr.mxu0 0.0
        %3191 = vmatpush2.msra.mxu0 0.0
        %3192 = vmatprep.subr.mxu0 0.0
        %3193 = vmatpush2.msra.mxu0 0.0
        %3194 = vmatprep.subr.mxu0 0.0
        %3195 = vmatpush2.msra.mxu0 0.0
        %3196 = vmatprep.subr.mxu0 0.0
        %3197 = vmatpush2.msra.mxu0 0.0
        %3198 = vmatprep.subr.mxu0 0.0
        %3199 = vmatpush2.msra.mxu0 0.0
        %3200 = vmatprep.subr.mxu0 0.0
        %3201 = vmatpush2.msra.mxu0 0.0
        %3202 = vmatprep.subr.mxu0 0.0
        %3203 = vmatpush2.msra.mxu0 0.0
        %3204 = vmatprep.subr.mxu0 0.0
        %3205 = vmatpush2.msra.mxu0 0.0
        %3206 = vmatprep.subr.mxu0 0.0
        %3207 = vmatpush2.msra.mxu0 0.0
        %3208 = vmatprep.mubr.f32.mxu0 0.0
        %3209 = vmatmul.mubr.f32.gmra.mxu0 %v3142
        %v3210 = vpop.f32.mrf.mxu0
        %v3211 = vadd.f32 0.0, %v3210
        %v3212 = vpop.f32.mrf.mxu0
        %3213 = vmatprep.mubr.f32.mxu0 0.0
        %3214 = vmatmul.mubr.f32.gmra.mxu0 %v3143
        %v3215 = vpop.f32.mrf.mxu0
        %v3216 = vadd.f32 0.0, %v3215
        %v3217 = vpop.f32.mrf.mxu0
        %3218 = vdwg.mxu0
        %v3219 = vsub.f32 %v3056, %v3211
        %v3220 = vsub.f32 %v3057, %v3216
        %v3221 = vmul.f32 %v3219, 1.442695
        %v3222 = vpow.pop %v3221
        %v3223 = vmul.f32 %v3220, 1.442695
        %v3224 = vpow.pop %v3223
        %3225 = vmatprep.subr.mxu0 0.0
        %3226 = vmatpush1.msra.mxu0 0.0
        %3227 = vmatprep.subr.mxu0 0.0
        %3228 = vmatpush1.msra.mxu0 0.0
        %3229 = vmatprep.subr.mxu0 0.0
        %3230 = vmatpush1.msra.mxu0 0.0
        %3231 = vmatprep.subr.mxu0 0.0
        %3232 = vmatpush1.msra.mxu0 0.0
        %3233 = vmatprep.subr.mxu0 0.0
        %3234 = vmatpush1.msra.mxu0 0.0
        %3235 = vmatprep.subr.mxu0 0.0
        %3236 = vmatpush1.msra.mxu0 0.0
        %3237 = vmatprep.subr.mxu0 0.0
        %3238 = vmatpush1.msra.mxu0 0.0
        %3239 = vmatprep.subr.mxu0 0.0
        %3240 = vmatpush1.msra.mxu0 0.0
        %3241 = vmatprep.subr.mxu0 0.0
        %3242 = vmatpush1.msra.mxu0 0.0
        %3243 = vmatprep.subr.mxu0 0.0
        %3244 = vmatpush1.msra.mxu0 0.0
        %3245 = vmatprep.subr.mxu0 0.0
        %3246 = vmatpush1.msra.mxu0 0.0
        %3247 = vmatprep.subr.mxu0 0.0
        %3248 = vmatpush1.msra.mxu0 0.0
        %3249 = vmatprep.subr.mxu0 0.0
        %3250 = vmatpush1.msra.mxu0 0.0
        %3251 = vmatprep.subr.mxu0 0.0
        %3252 = vmatpush1.msra.mxu0 0.0
        %3253 = vmatprep.subr.mxu0 0.0
        %3254 = vmatpush1.msra.mxu0 %v3224
        %3255 = vmatprep.subr.mxu0 0.0
        %3256 = vmatpush1.msra.mxu0 %v3222
        %3257 = vmatprep.subr.mxu0 0.0
        %3258 = vmatpush2.msra.mxu0 0.0
        %3259 = vmatprep.subr.mxu0 0.0
        %3260 = vmatpush2.msra.mxu0 0.0
        %3261 = vmatprep.subr.mxu0 0.0
        %3262 = vmatpush2.msra.mxu0 0.0
        %3263 = vmatprep.subr.mxu0 0.0
        %3264 = vmatpush2.msra.mxu0 0.0
        %3265 = vmatprep.subr.mxu0 0.0
        %3266 = vmatpush2.msra.mxu0 0.0
        %3267 = vmatprep.subr.mxu0 0.0
        %3268 = vmatpush2.msra.mxu0 0.0
        %3269 = vmatprep.subr.mxu0 0.0
        %3270 = vmatpush2.msra.mxu0 0.0
        %3271 = vmatprep.subr.mxu0 0.0
        %3272 = vmatpush2.msra.mxu0 0.0
        %3273 = vmatprep.subr.mxu0 0.0
        %3274 = vmatpush2.msra.mxu0 0.0
        %3275 = vmatprep.subr.mxu0 0.0
        %3276 = vmatpush2.msra.mxu0 0.0
        %3277 = vmatprep.subr.mxu0 0.0
        %3278 = vmatpush2.msra.mxu0 0.0
        %3279 = vmatprep.subr.mxu0 0.0
        %3280 = vmatpush2.msra.mxu0 0.0
        %3281 = vmatprep.subr.mxu0 0.0
        %3282 = vmatpush2.msra.mxu0 0.0
        %3283 = vmatprep.subr.mxu0 0.0
        %3284 = vmatpush2.msra.mxu0 0.0
        %3285 = vmatprep.subr.mxu0 0.0
        %3286 = vmatpush2.msra.mxu0 0.0
        %3287 = vmatprep.subr.mxu0 0.0
        %3288 = vmatpush2.msra.mxu0 0.0
        %3289 = vmatprep.mubr.f32.mxu0 0.0
        %3290 = vmatmul.mubr.f32.gmra.mxu0 %v1137
        %v3291 = vpop.f32.mrf.mxu0
        %v3292 = vadd.f32 0.0, %v3291
        %v3293 = vpop.f32.mrf.mxu0
        %3294 = vdwg.mxu0
        %v3295 = vmax.f32 %v3292, 1e-12
        %v3296 = vrcp.pop %v3295
        %3297 = vmatprep.subr.mxu0 0.0
        %3298 = vmatpush1.msra.mxu0 0.0
        %3299 = vmatprep.subr.mxu0 0.0
        %3300 = vmatpush1.msra.mxu0 0.0
        %3301 = vmatprep.subr.mxu0 0.0
        %3302 = vmatpush1.msra.mxu0 0.0
        %3303 = vmatprep.subr.mxu0 0.0
        %3304 = vmatpush1.msra.mxu0 0.0
        %3305 = vmatprep.subr.mxu0 0.0
        %3306 = vmatpush1.msra.mxu0 0.0
        %3307 = vmatprep.subr.mxu0 0.0
        %3308 = vmatpush1.msra.mxu0 0.0
        %3309 = vmatprep.subr.mxu0 0.0
        %3310 = vmatpush1.msra.mxu0 0.0
        %3311 = vmatprep.subr.mxu0 0.0
        %3312 = vmatpush1.msra.mxu0 0.0
        %3313 = vmatprep.subr.mxu0 0.0
        %3314 = vmatpush1.msra.mxu0 0.0
        %3315 = vmatprep.subr.mxu0 0.0
        %3316 = vmatpush1.msra.mxu0 0.0
        %3317 = vmatprep.subr.mxu0 0.0
        %3318 = vmatpush1.msra.mxu0 0.0
        %3319 = vmatprep.subr.mxu0 0.0
        %3320 = vmatpush1.msra.mxu0 0.0
        %3321 = vmatprep.subr.mxu0 0.0
        %3322 = vmatpush1.msra.mxu0 0.0
        %3323 = vmatprep.subr.mxu0 0.0
        %3324 = vmatpush1.msra.mxu0 0.0
        %3325 = vmatprep.subr.mxu0 0.0
        %3326 = vmatpush1.msra.mxu0 0.0
        %3327 = vmatprep.subr.mxu0 0.0
        %3328 = vmatpush1.msra.mxu0 %v3296
        %3329 = vmatprep.subr.mxu0 0.0
        %3330 = vmatpush2.msra.mxu0 0.0
        %3331 = vmatprep.subr.mxu0 0.0
        %3332 = vmatpush2.msra.mxu0 0.0
        %3333 = vmatprep.subr.mxu0 0.0
        %3334 = vmatpush2.msra.mxu0 0.0
        %3335 = vmatprep.subr.mxu0 0.0
        %3336 = vmatpush2.msra.mxu0 0.0
        %3337 = vmatprep.subr.mxu0 0.0
        %3338 = vmatpush2.msra.mxu0 0.0
        %3339 = vmatprep.subr.mxu0 0.0
        %3340 = vmatpush2.msra.mxu0 0.0
        %3341 = vmatprep.subr.mxu0 0.0
        %3342 = vmatpush2.msra.mxu0 0.0
        %3343 = vmatprep.subr.mxu0 0.0
        %3344 = vmatpush2.msra.mxu0 0.0
        %3345 = vmatprep.subr.mxu0 0.0
        %3346 = vmatpush2.msra.mxu0 0.0
        %3347 = vmatprep.subr.mxu0 0.0
        %3348 = vmatpush2.msra.mxu0 0.0
        %3349 = vmatprep.subr.mxu0 0.0
        %3350 = vmatpush2.msra.mxu0 0.0
        %3351 = vmatprep.subr.mxu0 0.0
        %3352 = vmatpush2.msra.mxu0 0.0
        %3353 = vmatprep.subr.mxu0 0.0
        %3354 = vmatpush2.msra.mxu0 0.0
        %3355 = vmatprep.subr.mxu0 0.0
        %3356 = vmatpush2.msra.mxu0 0.0
        %3357 = vmatprep.subr.mxu0 0.0
        %3358 = vmatpush2.msra.mxu0 0.0
        %3359 = vmatprep.subr.mxu0 0.0
        %3360 = vmatpush2.msra.mxu0 0.0
        %3361 = vmatprep.mubr.f32.mxu0 0.0
        %3362 = vmatmul.mubr.f32.gmra.mxu0 %v684
        %v3363 = vpop.f32.mrf.mxu0
        %v3364 = vadd.f32 0.0, %v3363
        %v3365 = vpop.f32.mrf.mxu0
        %3366 = vmatprep.mubr.f32.mxu0 0.0
        %3367 = vmatmul.mubr.f32.gmra.mxu0 %v687
        %v3368 = vpop.f32.mrf.mxu0
        %v3369 = vadd.f32 0.0, %v3368
        %v3370 = vpop.f32.mrf.mxu0
        %3371 = vdwg.mxu0
        %v3372 = vmul.f32 %v3222, %v3364
        %v3373 = vmul.f32 %v3224, %v3369
        %3374 = vmatprep.subr.mxu0 0.0
        %3375 = vmatpush1.msra.mxu0 %v468
        %3376 = vmatprep.subr.mxu0 0.0
        %3377 = vmatpush1.msra.mxu0 %v467
        %3378 = vmatprep.subr.mxu0 0.0
        %3379 = vmatpush1.msra.mxu0 %v466
        %3380 = vmatprep.subr.mxu0 0.0
        %3381 = vmatpush1.msra.mxu0 %v465
        %3382 = vmatprep.subr.mxu0 0.0
        %3383 = vmatpush1.msra.mxu0 %v464
        %3384 = vmatprep.subr.mxu0 0.0
        %3385 = vmatpush1.msra.mxu0 %v463
        %3386 = vmatprep.subr.mxu0 0.0
        %3387 = vmatpush1.msra.mxu0 %v462
        %3388 = vmatprep.subr.mxu0 0.0
        %3389 = vmatpush1.msra.mxu0 %v461
        %3390 = vmatprep.subr.mxu0 0.0
        %3391 = vmatpush1.msra.mxu0 %v460
        %3392 = vmatprep.subr.mxu0 0.0
        %3393 = vmatpush1.msra.mxu0 %v459
        %3394 = vmatprep.subr.mxu0 0.0
        %3395 = vmatpush1.msra.mxu0 %v458
        %3396 = vmatprep.subr.mxu0 0.0
        %3397 = vmatpush1.msra.mxu0 %v457
        %3398 = vmatprep.subr.mxu0 0.0
        %3399 = vmatpush1.msra.mxu0 %v456
        %3400 = vmatprep.subr.mxu0 0.0
        %3401 = vmatpush1.msra.mxu0 %v455
        %3402 = vmatprep.subr.mxu0 0.0
        %3403 = vmatpush1.msra.mxu0 %v454
        %3404 = vmatprep.subr.mxu0 0.0
        %3405 = vmatpush1.msra.mxu0 %v453
        %3406 = vmatprep.subr.mxu0 0.0
        %3407 = vmatpush2.msra.mxu0 0.0
        %3408 = vmatprep.subr.mxu0 0.0
        %3409 = vmatpush2.msra.mxu0 0.0
        %3410 = vmatprep.subr.mxu0 0.0
        %3411 = vmatpush2.msra.mxu0 0.0
        %3412 = vmatprep.subr.mxu0 0.0
        %3413 = vmatpush2.msra.mxu0 0.0
        %3414 = vmatprep.subr.mxu0 0.0
        %3415 = vmatpush2.msra.mxu0 0.0
        %3416 = vmatprep.subr.mxu0 0.0
        %3417 = vmatpush2.msra.mxu0 0.0
        %3418 = vmatprep.subr.mxu0 0.0
        %3419 = vmatpush2.msra.mxu0 0.0
        %3420 = vmatprep.subr.mxu0 0.0
        %3421 = vmatpush2.msra.mxu0 0.0
        %3422 = vmatprep.subr.mxu0 0.0
        %3423 = vmatpush2.msra.mxu0 0.0
        %3424 = vmatprep.subr.mxu0 0.0
        %3425 = vmatpush2.msra.mxu0 0.0
        %3426 = vmatprep.subr.mxu0 0.0
        %3427 = vmatpush2.msra.mxu0 0.0
        %3428 = vmatprep.subr.mxu0 0.0
        %3429 = vmatpush2.msra.mxu0 0.0
        %3430 = vmatprep.subr.mxu0 0.0
        %3431 = vmatpush2.msra.mxu0 0.0
        %3432 = vmatprep.subr.mxu0 0.0
        %3433 = vmatpush2.msra.mxu0 0.0
        %3434 = vmatprep.subr.mxu0 0.0
        %3435 = vmatpush2.msra.mxu0 0.0
        %3436 = vmatprep.subr.mxu0 0.0
        %3437 = vmatpush2.msra.mxu0 0.0
        %3438 = vmatprep.mubr.f32.mxu0 0.0
        %3439 = vmatmul.mubr.f32.gmra.mxu0 %v3372
        %v3440 = vpop.f32.mrf.mxu0
        %v3441 = vadd.f32 0.0, %v3440
        %v3442 = vpop.f32.mrf.mxu0
        %3443 = vmatprep.mubr.f32.mxu0 0.0
        %3444 = vmatmul.mubr.f32.gmra.mxu0 %v3373
        %v3445 = vpop.f32.mrf.mxu0
        %v3446 = vadd.f32 0.0, %v3445
        %v3447 = vpop.f32.mrf.mxu0
        %3448 = vdwg.mxu0
        %3449 = vmatprep.subr.mxu0 0.0
        %3450 = vmatpush1.msra.mxu0 %v484
        %3451 = vmatprep.subr.mxu0 0.0
        %3452 = vmatpush1.msra.mxu0 %v483
        %3453 = vmatprep.subr.mxu0 0.0
        %3454 = vmatpush1.msra.mxu0 %v482
        %3455 = vmatprep.subr.mxu0 0.0
        %3456 = vmatpush1.msra.mxu0 %v481
        %3457 = vmatprep.subr.mxu0 0.0
        %3458 = vmatpush1.msra.mxu0 %v480
        %3459 = vmatprep.subr.mxu0 0.0
        %3460 = vmatpush1.msra.mxu0 %v479
        %3461 = vmatprep.subr.mxu0 0.0
        %3462 = vmatpush1.msra.mxu0 %v478
        %3463 = vmatprep.subr.mxu0 0.0
        %3464 = vmatpush1.msra.mxu0 %v477
        %3465 = vmatprep.subr.mxu0 0.0
        %3466 = vmatpush1.msra.mxu0 %v476
        %3467 = vmatprep.subr.mxu0 0.0
        %3468 = vmatpush1.msra.mxu0 %v475
        %3469 = vmatprep.subr.mxu0 0.0
        %3470 = vmatpush1.msra.mxu0 %v474
        %3471 = vmatprep.subr.mxu0 0.0
        %3472 = vmatpush1.msra.mxu0 %v473
        %3473 = vmatprep.subr.mxu0 0.0
        %3474 = vmatpush1.msra.mxu0 %v472
        %3475 = vmatprep.subr.mxu0 0.0
        %3476 = vmatpush1.msra.mxu0 %v471
        %3477 = vmatprep.subr.mxu0 0.0
        %3478 = vmatpush1.msra.mxu0 %v470
        %3479 = vmatprep.subr.mxu0 0.0
        %3480 = vmatpush1.msra.mxu0 %v469
        %3481 = vmatprep.subr.mxu0 0.0
        %3482 = vmatpush2.msra.mxu0 0.0
        %3483 = vmatprep.subr.mxu0 0.0
        %3484 = vmatpush2.msra.mxu0 0.0
        %3485 = vmatprep.subr.mxu0 0.0
        %3486 = vmatpush2.msra.mxu0 0.0
        %3487 = vmatprep.subr.mxu0 0.0
        %3488 = vmatpush2.msra.mxu0 0.0
        %3489 = vmatprep.subr.mxu0 0.0
        %3490 = vmatpush2.msra.mxu0 0.0
        %3491 = vmatprep.subr.mxu0 0.0
        %3492 = vmatpush2.msra.mxu0 0.0
        %3493 = vmatprep.subr.mxu0 0.0
        %3494 = vmatpush2.msra.mxu0 0.0
        %3495 = vmatprep.subr.mxu0 0.0
        %3496 = vmatpush2.msra.mxu0 0.0
        %3497 = vmatprep.subr.mxu0 0.0
        %3498 = vmatpush2.msra.mxu0 0.0
        %3499 = vmatprep.subr.mxu0 0.0
        %3500 = vmatpush2.msra.mxu0 0.0
        %3501 = vmatprep.subr.mxu0 0.0
        %3502 = vmatpush2.msra.mxu0 0.0
        %3503 = vmatprep.subr.mxu0 0.0
        %3504 = vmatpush2.msra.mxu0 0.0
        %3505 = vmatprep.subr.mxu0 0.0
        %3506 = vmatpush2.msra.mxu0 0.0
        %3507 = vmatprep.subr.mxu0 0.0
        %3508 = vmatpush2.msra.mxu0 0.0
        %3509 = vmatprep.subr.mxu0 0.0
        %3510 = vmatpush2.msra.mxu0 0.0
        %3511 = vmatprep.subr.mxu0 0.0
        %3512 = vmatpush2.msra.mxu0 0.0
        %3513 = vmatprep.mubr.f32.mxu0 0.0
        %3514 = vmatmul.mubr.f32.gmra.mxu0 %v3372
        %v3515 = vpop.f32.mrf.mxu0
        %v3516 = vadd.f32 0.0, %v3515
        %v3517 = vpop.f32.mrf.mxu0
        %3518 = vmatprep.mubr.f32.mxu0 0.0
        %3519 = vmatmul.mubr.f32.gmra.mxu0 %v3373
        %v3520 = vpop.f32.mrf.mxu0
        %v3521 = vadd.f32 0.0, %v3520
        %v3522 = vpop.f32.mrf.mxu0
        %3523 = vdwg.mxu0
        %v3524 = vmul.f32 %v3441, %v2848
        %v3525 = vmul.f32 %v3446, %v2853
        %v3526 = vmul.f32 %v3516, %v2771
        %v3527 = vmul.f32 %v3521, %v2776
        %3528 = vmatprep.subr.mxu0 0.0
        %3529 = vmatpush1.msra.mxu0 0.0
        %3530 = vmatprep.subr.mxu0 0.0
        %3531 = vmatpush1.msra.mxu0 0.0
        %3532 = vmatprep.subr.mxu0 0.0
        %3533 = vmatpush1.msra.mxu0 0.0
        %3534 = vmatprep.subr.mxu0 0.0
        %3535 = vmatpush1.msra.mxu0 0.0
        %3536 = vmatprep.subr.mxu0 0.0
        %3537 = vmatpush1.msra.mxu0 0.0
        %3538 = vmatprep.subr.mxu0 0.0
        %3539 = vmatpush1.msra.mxu0 0.0
        %3540 = vmatprep.subr.mxu0 0.0
        %3541 = vmatpush1.msra.mxu0 0.0
        %3542 = vmatprep.subr.mxu0 0.0
        %3543 = vmatpush1.msra.mxu0 0.0
        %3544 = vmatprep.subr.mxu0 0.0
        %3545 = vmatpush1.msra.mxu0 0.0
        %3546 = vmatprep.subr.mxu0 0.0
        %3547 = vmatpush1.msra.mxu0 0.0
        %3548 = vmatprep.subr.mxu0 0.0
        %3549 = vmatpush1.msra.mxu0 0.0
        %3550 = vmatprep.subr.mxu0 0.0
        %3551 = vmatpush1.msra.mxu0 0.0
        %3552 = vmatprep.subr.mxu0 0.0
        %3553 = vmatpush1.msra.mxu0 0.0
        %3554 = vmatprep.subr.mxu0 0.0
        %3555 = vmatpush1.msra.mxu0 0.0
        %3556 = vmatprep.subr.mxu0 0.0
        %3557 = vmatpush1.msra.mxu0 %v3525
        %3558 = vmatprep.subr.mxu0 0.0
        %3559 = vmatpush1.msra.mxu0 %v3524
        %3560 = vmatprep.subr.mxu0 0.0
        %3561 = vmatpush2.msra.mxu0 0.0
        %3562 = vmatprep.subr.mxu0 0.0
        %3563 = vmatpush2.msra.mxu0 0.0
        %3564 = vmatprep.subr.mxu0 0.0
        %3565 = vmatpush2.msra.mxu0 0.0
        %3566 = vmatprep.subr.mxu0 0.0
        %3567 = vmatpush2.msra.mxu0 0.0
        %3568 = vmatprep.subr.mxu0 0.0
        %3569 = vmatpush2.msra.mxu0 0.0
        %3570 = vmatprep.subr.mxu0 0.0
        %3571 = vmatpush2.msra.mxu0 0.0
        %3572 = vmatprep.subr.mxu0 0.0
        %3573 = vmatpush2.msra.mxu0 0.0
        %3574 = vmatprep.subr.mxu0 0.0
        %3575 = vmatpush2.msra.mxu0 0.0
        %3576 = vmatprep.subr.mxu0 0.0
        %3577 = vmatpush2.msra.mxu0 0.0
        %3578 = vmatprep.subr.mxu0 0.0
        %3579 = vmatpush2.msra.mxu0 0.0
        %3580 = vmatprep.subr.mxu0 0.0
        %3581 = vmatpush2.msra.mxu0 0.0
        %3582 = vmatprep.subr.mxu0 0.0
        %3583 = vmatpush2.msra.mxu0 0.0
        %3584 = vmatprep.subr.mxu0 0.0
        %3585 = vmatpush2.msra.mxu0 0.0
        %3586 = vmatprep.subr.mxu0 0.0
        %3587 = vmatpush2.msra.mxu0 0.0
        %3588 = vmatprep.subr.mxu0 0.0
        %3589 = vmatpush2.msra.mxu0 0.0
        %3590 = vmatprep.subr.mxu0 0.0
        %3591 = vmatpush2.msra.mxu0 0.0
        %3592 = vmatprep.mubr.f32.mxu0 0.0
        %3593 = vmatmul.mubr.f32.gmra.mxu0 %v1137
        %v3594 = vpop.f32.mrf.mxu0
        %v3595 = vadd.f32 %v2681, %v3594
        %v3596 = vpop.f32.mrf.mxu0
        %3597 = vdwg.mxu0
        %v3598 = vmax.f32 %v3595, 0.0
        %3599 = vmatprep.subr.mxu0 0.0
        %3600 = vmatpush1.msra.mxu0 0.0
        %3601 = vmatprep.subr.mxu0 0.0
        %3602 = vmatpush1.msra.mxu0 0.0
        %3603 = vmatprep.subr.mxu0 0.0
        %3604 = vmatpush1.msra.mxu0 0.0
        %3605 = vmatprep.subr.mxu0 0.0
        %3606 = vmatpush1.msra.mxu0 0.0
        %3607 = vmatprep.subr.mxu0 0.0
        %3608 = vmatpush1.msra.mxu0 0.0
        %3609 = vmatprep.subr.mxu0 0.0
        %3610 = vmatpush1.msra.mxu0 0.0
        %3611 = vmatprep.subr.mxu0 0.0
        %3612 = vmatpush1.msra.mxu0 0.0
        %3613 = vmatprep.subr.mxu0 0.0
        %3614 = vmatpush1.msra.mxu0 0.0
        %3615 = vmatprep.subr.mxu0 0.0
        %3616 = vmatpush1.msra.mxu0 0.0
        %3617 = vmatprep.subr.mxu0 0.0
        %3618 = vmatpush1.msra.mxu0 0.0
        %3619 = vmatprep.subr.mxu0 0.0
        %3620 = vmatpush1.msra.mxu0 0.0
        %3621 = vmatprep.subr.mxu0 0.0
        %3622 = vmatpush1.msra.mxu0 0.0
        %3623 = vmatprep.subr.mxu0 0.0
        %3624 = vmatpush1.msra.mxu0 0.0
        %3625 = vmatprep.subr.mxu0 0.0
        %3626 = vmatpush1.msra.mxu0 0.0
        %3627 = vmatprep.subr.mxu0 0.0
        %3628 = vmatpush1.msra.mxu0 %v3527
        %3629 = vmatprep.subr.mxu0 0.0
        %3630 = vmatpush1.msra.mxu0 %v3526
        %3631 = vmatprep.subr.mxu0 0.0
        %3632 = vmatpush2.msra.mxu0 0.0
        %3633 = vmatprep.subr.mxu0 0.0
        %3634 = vmatpush2.msra.mxu0 0.0
        %3635 = vmatprep.subr.mxu0 0.0
        %3636 = vmatpush2.msra.mxu0 0.0
        %3637 = vmatprep.subr.mxu0 0.0
        %3638 = vmatpush2.msra.mxu0 0.0
        %3639 = vmatprep.subr.mxu0 0.0
        %3640 = vmatpush2.msra.mxu0 0.0
        %3641 = vmatprep.subr.mxu0 0.0
        %3642 = vmatpush2.msra.mxu0 0.0
        %3643 = vmatprep.subr.mxu0 0.0
        %3644 = vmatpush2.msra.mxu0 0.0
        %3645 = vmatprep.subr.mxu0 0.0
        %3646 = vmatpush2.msra.mxu0 0.0
        %3647 = vmatprep.subr.mxu0 0.0
        %3648 = vmatpush2.msra.mxu0 0.0
        %3649 = vmatprep.subr.mxu0 0.0
        %3650 = vmatpush2.msra.mxu0 0.0
        %3651 = vmatprep.subr.mxu0 0.0
        %3652 = vmatpush2.msra.mxu0 0.0
        %3653 = vmatprep.subr.mxu0 0.0
        %3654 = vmatpush2.msra.mxu0 0.0
        %3655 = vmatprep.subr.mxu0 0.0
        %3656 = vmatpush2.msra.mxu0 0.0
        %3657 = vmatprep.subr.mxu0 0.0
        %3658 = vmatpush2.msra.mxu0 0.0
        %3659 = vmatprep.subr.mxu0 0.0
        %3660 = vmatpush2.msra.mxu0 0.0
        %3661 = vmatprep.subr.mxu0 0.0
        %3662 = vmatpush2.msra.mxu0 0.0
        %3663 = vmatprep.mubr.f32.mxu0 0.0
        %3664 = vmatmul.mubr.f32.gmra.mxu0 %v1137
        %v3665 = vpop.f32.mrf.mxu0
        %v3666 = vadd.f32 %v2681, %v3665
        %v3667 = vpop.f32.mrf.mxu0
        %3668 = vdwg.mxu0
        %v3669 = vmax.f32 %v3666, 0.0
        %v3670 = vld [vmem:[#allocation2 + $0xb88] sm:$0xff]
        %v3671 = vld [vmem:[#allocation2 + $0xb90] sm:$0xff]
        %v3672 = vld [vmem:[#allocation2 + $0xb98] sm:$0xff]
        %v3673 = vld [vmem:[#allocation2 + $0xba0] sm:$0xff]
        %v3674 = vld [vmem:[#allocation2 + $0xba8] sm:$0xff]
        %v3675 = vld [vmem:[#allocation2 + $0xbb0] sm:$0xff]
        %v3676 = vld [vmem:[#allocation2 + $0xbb8] sm:$0xff]
        %v3677 = vld [vmem:[#allocation2 + $0xbc0] sm:$0xff]
        %v3678 = vld [vmem:[#allocation2 + $0xbc8] sm:$0xff]
        %v3679 = vld [vmem:[#allocation2 + $0xbd0] sm:$0xff]
        %v3680 = vld [vmem:[#allocation2 + $0xbd8] sm:$0xff]
        %v3681 = vld [vmem:[#allocation2 + $0xbe0] sm:$0xff]
        %v3682 = vld [vmem:[#allocation2 + $0xbe8] sm:$0xff]
        %v3683 = vld [vmem:[#allocation2 + $0xbf0] sm:$0xff]
        %v3684 = vld [vmem:[#allocation2 + $0xbf8] sm:$0xff]
        %v3685 = vld [vmem:[#allocation2 + $0xc00] sm:$0xff]
        %v3686 = vld [vmem:[#allocation2 + $0xc08] sm:$0xff]
        %v3687 = vld [vmem:[#allocation2 + $0xc10] sm:$0xff]
        %v3688 = vld [vmem:[#allocation2 + $0xc18] sm:$0xff]
        %v3689 = vld [vmem:[#allocation2 + $0xc20] sm:$0xff]
        %v3690 = vld [vmem:[#allocation2 + $0xc28] sm:$0xff]
        %v3691 = vld [vmem:[#allocation2 + $0xc30] sm:$0xff]
        %v3692 = vld [vmem:[#allocation2 + $0xc38] sm:$0xff]
        %v3693 = vld [vmem:[#allocation2 + $0xc40] sm:$0xff]
        %v3694 = vld [vmem:[#allocation2 + $0xc48] sm:$0xff]
        %v3695 = vld [vmem:[#allocation2 + $0xc50] sm:$0xff]
        %v3696 = vld [vmem:[#allocation2 + $0xc58] sm:$0xff]
        %v3697 = vld [vmem:[#allocation2 + $0xc60] sm:$0xff]
        %v3698 = vld [vmem:[#allocation2 + $0xc68] sm:$0xff]
        %v3699 = vld [vmem:[#allocation2 + $0xc70] sm:$0xff]
        %v3700 = vld [vmem:[#allocation2 + $0xc78] sm:$0xff]
        %v3701 = vld [vmem:[#allocation2 + $0xc80] sm:$0xff]
        %3702 = vmatprep.subr.mxu0 0.0
        %3703 = vmatpush1.msra.mxu0 %v3701
        %3704 = vmatprep.subr.mxu0 0.0
        %3705 = vmatpush1.msra.mxu0 %v3700
        %3706 = vmatprep.subr.mxu0 0.0
        %3707 = vmatpush1.msra.mxu0 %v3699
        %3708 = vmatprep.subr.mxu0 0.0
        %3709 = vmatpush1.msra.mxu0 %v3698
        %3710 = vmatprep.subr.mxu0 0.0
        %3711 = vmatpush1.msra.mxu0 %v3697
        %3712 = vmatprep.subr.mxu0 0.0
        %3713 = vmatpush1.msra.mxu0 %v3696
        %3714 = vmatprep.subr.mxu0 0.0
        %3715 = vmatpush1.msra.mxu0 %v3695
        %3716 = vmatprep.subr.mxu0 0.0
        %3717 = vmatpush1.msra.mxu0 %v3694
        %3718 = vmatprep.subr.mxu0 0.0
        %3719 = vmatpush1.msra.mxu0 %v3693
        %3720 = vmatprep.subr.mxu0 0.0
        %3721 = vmatpush1.msra.mxu0 %v3692
        %3722 = vmatprep.subr.mxu0 0.0
        %3723 = vmatpush1.msra.mxu0 %v3691
        %3724 = vmatprep.subr.mxu0 0.0
        %3725 = vmatpush1.msra.mxu0 %v3690
        %3726 = vmatprep.subr.mxu0 0.0
        %3727 = vmatpush1.msra.mxu0 %v3689
        %3728 = vmatprep.subr.mxu0 0.0
        %3729 = vmatpush1.msra.mxu0 %v3688
        %3730 = vmatprep.subr.mxu0 0.0
        %3731 = vmatpush1.msra.mxu0 %v3687
        %3732 = vmatprep.subr.mxu0 0.0
        %3733 = vmatpush1.msra.mxu0 %v3686
        %3734 = vmatprep.subr.mxu0 0.0
        %3735 = vmatpush2.msra.mxu0 0.0
        %3736 = vmatprep.subr.mxu0 0.0
        %3737 = vmatpush2.msra.mxu0 0.0
        %3738 = vmatprep.subr.mxu0 0.0
        %3739 = vmatpush2.msra.mxu0 0.0
        %3740 = vmatprep.subr.mxu0 0.0
        %3741 = vmatpush2.msra.mxu0 0.0
        %3742 = vmatprep.subr.mxu0 0.0
        %3743 = vmatpush2.msra.mxu0 0.0
        %3744 = vmatprep.subr.mxu0 0.0
        %3745 = vmatpush2.msra.mxu0 0.0
        %3746 = vmatprep.subr.mxu0 0.0
        %3747 = vmatpush2.msra.mxu0 0.0
        %3748 = vmatprep.subr.mxu0 0.0
        %3749 = vmatpush2.msra.mxu0 0.0
        %3750 = vmatprep.subr.mxu0 0.0
        %3751 = vmatpush2.msra.mxu0 0.0
        %3752 = vmatprep.subr.mxu0 0.0
        %3753 = vmatpush2.msra.mxu0 0.0
        %3754 = vmatprep.subr.mxu0 0.0
        %3755 = vmatpush2.msra.mxu0 0.0
        %3756 = vmatprep.subr.mxu0 0.0
        %3757 = vmatpush2.msra.mxu0 0.0
        %3758 = vmatprep.subr.mxu0 0.0
        %3759 = vmatpush2.msra.mxu0 0.0
        %3760 = vmatprep.subr.mxu0 0.0
        %3761 = vmatpush2.msra.mxu0 0.0
        %3762 = vmatprep.subr.mxu0 0.0
        %3763 = vmatpush2.msra.mxu0 0.0
        %3764 = vmatprep.subr.mxu0 0.0
        %3765 = vmatpush2.msra.mxu0 0.0
        %3766 = vmatprep.mubr.f32.mxu0 0.0
        %3767 = vmatmul.mubr.f32.gmra.mxu0 %v3669
        %v3768 = vpop.f32.mrf.mxu0
        %v3769 = vadd.f32 0.0, %v3768
        %v3770 = vpop.f32.mrf.mxu0
        %3771 = vdwg.mxu0
        %3772 = vmatprep.subr.mxu0 0.0
        %3773 = vmatpush1.msra.mxu0 %v3685
        %3774 = vmatprep.subr.mxu0 0.0
        %3775 = vmatpush1.msra.mxu0 %v3684
        %3776 = vmatprep.subr.mxu0 0.0
        %3777 = vmatpush1.msra.mxu0 %v3683
        %3778 = vmatprep.subr.mxu0 0.0
        %3779 = vmatpush1.msra.mxu0 %v3682
        %3780 = vmatprep.subr.mxu0 0.0
        %3781 = vmatpush1.msra.mxu0 %v3681
        %3782 = vmatprep.subr.mxu0 0.0
        %3783 = vmatpush1.msra.mxu0 %v3680
        %3784 = vmatprep.subr.mxu0 0.0
        %3785 = vmatpush1.msra.mxu0 %v3679
        %3786 = vmatprep.subr.mxu0 0.0
        %3787 = vmatpush1.msra.mxu0 %v3678
        %3788 = vmatprep.subr.mxu0 0.0
        %3789 = vmatpush1.msra.mxu0 %v3677
        %3790 = vmatprep.subr.mxu0 0.0
        %3791 = vmatpush1.msra.mxu0 %v3676
        %3792 = vmatprep.subr.mxu0 0.0
        %3793 = vmatpush1.msra.mxu0 %v3675
        %3794 = vmatprep.subr.mxu0 0.0
        %3795 = vmatpush1.msra.mxu0 %v3674
        %3796 = vmatprep.subr.mxu0 0.0
        %3797 = vmatpush1.msra.mxu0 %v3673
        %3798 = vmatprep.subr.mxu0 0.0
        %3799 = vmatpush1.msra.mxu0 %v3672
        %3800 = vmatprep.subr.mxu0 0.0
        %3801 = vmatpush1.msra.mxu0 %v3671
        %3802 = vmatprep.subr.mxu0 0.0
        %3803 = vmatpush1.msra.mxu0 %v3670
        %3804 = vmatprep.subr.mxu0 0.0
        %3805 = vmatpush2.msra.mxu0 0.0
        %3806 = vmatprep.subr.mxu0 0.0
        %3807 = vmatpush2.msra.mxu0 0.0
        %3808 = vmatprep.subr.mxu0 0.0
        %3809 = vmatpush2.msra.mxu0 0.0
        %3810 = vmatprep.subr.mxu0 0.0
        %3811 = vmatpush2.msra.mxu0 0.0
        %3812 = vmatprep.subr.mxu0 0.0
        %3813 = vmatpush2.msra.mxu0 0.0
        %3814 = vmatprep.subr.mxu0 0.0
        %3815 = vmatpush2.msra.mxu0 0.0
        %3816 = vmatprep.subr.mxu0 0.0
        %3817 = vmatpush2.msra.mxu0 0.0
        %3818 = vmatprep.subr.mxu0 0.0
        %3819 = vmatpush2.msra.mxu0 0.0
        %3820 = vmatprep.subr.mxu0 0.0
        %3821 = vmatpush2.msra.mxu0 0.0
        %3822 = vmatprep.subr.mxu0 0.0
        %3823 = vmatpush2.msra.mxu0 0.0
        %3824 = vmatprep.subr.mxu0 0.0
        %3825 = vmatpush2.msra.mxu0 0.0
        %3826 = vmatprep.subr.mxu0 0.0
        %3827 = vmatpush2.msra.mxu0 0.0
        %3828 = vmatprep.subr.mxu0 0.0
        %3829 = vmatpush2.msra.mxu0 0.0
        %3830 = vmatprep.subr.mxu0 0.0
        %3831 = vmatpush2.msra.mxu0 0.0
        %3832 = vmatprep.subr.mxu0 0.0
        %3833 = vmatpush2.msra.mxu0 0.0
        %3834 = vmatprep.subr.mxu0 0.0
        %3835 = vmatpush2.msra.mxu0 0.0
        %3836 = vmatprep.mubr.f32.mxu0 0.0
        %3837 = vmatmul.mubr.f32.gmra.mxu0 %v3598
        %v3838 = vpop.f32.mrf.mxu0
        %v3839 = vadd.f32 %v3769, %v3838
        %v3840 = vpop.f32.mrf.mxu0
        %3841 = vdwg.mxu0
        %v3842 = vlaneseq
        %v3843 = vshrl.u32 %v3842, 7
        %v3844 = vsub.s32 2, %v3843
        %v3845 = vrot.slane %v2593, %v3844
        %v3846 = vadd.f32 %v3839, %v3845
        %v3847 = vmax.f32 %v3846, 0.0
        %v3848 = vld [vmem:[#allocation2 + $0xc88] sm:$0xff]
        %v3849 = vld [vmem:[#allocation2 + $0xc90] sm:$0xff]
        %v3850 = vld [vmem:[#allocation2 + $0xc98] sm:$0xff]
        %v3851 = vld [vmem:[#allocation2 + $0xca0] sm:$0xff]
        %v3852 = vld [vmem:[#allocation2 + $0xca8] sm:$0xff]
        %v3853 = vld [vmem:[#allocation2 + $0xcb0] sm:$0xff]
        %v3854 = vld [vmem:[#allocation2 + $0xcb8] sm:$0xff]
        %v3855 = vld [vmem:[#allocation2 + $0xcc0] sm:$0xff]
        %v3856 = vld [vmem:[#allocation2 + $0xcc8] sm:$0xff]
        %v3857 = vld [vmem:[#allocation2 + $0xcd0] sm:$0xff]
        %v3858 = vld [vmem:[#allocation2 + $0xcd8] sm:$0xff]
        %v3859 = vld [vmem:[#allocation2 + $0xce0] sm:$0xff]
        %v3860 = vld [vmem:[#allocation2 + $0xce8] sm:$0xff]
        %v3861 = vld [vmem:[#allocation2 + $0xcf0] sm:$0xff]
        %v3862 = vld [vmem:[#allocation2 + $0xcf8] sm:$0xff]
        %v3863 = vld [vmem:[#allocation2 + $0xd00] sm:$0xff]
        %3864 = vmatprep.subr.mxu0 0.0
        %3865 = vmatpush1.msra.mxu0 %v3863
        %3866 = vmatprep.subr.mxu0 0.0
        %3867 = vmatpush1.msra.mxu0 %v3862
        %3868 = vmatprep.subr.mxu0 0.0
        %3869 = vmatpush1.msra.mxu0 %v3861
        %3870 = vmatprep.subr.mxu0 0.0
        %3871 = vmatpush1.msra.mxu0 %v3860
        %3872 = vmatprep.subr.mxu0 0.0
        %3873 = vmatpush1.msra.mxu0 %v3859
        %3874 = vmatprep.subr.mxu0 0.0
        %3875 = vmatpush1.msra.mxu0 %v3858
        %3876 = vmatprep.subr.mxu0 0.0
        %3877 = vmatpush1.msra.mxu0 %v3857
        %3878 = vmatprep.subr.mxu0 0.0
        %3879 = vmatpush1.msra.mxu0 %v3856
        %3880 = vmatprep.subr.mxu0 0.0
        %3881 = vmatpush1.msra.mxu0 %v3855
        %3882 = vmatprep.subr.mxu0 0.0
        %3883 = vmatpush1.msra.mxu0 %v3854
        %3884 = vmatprep.subr.mxu0 0.0
        %3885 = vmatpush1.msra.mxu0 %v3853
        %3886 = vmatprep.subr.mxu0 0.0
        %3887 = vmatpush1.msra.mxu0 %v3852
        %3888 = vmatprep.subr.mxu0 0.0
        %3889 = vmatpush1.msra.mxu0 %v3851
        %3890 = vmatprep.subr.mxu0 0.0
        %3891 = vmatpush1.msra.mxu0 %v3850
        %3892 = vmatprep.subr.mxu0 0.0
        %3893 = vmatpush1.msra.mxu0 %v3849
        %3894 = vmatprep.subr.mxu0 0.0
        %3895 = vmatpush1.msra.mxu0 %v3848
        %3896 = vmatprep.subr.mxu0 0.0
        %3897 = vmatpush2.msra.mxu0 0.0
        %3898 = vmatprep.subr.mxu0 0.0
        %3899 = vmatpush2.msra.mxu0 0.0
        %3900 = vmatprep.subr.mxu0 0.0
        %3901 = vmatpush2.msra.mxu0 0.0
        %3902 = vmatprep.subr.mxu0 0.0
        %3903 = vmatpush2.msra.mxu0 0.0
        %3904 = vmatprep.subr.mxu0 0.0
        %3905 = vmatpush2.msra.mxu0 0.0
        %3906 = vmatprep.subr.mxu0 0.0
        %3907 = vmatpush2.msra.mxu0 0.0
        %3908 = vmatprep.subr.mxu0 0.0
        %3909 = vmatpush2.msra.mxu0 0.0
        %3910 = vmatprep.subr.mxu0 0.0
        %3911 = vmatpush2.msra.mxu0 0.0
        %3912 = vmatprep.subr.mxu0 0.0
        %3913 = vmatpush2.msra.mxu0 0.0
        %3914 = vmatprep.subr.mxu0 0.0
        %3915 = vmatpush2.msra.mxu0 0.0
        %3916 = vmatprep.subr.mxu0 0.0
        %3917 = vmatpush2.msra.mxu0 0.0
        %3918 = vmatprep.subr.mxu0 0.0
        %3919 = vmatpush2.msra.mxu0 0.0
        %3920 = vmatprep.subr.mxu0 0.0
        %3921 = vmatpush2.msra.mxu0 0.0
        %3922 = vmatprep.subr.mxu0 0.0
        %3923 = vmatpush2.msra.mxu0 0.0
        %3924 = vmatprep.subr.mxu0 0.0
        %3925 = vmatpush2.msra.mxu0 0.0
        %3926 = vmatprep.subr.mxu0 0.0
        %3927 = vmatpush2.msra.mxu0 0.0
        %3928 = vmatprep.mubr.f32.mxu0 0.0
        %3929 = vmatmul.mubr.f32.gmra.mxu0 %v2681
        %v3930 = vpop.f32.mrf.mxu0
        %v3931 = vadd.f32 0.0, %v3930
        %v3932 = vpop.f32.mrf.mxu0
        %3933 = vdwg.mxu0
        %v3934 = vld [vmem:[#allocation2 + $0xd08] sm:$0xff]
        %v3935 = vld [vmem:[#allocation2 + $0xd10] sm:$0xff]
        %v3936 = vld [vmem:[#allocation2 + $0xd18] sm:$0xff]
        %v3937 = vld [vmem:[#allocation2 + $0xd20] sm:$0xff]
        %v3938 = vld [vmem:[#allocation2 + $0xd28] sm:$0xff]
        %v3939 = vld [vmem:[#allocation2 + $0xd30] sm:$0xff]
        %v3940 = vld [vmem:[#allocation2 + $0xd38] sm:$0xff]
        %v3941 = vld [vmem:[#allocation2 + $0xd40] sm:$0xff]
        %v3942 = vld [vmem:[#allocation2 + $0xd48] sm:$0xff]
        %v3943 = vld [vmem:[#allocation2 + $0xd50] sm:$0xff]
        %v3944 = vld [vmem:[#allocation2 + $0xd58] sm:$0xff]
        %v3945 = vld [vmem:[#allocation2 + $0xd60] sm:$0xff]
        %v3946 = vld [vmem:[#allocation2 + $0xd68] sm:$0xff]
        %v3947 = vld [vmem:[#allocation2 + $0xd70] sm:$0xff]
        %v3948 = vld [vmem:[#allocation2 + $0xd78] sm:$0xff]
        %v3949 = vld [vmem:[#allocation2 + $0xd80] sm:$0xff]
        %v3950 = vld [vmem:[#allocation2 + $0xd88] sm:$0xff]
        %v3951 = vld [vmem:[#allocation2 + $0xd90] sm:$0xff]
        %v3952 = vld [vmem:[#allocation2 + $0xd98] sm:$0xff]
        %v3953 = vld [vmem:[#allocation2 + $0xda0] sm:$0xff]
        %v3954 = vld [vmem:[#allocation2 + $0xda8] sm:$0xff]
        %v3955 = vld [vmem:[#allocation2 + $0xdb0] sm:$0xff]
        %v3956 = vld [vmem:[#allocation2 + $0xdb8] sm:$0xff]
        %v3957 = vld [vmem:[#allocation2 + $0xdc0] sm:$0xff]
        %v3958 = vld [vmem:[#allocation2 + $0xdc8] sm:$0xff]
        %v3959 = vld [vmem:[#allocation2 + $0xdd0] sm:$0xff]
        %v3960 = vld [vmem:[#allocation2 + $0xdd8] sm:$0xff]
        %v3961 = vld [vmem:[#allocation2 + $0xde0] sm:$0xff]
        %v3962 = vld [vmem:[#allocation2 + $0xde8] sm:$0xff]
        %v3963 = vld [vmem:[#allocation2 + $0xdf0] sm:$0xff]
        %v3964 = vld [vmem:[#allocation2 + $0xdf8] sm:$0xff]
        %v3965 = vld [vmem:[#allocation2 + $0xe00] sm:$0xff]
        %3966 = vmatprep.subr.mxu0 0.0
        %3967 = vmatpush1.msra.mxu0 %v3965
        %3968 = vmatprep.subr.mxu0 0.0
        %3969 = vmatpush1.msra.mxu0 %v3964
        %3970 = vmatprep.subr.mxu0 0.0
        %3971 = vmatpush1.msra.mxu0 %v3963
        %3972 = vmatprep.subr.mxu0 0.0
        %3973 = vmatpush1.msra.mxu0 %v3962
        %3974 = vmatprep.subr.mxu0 0.0
        %3975 = vmatpush1.msra.mxu0 %v3961
        %3976 = vmatprep.subr.mxu0 0.0
        %3977 = vmatpush1.msra.mxu0 %v3960
        %3978 = vmatprep.subr.mxu0 0.0
        %3979 = vmatpush1.msra.mxu0 %v3959
        %3980 = vmatprep.subr.mxu0 0.0
        %3981 = vmatpush1.msra.mxu0 %v3958
        %3982 = vmatprep.subr.mxu0 0.0
        %3983 = vmatpush1.msra.mxu0 %v3957
        %3984 = vmatprep.subr.mxu0 0.0
        %3985 = vmatpush1.msra.mxu0 %v3956
        %3986 = vmatprep.subr.mxu0 0.0
        %3987 = vmatpush1.msra.mxu0 %v3955
        %3988 = vmatprep.subr.mxu0 0.0
        %3989 = vmatpush1.msra.mxu0 %v3954
        %3990 = vmatprep.subr.mxu0 0.0
        %3991 = vmatpush1.msra.mxu0 %v3953
        %3992 = vmatprep.subr.mxu0 0.0
        %3993 = vmatpush1.msra.mxu0 %v3952
        %3994 = vmatprep.subr.mxu0 0.0
        %3995 = vmatpush1.msra.mxu0 %v3951
        %3996 = vmatprep.subr.mxu0 0.0
        %3997 = vmatpush1.msra.mxu0 %v3950
        %3998 = vmatprep.subr.mxu0 0.0
        %3999 = vmatpush2.msra.mxu0 0.0
        %4000 = vmatprep.subr.mxu0 0.0
        %4001 = vmatpush2.msra.mxu0 0.0
        %4002 = vmatprep.subr.mxu0 0.0
        %4003 = vmatpush2.msra.mxu0 0.0
        %4004 = vmatprep.subr.mxu0 0.0
        %4005 = vmatpush2.msra.mxu0 0.0
        %4006 = vmatprep.subr.mxu0 0.0
        %4007 = vmatpush2.msra.mxu0 0.0
        %4008 = vmatprep.subr.mxu0 0.0
        %4009 = vmatpush2.msra.mxu0 0.0
        %4010 = vmatprep.subr.mxu0 0.0
        %4011 = vmatpush2.msra.mxu0 0.0
        %4012 = vmatprep.subr.mxu0 0.0
        %4013 = vmatpush2.msra.mxu0 0.0
        %4014 = vmatprep.subr.mxu0 0.0
        %4015 = vmatpush2.msra.mxu0 0.0
        %4016 = vmatprep.subr.mxu0 0.0
        %4017 = vmatpush2.msra.mxu0 0.0
        %4018 = vmatprep.subr.mxu0 0.0
        %4019 = vmatpush2.msra.mxu0 0.0
        %4020 = vmatprep.subr.mxu0 0.0
        %4021 = vmatpush2.msra.mxu0 0.0
        %4022 = vmatprep.subr.mxu0 0.0
        %4023 = vmatpush2.msra.mxu0 0.0
        %4024 = vmatprep.subr.mxu0 0.0
        %4025 = vmatpush2.msra.mxu0 0.0
        %4026 = vmatprep.subr.mxu0 0.0
        %4027 = vmatpush2.msra.mxu0 0.0
        %4028 = vmatprep.subr.mxu0 0.0
        %4029 = vmatpush2.msra.mxu0 0.0
        %4030 = vmatprep.mubr.f32.mxu0 0.0
        %4031 = vmatmul.mubr.f32.gmra.mxu0 %v3931
        %v4032 = vpop.f32.mrf.mxu0
        %v4033 = vadd.f32 0.0, %v4032
        %v4034 = vpop.f32.mrf.mxu0
        %4035 = vdwg.mxu0
        %4036 = vmatprep.subr.mxu0 0.0
        %4037 = vmatpush1.msra.mxu0 %v3949
        %4038 = vmatprep.subr.mxu0 0.0
        %4039 = vmatpush1.msra.mxu0 %v3948
        %4040 = vmatprep.subr.mxu0 0.0
        %4041 = vmatpush1.msra.mxu0 %v3947
        %4042 = vmatprep.subr.mxu0 0.0
        %4043 = vmatpush1.msra.mxu0 %v3946
        %4044 = vmatprep.subr.mxu0 0.0
        %4045 = vmatpush1.msra.mxu0 %v3945
        %4046 = vmatprep.subr.mxu0 0.0
        %4047 = vmatpush1.msra.mxu0 %v3944
        %4048 = vmatprep.subr.mxu0 0.0
        %4049 = vmatpush1.msra.mxu0 %v3943
        %4050 = vmatprep.subr.mxu0 0.0
        %4051 = vmatpush1.msra.mxu0 %v3942
        %4052 = vmatprep.subr.mxu0 0.0
        %4053 = vmatpush1.msra.mxu0 %v3941
        %4054 = vmatprep.subr.mxu0 0.0
        %4055 = vmatpush1.msra.mxu0 %v3940
        %4056 = vmatprep.subr.mxu0 0.0
        %4057 = vmatpush1.msra.mxu0 %v3939
        %4058 = vmatprep.subr.mxu0 0.0
        %4059 = vmatpush1.msra.mxu0 %v3938
        %4060 = vmatprep.subr.mxu0 0.0
        %4061 = vmatpush1.msra.mxu0 %v3937
        %4062 = vmatprep.subr.mxu0 0.0
        %4063 = vmatpush1.msra.mxu0 %v3936
        %4064 = vmatprep.subr.mxu0 0.0
        %4065 = vmatpush1.msra.mxu0 %v3935
        %4066 = vmatprep.subr.mxu0 0.0
        %4067 = vmatpush1.msra.mxu0 %v3934
        %4068 = vmatprep.subr.mxu0 0.0
        %4069 = vmatpush2.msra.mxu0 0.0
        %4070 = vmatprep.subr.mxu0 0.0
        %4071 = vmatpush2.msra.mxu0 0.0
        %4072 = vmatprep.subr.mxu0 0.0
        %4073 = vmatpush2.msra.mxu0 0.0
        %4074 = vmatprep.subr.mxu0 0.0
        %4075 = vmatpush2.msra.mxu0 0.0
        %4076 = vmatprep.subr.mxu0 0.0
        %4077 = vmatpush2.msra.mxu0 0.0
        %4078 = vmatprep.subr.mxu0 0.0
        %4079 = vmatpush2.msra.mxu0 0.0
        %4080 = vmatprep.subr.mxu0 0.0
        %4081 = vmatpush2.msra.mxu0 0.0
        %4082 = vmatprep.subr.mxu0 0.0
        %4083 = vmatpush2.msra.mxu0 0.0
        %4084 = vmatprep.subr.mxu0 0.0
        %4085 = vmatpush2.msra.mxu0 0.0
        %4086 = vmatprep.subr.mxu0 0.0
        %4087 = vmatpush2.msra.mxu0 0.0
        %4088 = vmatprep.subr.mxu0 0.0
        %4089 = vmatpush2.msra.mxu0 0.0
        %4090 = vmatprep.subr.mxu0 0.0
        %4091 = vmatpush2.msra.mxu0 0.0
        %4092 = vmatprep.subr.mxu0 0.0
        %4093 = vmatpush2.msra.mxu0 0.0
        %4094 = vmatprep.subr.mxu0 0.0
        %4095 = vmatpush2.msra.mxu0 0.0
        %4096 = vmatprep.subr.mxu0 0.0
        %4097 = vmatpush2.msra.mxu0 0.0
        %4098 = vmatprep.subr.mxu0 0.0
        %4099 = vmatpush2.msra.mxu0 0.0
        %4100 = vmatprep.mubr.f32.mxu0 0.0
        %4101 = vmatmul.mubr.f32.gmra.mxu0 %v3847
        %v4102 = vpop.f32.mrf.mxu0
        %v4103 = vadd.f32 %v4033, %v4102
        %v4104 = vpop.f32.mrf.mxu0
        %4105 = vdwg.mxu0
        %v4106 = vlaneseq
        %v4107 = vshrl.u32 %v4106, 7
        %v4108 = vsub.s32 3, %v4107
        %v4109 = vrot.slane %v2593, %v4108
        %v4110 = vadd.f32 %v4103, %v4109
        %v4111 = vxor.u32 %v4110, 2147483648
        %v4112 = vmul.f32 %v4111, 1.442695
        %v4113 = vpow.pop %v4112
        %v4114 = vadd.f32 %v4113, 1.0
        %v4115 = vrcp.pop %v4114
        %v4116 = vmul.f32 1.0, %v4115
        %v4117 = vld [vmem:[#allocation2 + $0xe08] sm:$0xff]
        %v4118 = vld [vmem:[#allocation2 + $0xe10] sm:$0xff]
        %v4119 = vld [vmem:[#allocation2 + $0xe18] sm:$0xff]
        %v4120 = vld [vmem:[#allocation2 + $0xe20] sm:$0xff]
        %v4121 = vld [vmem:[#allocation2 + $0xe28] sm:$0xff]
        %v4122 = vld [vmem:[#allocation2 + $0xe30] sm:$0xff]
        %v4123 = vld [vmem:[#allocation2 + $0xe38] sm:$0xff]
        %v4124 = vld [vmem:[#allocation2 + $0xe40] sm:$0xff]
        %v4125 = vld [vmem:[#allocation2 + $0xe48] sm:$0xff]
        %v4126 = vld [vmem:[#allocation2 + $0xe50] sm:$0xff]
        %v4127 = vld [vmem:[#allocation2 + $0xe58] sm:$0xff]
        %v4128 = vld [vmem:[#allocation2 + $0xe60] sm:$0xff]
        %v4129 = vld [vmem:[#allocation2 + $0xe68] sm:$0xff]
        %v4130 = vld [vmem:[#allocation2 + $0xe70] sm:$0xff]
        %v4131 = vld [vmem:[#allocation2 + $0xe78] sm:$0xff]
        %v4132 = vld [vmem:[#allocation2 + $0xe80] sm:$0xff]
        %v4133 = vld [vmem:[#allocation2 + $0xe88] sm:$0xff]
        %v4134 = vld [vmem:[#allocation2 + $0xe90] sm:$0xff]
        %v4135 = vld [vmem:[#allocation2 + $0xe98] sm:$0xff]
        %v4136 = vld [vmem:[#allocation2 + $0xea0] sm:$0xff]
        %v4137 = vld [vmem:[#allocation2 + $0xea8] sm:$0xff]
        %v4138 = vld [vmem:[#allocation2 + $0xeb0] sm:$0xff]
        %v4139 = vld [vmem:[#allocation2 + $0xeb8] sm:$0xff]
        %v4140 = vld [vmem:[#allocation2 + $0xec0] sm:$0xff]
        %v4141 = vld [vmem:[#allocation2 + $0xec8] sm:$0xff]
        %v4142 = vld [vmem:[#allocation2 + $0xed0] sm:$0xff]
        %v4143 = vld [vmem:[#allocation2 + $0xed8] sm:$0xff]
        %v4144 = vld [vmem:[#allocation2 + $0xee0] sm:$0xff]
        %v4145 = vld [vmem:[#allocation2 + $0xee8] sm:$0xff]
        %v4146 = vld [vmem:[#allocation2 + $0xef0] sm:$0xff]
        %v4147 = vld [vmem:[#allocation2 + $0xef8] sm:$0xff]
        %v4148 = vld [vmem:[#allocation2 + $0xf00] sm:$0xff]
        %4149 = vmatprep.subr.mxu0 0.0
        %4150 = vmatpush1.msra.mxu0 %v4148
        %4151 = vmatprep.subr.mxu0 0.0
        %4152 = vmatpush1.msra.mxu0 %v4147
        %4153 = vmatprep.subr.mxu0 0.0
        %4154 = vmatpush1.msra.mxu0 %v4146
        %4155 = vmatprep.subr.mxu0 0.0
        %4156 = vmatpush1.msra.mxu0 %v4145
        %4157 = vmatprep.subr.mxu0 0.0
        %4158 = vmatpush1.msra.mxu0 %v4144
        %4159 = vmatprep.subr.mxu0 0.0
        %4160 = vmatpush1.msra.mxu0 %v4143
        %4161 = vmatprep.subr.mxu0 0.0
        %4162 = vmatpush1.msra.mxu0 %v4142
        %4163 = vmatprep.subr.mxu0 0.0
        %4164 = vmatpush1.msra.mxu0 %v4141
        %4165 = vmatprep.subr.mxu0 0.0
        %4166 = vmatpush1.msra.mxu0 %v4140
        %4167 = vmatprep.subr.mxu0 0.0
        %4168 = vmatpush1.msra.mxu0 %v4139
        %4169 = vmatprep.subr.mxu0 0.0
        %4170 = vmatpush1.msra.mxu0 %v4138
        %4171 = vmatprep.subr.mxu0 0.0
        %4172 = vmatpush1.msra.mxu0 %v4137
        %4173 = vmatprep.subr.mxu0 0.0
        %4174 = vmatpush1.msra.mxu0 %v4136
        %4175 = vmatprep.subr.mxu0 0.0
        %4176 = vmatpush1.msra.mxu0 %v4135
        %4177 = vmatprep.subr.mxu0 0.0
        %4178 = vmatpush1.msra.mxu0 %v4134
        %4179 = vmatprep.subr.mxu0 0.0
        %4180 = vmatpush1.msra.mxu0 %v4133
        %4181 = vmatprep.subr.mxu0 0.0
        %4182 = vmatpush2.msra.mxu0 0.0
        %4183 = vmatprep.subr.mxu0 0.0
        %4184 = vmatpush2.msra.mxu0 0.0
        %4185 = vmatprep.subr.mxu0 0.0
        %4186 = vmatpush2.msra.mxu0 0.0
        %4187 = vmatprep.subr.mxu0 0.0
        %4188 = vmatpush2.msra.mxu0 0.0
        %4189 = vmatprep.subr.mxu0 0.0
        %4190 = vmatpush2.msra.mxu0 0.0
        %4191 = vmatprep.subr.mxu0 0.0
        %4192 = vmatpush2.msra.mxu0 0.0
        %4193 = vmatprep.subr.mxu0 0.0
        %4194 = vmatpush2.msra.mxu0 0.0
        %4195 = vmatprep.subr.mxu0 0.0
        %4196 = vmatpush2.msra.mxu0 0.0
        %4197 = vmatprep.subr.mxu0 0.0
        %4198 = vmatpush2.msra.mxu0 0.0
        %4199 = vmatprep.subr.mxu0 0.0
        %4200 = vmatpush2.msra.mxu0 0.0
        %4201 = vmatprep.subr.mxu0 0.0
        %4202 = vmatpush2.msra.mxu0 0.0
        %4203 = vmatprep.subr.mxu0 0.0
        %4204 = vmatpush2.msra.mxu0 0.0
        %4205 = vmatprep.subr.mxu0 0.0
        %4206 = vmatpush2.msra.mxu0 0.0
        %4207 = vmatprep.subr.mxu0 0.0
        %4208 = vmatpush2.msra.mxu0 0.0
        %4209 = vmatprep.subr.mxu0 0.0
        %4210 = vmatpush2.msra.mxu0 0.0
        %4211 = vmatprep.subr.mxu0 0.0
        %4212 = vmatpush2.msra.mxu0 0.0
        %4213 = vmatprep.mubr.f32.mxu0 0.0
        %4214 = vmatmul.mubr.f32.gmra.mxu0 %v3931
        %v4215 = vpop.f32.mrf.mxu0
        %v4216 = vadd.f32 0.0, %v4215
        %v4217 = vpop.f32.mrf.mxu0
        %4218 = vdwg.mxu0
        %4219 = vmatprep.subr.mxu0 0.0
        %4220 = vmatpush1.msra.mxu0 %v4132
        %4221 = vmatprep.subr.mxu0 0.0
        %4222 = vmatpush1.msra.mxu0 %v4131
        %4223 = vmatprep.subr.mxu0 0.0
        %4224 = vmatpush1.msra.mxu0 %v4130
        %4225 = vmatprep.subr.mxu0 0.0
        %4226 = vmatpush1.msra.mxu0 %v4129
        %4227 = vmatprep.subr.mxu0 0.0
        %4228 = vmatpush1.msra.mxu0 %v4128
        %4229 = vmatprep.subr.mxu0 0.0
        %4230 = vmatpush1.msra.mxu0 %v4127
        %4231 = vmatprep.subr.mxu0 0.0
        %4232 = vmatpush1.msra.mxu0 %v4126
        %4233 = vmatprep.subr.mxu0 0.0
        %4234 = vmatpush1.msra.mxu0 %v4125
        %4235 = vmatprep.subr.mxu0 0.0
        %4236 = vmatpush1.msra.mxu0 %v4124
        %4237 = vmatprep.subr.mxu0 0.0
        %4238 = vmatpush1.msra.mxu0 %v4123
        %4239 = vmatprep.subr.mxu0 0.0
        %4240 = vmatpush1.msra.mxu0 %v4122
        %4241 = vmatprep.subr.mxu0 0.0
        %4242 = vmatpush1.msra.mxu0 %v4121
        %4243 = vmatprep.subr.mxu0 0.0
        %4244 = vmatpush1.msra.mxu0 %v4120
        %4245 = vmatprep.subr.mxu0 0.0
        %4246 = vmatpush1.msra.mxu0 %v4119
        %4247 = vmatprep.subr.mxu0 0.0
        %4248 = vmatpush1.msra.mxu0 %v4118
        %4249 = vmatprep.subr.mxu0 0.0
        %4250 = vmatpush1.msra.mxu0 %v4117
        %4251 = vmatprep.subr.mxu0 0.0
        %4252 = vmatpush2.msra.mxu0 0.0
        %4253 = vmatprep.subr.mxu0 0.0
        %4254 = vmatpush2.msra.mxu0 0.0
        %4255 = vmatprep.subr.mxu0 0.0
        %4256 = vmatpush2.msra.mxu0 0.0
        %4257 = vmatprep.subr.mxu0 0.0
        %4258 = vmatpush2.msra.mxu0 0.0
        %4259 = vmatprep.subr.mxu0 0.0
        %4260 = vmatpush2.msra.mxu0 0.0
        %4261 = vmatprep.subr.mxu0 0.0
        %4262 = vmatpush2.msra.mxu0 0.0
        %4263 = vmatprep.subr.mxu0 0.0
        %4264 = vmatpush2.msra.mxu0 0.0
        %4265 = vmatprep.subr.mxu0 0.0
        %4266 = vmatpush2.msra.mxu0 0.0
        %4267 = vmatprep.subr.mxu0 0.0
        %4268 = vmatpush2.msra.mxu0 0.0
        %4269 = vmatprep.subr.mxu0 0.0
        %4270 = vmatpush2.msra.mxu0 0.0
        %4271 = vmatprep.subr.mxu0 0.0
        %4272 = vmatpush2.msra.mxu0 0.0
        %4273 = vmatprep.subr.mxu0 0.0
        %4274 = vmatpush2.msra.mxu0 0.0
        %4275 = vmatprep.subr.mxu0 0.0
        %4276 = vmatpush2.msra.mxu0 0.0
        %4277 = vmatprep.subr.mxu0 0.0
        %4278 = vmatpush2.msra.mxu0 0.0
        %4279 = vmatprep.subr.mxu0 0.0
        %4280 = vmatpush2.msra.mxu0 0.0
        %4281 = vmatprep.subr.mxu0 0.0
        %4282 = vmatpush2.msra.mxu0 0.0
        %4283 = vmatprep.mubr.f32.mxu0 0.0
        %4284 = vmatmul.mubr.f32.gmra.mxu0 %v3847
        %v4285 = vpop.f32.mrf.mxu0
        %v4286 = vadd.f32 %v4216, %v4285
        %v4287 = vpop.f32.mrf.mxu0
        %4288 = vdwg.mxu0
        %v4289 = vlaneseq
        %v4290 = vshrl.u32 %v4289, 7
        %v4291 = vsub.s32 4, %v4290
        %v4292 = vrot.slane %v2593, %v4291
        %v4293 = vadd.f32 %v4286, %v4292
        %v4294 = vxor.u32 %v4293, 2147483648
        %v4295 = vmul.f32 %v4294, 1.442695
        %v4296 = vpow.pop %v4295
        %v4297 = vadd.f32 %v4296, 1.0
        %v4298 = vrcp.pop %v4297
        %v4299 = vmul.f32 1.0, %v4298
        %v4300 = vld [vmem:[#allocation2 + $0xf08] sm:$0xff]
        %v4301 = vld [vmem:[#allocation2 + $0xf10] sm:$0xff]
        %v4302 = vld [vmem:[#allocation2 + $0xf18] sm:$0xff]
        %v4303 = vld [vmem:[#allocation2 + $0xf20] sm:$0xff]
        %v4304 = vld [vmem:[#allocation2 + $0xf28] sm:$0xff]
        %v4305 = vld [vmem:[#allocation2 + $0xf30] sm:$0xff]
        %v4306 = vld [vmem:[#allocation2 + $0xf38] sm:$0xff]
        %v4307 = vld [vmem:[#allocation2 + $0xf40] sm:$0xff]
        %v4308 = vld [vmem:[#allocation2 + $0xf48] sm:$0xff]
        %v4309 = vld [vmem:[#allocation2 + $0xf50] sm:$0xff]
        %v4310 = vld [vmem:[#allocation2 + $0xf58] sm:$0xff]
        %v4311 = vld [vmem:[#allocation2 + $0xf60] sm:$0xff]
        %v4312 = vld [vmem:[#allocation2 + $0xf68] sm:$0xff]
        %v4313 = vld [vmem:[#allocation2 + $0xf70] sm:$0xff]
        %v4314 = vld [vmem:[#allocation2 + $0xf78] sm:$0xff]
        %v4315 = vld [vmem:[#allocation2 + $0xf80] sm:$0xff]
        %v4316 = vlaneseq
        %v4317 = vshrl.u32 %v4316, 7
        %v4318 = vsub.s32 5, %v4317
        %v4319 = vrot.slane %v2593, %v4318
        %4320 = vmatprep.subr.mxu0 0.0
        %4321 = vmatpush1.msra.mxu0 %v4315
        %4322 = vmatprep.subr.mxu0 0.0
        %4323 = vmatpush1.msra.mxu0 %v4314
        %4324 = vmatprep.subr.mxu0 0.0
        %4325 = vmatpush1.msra.mxu0 %v4313
        %4326 = vmatprep.subr.mxu0 0.0
        %4327 = vmatpush1.msra.mxu0 %v4312
        %4328 = vmatprep.subr.mxu0 0.0
        %4329 = vmatpush1.msra.mxu0 %v4311
        %4330 = vmatprep.subr.mxu0 0.0
        %4331 = vmatpush1.msra.mxu0 %v4310
        %4332 = vmatprep.subr.mxu0 0.0
        %4333 = vmatpush1.msra.mxu0 %v4309
        %4334 = vmatprep.subr.mxu0 0.0
        %4335 = vmatpush1.msra.mxu0 %v4308
        %4336 = vmatprep.subr.mxu0 0.0
        %4337 = vmatpush1.msra.mxu0 %v4307
        %4338 = vmatprep.subr.mxu0 0.0
        %4339 = vmatpush1.msra.mxu0 %v4306
        %4340 = vmatprep.subr.mxu0 0.0
        %4341 = vmatpush1.msra.mxu0 %v4305
        %4342 = vmatprep.subr.mxu0 0.0
        %4343 = vmatpush1.msra.mxu0 %v4304
        %4344 = vmatprep.subr.mxu0 0.0
        %4345 = vmatpush1.msra.mxu0 %v4303
        %4346 = vmatprep.subr.mxu0 0.0
        %4347 = vmatpush1.msra.mxu0 %v4302
        %4348 = vmatprep.subr.mxu0 0.0
        %4349 = vmatpush1.msra.mxu0 %v4301
        %4350 = vmatprep.subr.mxu0 0.0
        %4351 = vmatpush1.msra.mxu0 %v4300
        %4352 = vmatprep.subr.mxu0 0.0
        %4353 = vmatpush2.msra.mxu0 0.0
        %4354 = vmatprep.subr.mxu0 0.0
        %4355 = vmatpush2.msra.mxu0 0.0
        %4356 = vmatprep.subr.mxu0 0.0
        %4357 = vmatpush2.msra.mxu0 0.0
        %4358 = vmatprep.subr.mxu0 0.0
        %4359 = vmatpush2.msra.mxu0 0.0
        %4360 = vmatprep.subr.mxu0 0.0
        %4361 = vmatpush2.msra.mxu0 0.0
        %4362 = vmatprep.subr.mxu0 0.0
        %4363 = vmatpush2.msra.mxu0 0.0
        %4364 = vmatprep.subr.mxu0 0.0
        %4365 = vmatpush2.msra.mxu0 0.0
        %4366 = vmatprep.subr.mxu0 0.0
        %4367 = vmatpush2.msra.mxu0 0.0
        %4368 = vmatprep.subr.mxu0 0.0
        %4369 = vmatpush2.msra.mxu0 0.0
        %4370 = vmatprep.subr.mxu0 0.0
        %4371 = vmatpush2.msra.mxu0 0.0
        %4372 = vmatprep.subr.mxu0 0.0
        %4373 = vmatpush2.msra.mxu0 0.0
        %4374 = vmatprep.subr.mxu0 0.0
        %4375 = vmatpush2.msra.mxu0 0.0
        %4376 = vmatprep.subr.mxu0 0.0
        %4377 = vmatpush2.msra.mxu0 0.0
        %4378 = vmatprep.subr.mxu0 0.0
        %4379 = vmatpush2.msra.mxu0 0.0
        %4380 = vmatprep.subr.mxu0 0.0
        %4381 = vmatpush2.msra.mxu0 0.0
        %4382 = vmatprep.subr.mxu0 0.0
        %4383 = vmatpush2.msra.mxu0 0.0
        %4384 = vmatprep.mubr.f32.mxu0 0.0
        %4385 = vmatmul.mubr.f32.gmra.mxu0 %v3847
        %v4386 = vpop.f32.mrf.mxu0
        %v4387 = vadd.f32 %v4319, %v4386
        %v4388 = vpop.f32.mrf.mxu0
        %4389 = vdwg.mxu0
        %v4390 = vld [vmem:[#allocation2 + $0xf88] sm:$0xff]
        %v4391 = vld [vmem:[#allocation2 + $0xf90] sm:$0xff]
        %v4392 = vld [vmem:[#allocation2 + $0xf98] sm:$0xff]
        %v4393 = vld [vmem:[#allocation2 + $0xfa0] sm:$0xff]
        %v4394 = vld [vmem:[#allocation2 + $0xfa8] sm:$0xff]
        %v4395 = vld [vmem:[#allocation2 + $0xfb0] sm:$0xff]
        %v4396 = vld [vmem:[#allocation2 + $0xfb8] sm:$0xff]
        %v4397 = vld [vmem:[#allocation2 + $0xfc0] sm:$0xff]
        %v4398 = vld [vmem:[#allocation2 + $0xfc8] sm:$0xff]
        %v4399 = vld [vmem:[#allocation2 + $0xfd0] sm:$0xff]
        %v4400 = vld [vmem:[#allocation2 + $0xfd8] sm:$0xff]
        %v4401 = vld [vmem:[#allocation2 + $0xfe0] sm:$0xff]
        %v4402 = vld [vmem:[#allocation2 + $0xfe8] sm:$0xff]
        %v4403 = vld [vmem:[#allocation2 + $0xff0] sm:$0xff]
        %v4404 = vld [vmem:[#allocation2 + $0xff8] sm:$0xff]
        %v4405 = vld [vmem:[#allocation2 + $0x1000] sm:$0xff]
        %v4406 = vlaneseq
        %v4407 = vshrl.u32 %v4406, 7
        %v4408 = vsub.s32 6, %v4407
        %v4409 = vrot.slane %v2593, %v4408
        %4410 = vmatprep.subr.mxu0 0.0
        %4411 = vmatpush1.msra.mxu0 %v4405
        %4412 = vmatprep.subr.mxu0 0.0
        %4413 = vmatpush1.msra.mxu0 %v4404
        %4414 = vmatprep.subr.mxu0 0.0
        %4415 = vmatpush1.msra.mxu0 %v4403
        %4416 = vmatprep.subr.mxu0 0.0
        %4417 = vmatpush1.msra.mxu0 %v4402
        %4418 = vmatprep.subr.mxu0 0.0
        %4419 = vmatpush1.msra.mxu0 %v4401
        %4420 = vmatprep.subr.mxu0 0.0
        %4421 = vmatpush1.msra.mxu0 %v4400
        %4422 = vmatprep.subr.mxu0 0.0
        %4423 = vmatpush1.msra.mxu0 %v4399
        %4424 = vmatprep.subr.mxu0 0.0
        %4425 = vmatpush1.msra.mxu0 %v4398
        %4426 = vmatprep.subr.mxu0 0.0
        %4427 = vmatpush1.msra.mxu0 %v4397
        %4428 = vmatprep.subr.mxu0 0.0
        %4429 = vmatpush1.msra.mxu0 %v4396
        %4430 = vmatprep.subr.mxu0 0.0
        %4431 = vmatpush1.msra.mxu0 %v4395
        %4432 = vmatprep.subr.mxu0 0.0
        %4433 = vmatpush1.msra.mxu0 %v4394
        %4434 = vmatprep.subr.mxu0 0.0
        %4435 = vmatpush1.msra.mxu0 %v4393
        %4436 = vmatprep.subr.mxu0 0.0
        %4437 = vmatpush1.msra.mxu0 %v4392
        %4438 = vmatprep.subr.mxu0 0.0
        %4439 = vmatpush1.msra.mxu0 %v4391
        %4440 = vmatprep.subr.mxu0 0.0
        %4441 = vmatpush1.msra.mxu0 %v4390
        %4442 = vmatprep.subr.mxu0 0.0
        %4443 = vmatpush2.msra.mxu0 0.0
        %4444 = vmatprep.subr.mxu0 0.0
        %4445 = vmatpush2.msra.mxu0 0.0
        %4446 = vmatprep.subr.mxu0 0.0
        %4447 = vmatpush2.msra.mxu0 0.0
        %4448 = vmatprep.subr.mxu0 0.0
        %4449 = vmatpush2.msra.mxu0 0.0
        %4450 = vmatprep.subr.mxu0 0.0
        %4451 = vmatpush2.msra.mxu0 0.0
        %4452 = vmatprep.subr.mxu0 0.0
        %4453 = vmatpush2.msra.mxu0 0.0
        %4454 = vmatprep.subr.mxu0 0.0
        %4455 = vmatpush2.msra.mxu0 0.0
        %4456 = vmatprep.subr.mxu0 0.0
        %4457 = vmatpush2.msra.mxu0 0.0
        %4458 = vmatprep.subr.mxu0 0.0
        %4459 = vmatpush2.msra.mxu0 0.0
        %4460 = vmatprep.subr.mxu0 0.0
        %4461 = vmatpush2.msra.mxu0 0.0
        %4462 = vmatprep.subr.mxu0 0.0
        %4463 = vmatpush2.msra.mxu0 0.0
        %4464 = vmatprep.subr.mxu0 0.0
        %4465 = vmatpush2.msra.mxu0 0.0
        %4466 = vmatprep.subr.mxu0 0.0
        %4467 = vmatpush2.msra.mxu0 0.0
        %4468 = vmatprep.subr.mxu0 0.0
        %4469 = vmatpush2.msra.mxu0 0.0
        %4470 = vmatprep.subr.mxu0 0.0
        %4471 = vmatpush2.msra.mxu0 0.0
        %4472 = vmatprep.subr.mxu0 0.0
        %4473 = vmatpush2.msra.mxu0 0.0
        %4474 = vmatprep.mubr.f32.mxu0 0.0
        %4475 = vmatmul.mubr.f32.gmra.mxu0 %v3931
        %v4476 = vpop.f32.mrf.mxu0
        %v4477 = vadd.f32 %v4409, %v4476
        %v4478 = vpop.f32.mrf.mxu0
        %4479 = vdwg.mxu0
        %v4480 = vmul.f32 %v4116, %v4477
        %v4481 = vadd.f32 %v4387, %v4480
        %v4482 = vtanh.pop %v4481
        %v4483 = vsub.f32 1.0, %v4299
        %v4484 = vmul.f32 %v4483, %v4482
        %v4485 = vmul.f32 %v4299, %v3931
        %v4486 = vadd.f32 %v4484, %v4485
        %v4487 = vld [vmem:[#allocation2 + $0x1310] sm:$0xff]
        %v4488 = vld [vmem:[#allocation2 + $0x1110] sm:$0xff]
        %v4489 = vld [vmem:[#allocation2 + $0x1118] sm:$0xff]
        %v4490 = vld [vmem:[#allocation2 + $0x1120] sm:$0xff]
        %v4491 = vld [vmem:[#allocation2 + $0x1128] sm:$0xff]
        %v4492 = vld [vmem:[#allocation2 + $0x1130] sm:$0xff]
        %v4493 = vld [vmem:[#allocation2 + $0x1138] sm:$0xff]
        %v4494 = vld [vmem:[#allocation2 + $0x1140] sm:$0xff]
        %v4495 = vld [vmem:[#allocation2 + $0x1148] sm:$0xff]
        %v4496 = vld [vmem:[#allocation2 + $0x1150] sm:$0xff]
        %v4497 = vld [vmem:[#allocation2 + $0x1158] sm:$0xff]
        %v4498 = vld [vmem:[#allocation2 + $0x1160] sm:$0xff]
        %v4499 = vld [vmem:[#allocation2 + $0x1168] sm:$0xff]
        %v4500 = vld [vmem:[#allocation2 + $0x1170] sm:$0xff]
        %v4501 = vld [vmem:[#allocation2 + $0x1178] sm:$0xff]
        %v4502 = vld [vmem:[#allocation2 + $0x1180] sm:$0xff]
        %v4503 = vld [vmem:[#allocation2 + $0x1188] sm:$0xff]
        %v4504 = vlaneseq
        %v4505 = vshrl.u32 %v4504, 7
        %v4506 = vsub.s32 0, %v4505
        %v4507 = vrot.slane %v4487, %v4506
        %4508 = vmatprep.subr.mxu0 0.0
        %4509 = vmatpush1.msra.mxu0 %v4503
        %4510 = vmatprep.subr.mxu0 0.0
        %4511 = vmatpush1.msra.mxu0 %v4502
        %4512 = vmatprep.subr.mxu0 0.0
        %4513 = vmatpush1.msra.mxu0 %v4501
        %4514 = vmatprep.subr.mxu0 0.0
        %4515 = vmatpush1.msra.mxu0 %v4500
        %4516 = vmatprep.subr.mxu0 0.0
        %4517 = vmatpush1.msra.mxu0 %v4499
        %4518 = vmatprep.subr.mxu0 0.0
        %4519 = vmatpush1.msra.mxu0 %v4498
        %4520 = vmatprep.subr.mxu0 0.0
        %4521 = vmatpush1.msra.mxu0 %v4497
        %4522 = vmatprep.subr.mxu0 0.0
        %4523 = vmatpush1.msra.mxu0 %v4496
        %4524 = vmatprep.subr.mxu0 0.0
        %4525 = vmatpush1.msra.mxu0 %v4495
        %4526 = vmatprep.subr.mxu0 0.0
        %4527 = vmatpush1.msra.mxu0 %v4494
        %4528 = vmatprep.subr.mxu0 0.0
        %4529 = vmatpush1.msra.mxu0 %v4493
        %4530 = vmatprep.subr.mxu0 0.0
        %4531 = vmatpush1.msra.mxu0 %v4492
        %4532 = vmatprep.subr.mxu0 0.0
        %4533 = vmatpush1.msra.mxu0 %v4491
        %4534 = vmatprep.subr.mxu0 0.0
        %4535 = vmatpush1.msra.mxu0 %v4490
        %4536 = vmatprep.subr.mxu0 0.0
        %4537 = vmatpush1.msra.mxu0 %v4489
        %4538 = vmatprep.subr.mxu0 0.0
        %4539 = vmatpush1.msra.mxu0 %v4488
        %4540 = vmatprep.subr.mxu0 0.0
        %4541 = vmatpush2.msra.mxu0 0.0
        %4542 = vmatprep.subr.mxu0 0.0
        %4543 = vmatpush2.msra.mxu0 0.0
        %4544 = vmatprep.subr.mxu0 0.0
        %4545 = vmatpush2.msra.mxu0 0.0
        %4546 = vmatprep.subr.mxu0 0.0
        %4547 = vmatpush2.msra.mxu0 0.0
        %4548 = vmatprep.subr.mxu0 0.0
        %4549 = vmatpush2.msra.mxu0 0.0
        %4550 = vmatprep.subr.mxu0 0.0
        %4551 = vmatpush2.msra.mxu0 0.0
        %4552 = vmatprep.subr.mxu0 0.0
        %4553 = vmatpush2.msra.mxu0 0.0
        %4554 = vmatprep.subr.mxu0 0.0
        %4555 = vmatpush2.msra.mxu0 0.0
        %4556 = vmatprep.subr.mxu0 0.0
        %4557 = vmatpush2.msra.mxu0 0.0
        %4558 = vmatprep.subr.mxu0 0.0
        %4559 = vmatpush2.msra.mxu0 0.0
        %4560 = vmatprep.subr.mxu0 0.0
        %4561 = vmatpush2.msra.mxu0 0.0
        %4562 = vmatprep.subr.mxu0 0.0
        %4563 = vmatpush2.msra.mxu0 0.0
        %4564 = vmatprep.subr.mxu0 0.0
        %4565 = vmatpush2.msra.mxu0 0.0
        %4566 = vmatprep.subr.mxu0 0.0
        %4567 = vmatpush2.msra.mxu0 0.0
        %4568 = vmatprep.subr.mxu0 0.0
        %4569 = vmatpush2.msra.mxu0 0.0
        %4570 = vmatprep.subr.mxu0 0.0
        %4571 = vmatpush2.msra.mxu0 0.0
        %4572 = vmatprep.mubr.f32.mxu0 0.0
        %4573 = vmatmul.mubr.f32.gmra.mxu0 %v4486
        %v4574 = vpop.f32.mrf.mxu0
        %v4575 = vadd.f32 %v4507, %v4574
        %v4576 = vpop.f32.mrf.mxu0
        %4577 = vdwg.mxu0
        %v4578 = vxor.u32 %v4575, 2147483648
        %v4579 = vmul.f32 %v4578, 1.442695
        %v4580 = vpow.pop %v4579
        %v4581 = vadd.f32 %v4580, 1.0
        %v4582 = vrcp.pop %v4581
        %v4583 = vmul.f32 1.0, %v4582
        %v4584 = vmul.f32 %v4583, %v4486
        %v4585 = vrot.slane %v4584, 4
        %v4586 = vadd.f32 %v4584, %v4585
        %v4587 = vrot.slane %v4586, 2
        %v4588 = vadd.f32 %v4586, %v4587
        %v4589 = vrot.slane %v4588, 1
        %v4590 = vadd.f32 %v4588, %v4589
        %v4591 = vrot.slane %v4486, 4
        %v4592 = vmax.f32 %v4486, %v4591
        %v4593 = vrot.slane %v4592, 2
        %v4594 = vmax.f32 %v4592, %v4593
        %v4595 = vrot.slane %v4594, 1
        %v4596 = vmax.f32 %v4594, %v4595
        %v4597 = vld [vmem:[#allocation2 + $0x1190] sm:$0xff]
        %v4598 = vld [vmem:[#allocation2 + $0x1198] sm:$0xff]
        %v4599 = vld [vmem:[#allocation2 + $0x11a0] sm:$0xff]
        %v4600 = vld [vmem:[#allocation2 + $0x11a8] sm:$0xff]
        %v4601 = vld [vmem:[#allocation2 + $0x11b0] sm:$0xff]
        %v4602 = vld [vmem:[#allocation2 + $0x11b8] sm:$0xff]
        %v4603 = vld [vmem:[#allocation2 + $0x11c0] sm:$0xff]
        %v4604 = vld [vmem:[#allocation2 + $0x11c8] sm:$0xff]
        %v4605 = vld [vmem:[#allocation2 + $0x11d0] sm:$0xff]
        %v4606 = vld [vmem:[#allocation2 + $0x11d8] sm:$0xff]
        %v4607 = vld [vmem:[#allocation2 + $0x11e0] sm:$0xff]
        %v4608 = vld [vmem:[#allocation2 + $0x11e8] sm:$0xff]
        %v4609 = vld [vmem:[#allocation2 + $0x11f0] sm:$0xff]
        %v4610 = vld [vmem:[#allocation2 + $0x11f8] sm:$0xff]
        %v4611 = vld [vmem:[#allocation2 + $0x1200] sm:$0xff]
        %v4612 = vld [vmem:[#allocation2 + $0x1208] sm:$0xff]
        %v4613 = vld [vmem:[#allocation2 + $0x1210] sm:$0xff]
        %v4614 = vld [vmem:[#allocation2 + $0x1218] sm:$0xff]
        %v4615 = vld [vmem:[#allocation2 + $0x1220] sm:$0xff]
        %v4616 = vld [vmem:[#allocation2 + $0x1228] sm:$0xff]
        %v4617 = vld [vmem:[#allocation2 + $0x1230] sm:$0xff]
        %v4618 = vld [vmem:[#allocation2 + $0x1238] sm:$0xff]
        %v4619 = vld [vmem:[#allocation2 + $0x1240] sm:$0xff]
        %v4620 = vld [vmem:[#allocation2 + $0x1248] sm:$0xff]
        %v4621 = vld [vmem:[#allocation2 + $0x1250] sm:$0xff]
        %v4622 = vld [vmem:[#allocation2 + $0x1258] sm:$0xff]
        %v4623 = vld [vmem:[#allocation2 + $0x1260] sm:$0xff]
        %v4624 = vld [vmem:[#allocation2 + $0x1268] sm:$0xff]
        %v4625 = vld [vmem:[#allocation2 + $0x1270] sm:$0xff]
        %v4626 = vld [vmem:[#allocation2 + $0x1278] sm:$0xff]
        %v4627 = vld [vmem:[#allocation2 + $0x1280] sm:$0xff]
        %v4628 = vld [vmem:[#allocation2 + $0x1288] sm:$0xff]
        %4629 = vmatprep.subr.mxu0 0.0
        %4630 = vmatpush1.msra.mxu0 %v4628
        %4631 = vmatprep.subr.mxu0 0.0
        %4632 = vmatpush1.msra.mxu0 %v4627
        %4633 = vmatprep.subr.mxu0 0.0
        %4634 = vmatpush1.msra.mxu0 %v4626
        %4635 = vmatprep.subr.mxu0 0.0
        %4636 = vmatpush1.msra.mxu0 %v4625
        %4637 = vmatprep.subr.mxu0 0.0
        %4638 = vmatpush1.msra.mxu0 %v4624
        %4639 = vmatprep.subr.mxu0 0.0
        %4640 = vmatpush1.msra.mxu0 %v4623
        %4641 = vmatprep.subr.mxu0 0.0
        %4642 = vmatpush1.msra.mxu0 %v4622
        %4643 = vmatprep.subr.mxu0 0.0
        %4644 = vmatpush1.msra.mxu0 %v4621
        %4645 = vmatprep.subr.mxu0 0.0
        %4646 = vmatpush1.msra.mxu0 %v4620
        %4647 = vmatprep.subr.mxu0 0.0
        %4648 = vmatpush1.msra.mxu0 %v4619
        %4649 = vmatprep.subr.mxu0 0.0
        %4650 = vmatpush1.msra.mxu0 %v4618
        %4651 = vmatprep.subr.mxu0 0.0
        %4652 = vmatpush1.msra.mxu0 %v4617
        %4653 = vmatprep.subr.mxu0 0.0
        %4654 = vmatpush1.msra.mxu0 %v4616
        %4655 = vmatprep.subr.mxu0 0.0
        %4656 = vmatpush1.msra.mxu0 %v4615
        %4657 = vmatprep.subr.mxu0 0.0
        %4658 = vmatpush1.msra.mxu0 %v4614
        %4659 = vmatprep.subr.mxu0 0.0
        %4660 = vmatpush1.msra.mxu0 %v4613
        %4661 = vmatprep.subr.mxu0 0.0
        %4662 = vmatpush2.msra.mxu0 0.0
        %4663 = vmatprep.subr.mxu0 0.0
        %4664 = vmatpush2.msra.mxu0 0.0
        %4665 = vmatprep.subr.mxu0 0.0
        %4666 = vmatpush2.msra.mxu0 0.0
        %4667 = vmatprep.subr.mxu0 0.0
        %4668 = vmatpush2.msra.mxu0 0.0
        %4669 = vmatprep.subr.mxu0 0.0
        %4670 = vmatpush2.msra.mxu0 0.0
        %4671 = vmatprep.subr.mxu0 0.0
        %4672 = vmatpush2.msra.mxu0 0.0
        %4673 = vmatprep.subr.mxu0 0.0
        %4674 = vmatpush2.msra.mxu0 0.0
        %4675 = vmatprep.subr.mxu0 0.0
        %4676 = vmatpush2.msra.mxu0 0.0
        %4677 = vmatprep.subr.mxu0 0.0
        %4678 = vmatpush2.msra.mxu0 0.0
        %4679 = vmatprep.subr.mxu0 0.0
        %4680 = vmatpush2.msra.mxu0 0.0
        %4681 = vmatprep.subr.mxu0 0.0
        %4682 = vmatpush2.msra.mxu0 0.0
        %4683 = vmatprep.subr.mxu0 0.0
        %4684 = vmatpush2.msra.mxu0 0.0
        %4685 = vmatprep.subr.mxu0 0.0
        %4686 = vmatpush2.msra.mxu0 0.0
        %4687 = vmatprep.subr.mxu0 0.0
        %4688 = vmatpush2.msra.mxu0 0.0
        %4689 = vmatprep.subr.mxu0 0.0
        %4690 = vmatpush2.msra.mxu0 0.0
        %4691 = vmatprep.subr.mxu0 0.0
        %4692 = vmatpush2.msra.mxu0 0.0
        %4693 = vmatprep.mubr.f32.mxu0 0.0
        %4694 = vmatmul.mubr.f32.gmra.mxu0 %v4596
        %v4695 = vpop.f32.mrf.mxu0
        %v4696 = vadd.f32 0.0, %v4695
        %v4697 = vpop.f32.mrf.mxu0
        %4698 = vdwg.mxu0
        %4699 = vmatprep.subr.mxu0 0.0
        %4700 = vmatpush1.msra.mxu0 %v4612
        %4701 = vmatprep.subr.mxu0 0.0
        %4702 = vmatpush1.msra.mxu0 %v4611
        %4703 = vmatprep.subr.mxu0 0.0
        %4704 = vmatpush1.msra.mxu0 %v4610
        %4705 = vmatprep.subr.mxu0 0.0
        %4706 = vmatpush1.msra.mxu0 %v4609
        %4707 = vmatprep.subr.mxu0 0.0
        %4708 = vmatpush1.msra.mxu0 %v4608
        %4709 = vmatprep.subr.mxu0 0.0
        %4710 = vmatpush1.msra.mxu0 %v4607
        %4711 = vmatprep.subr.mxu0 0.0
        %4712 = vmatpush1.msra.mxu0 %v4606
        %4713 = vmatprep.subr.mxu0 0.0
        %4714 = vmatpush1.msra.mxu0 %v4605
        %4715 = vmatprep.subr.mxu0 0.0
        %4716 = vmatpush1.msra.mxu0 %v4604
        %4717 = vmatprep.subr.mxu0 0.0
        %4718 = vmatpush1.msra.mxu0 %v4603
        %4719 = vmatprep.subr.mxu0 0.0
        %4720 = vmatpush1.msra.mxu0 %v4602
        %4721 = vmatprep.subr.mxu0 0.0
        %4722 = vmatpush1.msra.mxu0 %v4601
        %4723 = vmatprep.subr.mxu0 0.0
        %4724 = vmatpush1.msra.mxu0 %v4600
        %4725 = vmatprep.subr.mxu0 0.0
        %4726 = vmatpush1.msra.mxu0 %v4599
        %4727 = vmatprep.subr.mxu0 0.0
        %4728 = vmatpush1.msra.mxu0 %v4598
        %4729 = vmatprep.subr.mxu0 0.0
        %4730 = vmatpush1.msra.mxu0 %v4597
        %4731 = vmatprep.subr.mxu0 0.0
        %4732 = vmatpush2.msra.mxu0 0.0
        %4733 = vmatprep.subr.mxu0 0.0
        %4734 = vmatpush2.msra.mxu0 0.0
        %4735 = vmatprep.subr.mxu0 0.0
        %4736 = vmatpush2.msra.mxu0 0.0
        %4737 = vmatprep.subr.mxu0 0.0
        %4738 = vmatpush2.msra.mxu0 0.0
        %4739 = vmatprep.subr.mxu0 0.0
        %4740 = vmatpush2.msra.mxu0 0.0
        %4741 = vmatprep.subr.mxu0 0.0
        %4742 = vmatpush2.msra.mxu0 0.0
        %4743 = vmatprep.subr.mxu0 0.0
        %4744 = vmatpush2.msra.mxu0 0.0
        %4745 = vmatprep.subr.mxu0 0.0
        %4746 = vmatpush2.msra.mxu0 0.0
        %4747 = vmatprep.subr.mxu0 0.0
        %4748 = vmatpush2.msra.mxu0 0.0
        %4749 = vmatprep.subr.mxu0 0.0
        %4750 = vmatpush2.msra.mxu0 0.0
        %4751 = vmatprep.subr.mxu0 0.0
        %4752 = vmatpush2.msra.mxu0 0.0
        %4753 = vmatprep.subr.mxu0 0.0
        %4754 = vmatpush2.msra.mxu0 0.0
        %4755 = vmatprep.subr.mxu0 0.0
        %4756 = vmatpush2.msra.mxu0 0.0
        %4757 = vmatprep.subr.mxu0 0.0
        %4758 = vmatpush2.msra.mxu0 0.0
        %4759 = vmatprep.subr.mxu0 0.0
        %4760 = vmatpush2.msra.mxu0 0.0
        %4761 = vmatprep.subr.mxu0 0.0
        %4762 = vmatpush2.msra.mxu0 0.0
        %4763 = vmatprep.mubr.f32.mxu0 0.0
        %4764 = vmatmul.mubr.f32.gmra.mxu0 %v4590
        %v4765 = vpop.f32.mrf.mxu0
        %v4766 = vadd.f32 %v4696, %v4765
        %v4767 = vpop.f32.mrf.mxu0
        %4768 = vdwg.mxu0
        %v4770 = vrot.slane %v4487, 1
        %v4772 = vadd.f32 %v4766, %v4770
        %v4773 = vld [vmem:[#allocation2 + $0x1290] sm:$0xff]
        %v4774 = vld [vmem:[#allocation2 + $0x1298] sm:$0xff]
        %v4775 = vld [vmem:[#allocation2 + $0x12a0] sm:$0xff]
        %v4776 = vld [vmem:[#allocation2 + $0x12a8] sm:$0xff]
        %v4777 = vld [vmem:[#allocation2 + $0x12b0] sm:$0xff]
        %v4778 = vld [vmem:[#allocation2 + $0x12b8] sm:$0xff]
        %v4779 = vld [vmem:[#allocation2 + $0x12c0] sm:$0xff]
        %v4780 = vld [vmem:[#allocation2 + $0x12c8] sm:$0xff]
        %v4781 = vld [vmem:[#allocation2 + $0x12d0] sm:$0xff]
        %v4782 = vld [vmem:[#allocation2 + $0x12d8] sm:$0xff]
        %v4783 = vld [vmem:[#allocation2 + $0x12e0] sm:$0xff]
        %v4784 = vld [vmem:[#allocation2 + $0x12e8] sm:$0xff]
        %v4785 = vld [vmem:[#allocation2 + $0x12f0] sm:$0xff]
        %v4786 = vld [vmem:[#allocation2 + $0x12f8] sm:$0xff]
        %v4787 = vld [vmem:[#allocation2 + $0x1300] sm:$0xff]
        %v4788 = vld [vmem:[#allocation2 + $0x1308] sm:$0xff]
        %v4789 = vrot.slane %v4487, 2
        %4791 = vmatprep.subr.mxu0 0.0
        %4792 = vmatpush1.msra.mxu0 %v4788
        %4793 = vmatprep.subr.mxu0 0.0
        %4794 = vmatpush1.msra.mxu0 %v4787
        %4795 = vmatprep.subr.mxu0 0.0
        %4796 = vmatpush1.msra.mxu0 %v4786
        %4797 = vmatprep.subr.mxu0 0.0
        %4798 = vmatpush1.msra.mxu0 %v4785
        %4799 = vmatprep.subr.mxu0 0.0
        %4800 = vmatpush1.msra.mxu0 %v4784
        %4801 = vmatprep.subr.mxu0 0.0
        %4802 = vmatpush1.msra.mxu0 %v4783
        %4803 = vmatprep.subr.mxu0 0.0
        %4804 = vmatpush1.msra.mxu0 %v4782
        %4805 = vmatprep.subr.mxu0 0.0
        %4806 = vmatpush1.msra.mxu0 %v4781
        %4807 = vmatprep.subr.mxu0 0.0
        %4808 = vmatpush1.msra.mxu0 %v4780
        %4809 = vmatprep.subr.mxu0 0.0
        %4810 = vmatpush1.msra.mxu0 %v4779
        %4811 = vmatprep.subr.mxu0 0.0
        %4812 = vmatpush1.msra.mxu0 %v4778
        %4813 = vmatprep.subr.mxu0 0.0
        %4814 = vmatpush1.msra.mxu0 %v4777
        %4815 = vmatprep.subr.mxu0 0.0
        %4816 = vmatpush1.msra.mxu0 %v4776
        %4817 = vmatprep.subr.mxu0 0.0
        %4818 = vmatpush1.msra.mxu0 %v4775
        %4819 = vmatprep.subr.mxu0 0.0
        %4820 = vmatpush1.msra.mxu0 %v4774
        %4821 = vmatprep.subr.mxu0 0.0
        %4822 = vmatpush1.msra.mxu0 %v4773
        %4823 = vmatprep.subr.mxu0 0.0
        %4824 = vmatpush2.msra.mxu0 0.0
        %4825 = vmatprep.subr.mxu0 0.0
        %4826 = vmatpush2.msra.mxu0 0.0
        %4827 = vmatprep.subr.mxu0 0.0
        %4828 = vmatpush2.msra.mxu0 0.0
        %4829 = vmatprep.subr.mxu0 0.0
        %4830 = vmatpush2.msra.mxu0 0.0
        %4831 = vmatprep.subr.mxu0 0.0
        %4832 = vmatpush2.msra.mxu0 0.0
        %4833 = vmatprep.subr.mxu0 0.0
        %4834 = vmatpush2.msra.mxu0 0.0
        %4835 = vmatprep.subr.mxu0 0.0
        %4836 = vmatpush2.msra.mxu0 0.0
        %4837 = vmatprep.subr.mxu0 0.0
        %4838 = vmatpush2.msra.mxu0 0.0
        %4839 = vmatprep.subr.mxu0 0.0
        %4840 = vmatpush2.msra.mxu0 0.0
        %4841 = vmatprep.subr.mxu0 0.0
        %4842 = vmatpush2.msra.mxu0 0.0
        %4843 = vmatprep.subr.mxu0 0.0
        %4844 = vmatpush2.msra.mxu0 0.0
        %4845 = vmatprep.subr.mxu0 0.0
        %4846 = vmatpush2.msra.mxu0 0.0
        %4847 = vmatprep.subr.mxu0 0.0
        %4848 = vmatpush2.msra.mxu0 0.0
        %4849 = vmatprep.subr.mxu0 0.0
        %4850 = vmatpush2.msra.mxu0 0.0
        %4851 = vmatprep.subr.mxu0 0.0
        %4852 = vmatpush2.msra.mxu0 0.0
        %4853 = vmatprep.subr.mxu0 0.0
        %4854 = vmatpush2.msra.mxu0 0.0
        %4855 = vmatprep.mubr.f32.mxu0 0.0
        %4856 = vmatmul.mubr.f32.gmra.mxu0 %v4772
        %v4857 = vpop.f32.mrf.mxu0
        %v4858 = vadd.f32 %v4789, %v4857
        %v4859 = vpop.f32.mrf.mxu0
        %4860 = vdwg.mxu0
        %4861 = vst [vmem:[%s410] sm:$0x1] %v4858
        %p4862 = scmp.lt.s32.totalorder %s24, 3
        %s4863 = scalar_select %p4862, %s24, 3
        %s4864 = scalar_lea.vmem %s6, %s4863
        // Predicated region
        $region65: #{forward.1} parent=43 // pred_check
          %p4865 = pneg %p193
        $region66: #{forward.1} parent=43 // pred_check_branch
          %4867 = sbr.rel (%p4865) target = $region68
        $region67: #{forward.1} parent=43 // pred_region
          _
        $region68: #{forward.1} parent=43 // pred_fallthru
          _
      $region44: #{forward.1} parent=5 // pred_fallthru
        _
      %p4868 = scmp.le.s32.totalorder 2, %s19
      // Predicated region
      $region69: #{forward.1} parent=5 // pred_check
        %p4869 = pneg %p4868
      $region70: #{forward.1} parent=5 // pred_check_branch
        %4871 = sbr.rel (%p4869) target = $region72
      $region71: #{forward.1} parent=5 // pred_region
        %s4872 = ssub.s32 %s19, 2
        // Predicated region
        $region73: #{forward.1} parent=71 // pred_check
          %p4873 = pneg %p199
        $region74: #{forward.1} parent=71 // pred_check_branch
          %4875 = sbr.rel (%p4873) target = $region76
        $region75: #{forward.1} parent=71 // pred_region
          %p4876 = scmp.lt.s32.totalorder %s25, 3
          %s4877 = scalar_select %p4876, %s25, 3
          %s4878 = scalar_lea.vmem %s6, %s4877
        $region76: #{forward.1} parent=71 // pred_fallthru
          _
      $region72: #{forward.1} parent=5 // pred_fallthru
        _
    $region6: #{forward.1} parent=1 // loop_footer
      %s23 = sadd.s32 1, %s19
    $region7: #{forward.1} parent=1 // loop_footer_branch
      %18 = sbr.rel target = $region3
    $region8: #{forward.1} parent=1 // loop_exit
      _
    %4879 = vsyncpa [#allocation3], 1
    %s4880 = scalar_lea.sflag [#allocation3], 1
    %4881 = vsyncpa %s4880, 1
    %4882 = vsyncpa [#allocation5], 1
    %s4883 = scalar_lea.sflag [#allocation5], 1
    %4884 = vsyncpa %s4883, 1
    %4885 = vsyncpa [#allocation8], 1
    %s4886 = scalar_lea.sflag [#allocation8], 1
    %4887 = vsyncpa %s4886, 1

</llo_original>
